<compile_context>
chip_gen: v6e
topology: v6e:2x2x1
jax: 0.10.0
libtpu: 0.0.40
codegen_flags: <defaults>
</compile_context>

<pallas_src>
import numpy as np
import jax
import jax.numpy as jnp
from jax.experimental import pallas as pl
from jax.experimental.pallas import tpu as pltpu


# ----------------------------------------------------------------------------
# Bilinear interpolation matrices (PyTorch Upsample, align_corners=True)
# ----------------------------------------------------------------------------
def _bilinear_matrix(n_in, n_out):
    """Dense (n_out, n_in) matrix reproducing torch bilinear align_corners=True."""
    R = np.zeros((n_out, n_in), dtype=np.float32)
    if n_in == 1:
        R[:, 0] = 1.0
        return jnp.asarray(R)
    scale = (n_in - 1) / (n_out - 1)
    for i in range(n_out):
        src = i * scale
        i0 = min(int(np.floor(src)), n_in - 1)
        i1 = min(i0 + 1, n_in - 1)
        f = src - i0
        R[i, i0] += 1.0 - f
        R[i, i1] += f
    return jnp.asarray(R)


# ----------------------------------------------------------------------------
# Kernel 1: fused bilinear x2 upsample + 1x1 conv + ReLU   (one image per step)
# ----------------------------------------------------------------------------
def _up_conv1x1_relu_kernel(w_ref, b_ref, x_ref, rh_ref, rwt_ref, o_ref):
    # x_ref  : (1, C, H, W)     VMEM
    # rh_ref : (Ho, H)          VMEM   row-interpolation matrix
    # rwt_ref: (W, Wo)          VMEM   column-interpolation matrix (transposed)
    # w_ref  : (C2*C,)          SMEM   1x1 conv weights, flat [co, ci]
    # b_ref  : (C2,)            SMEM   1x1 conv bias
    # o_ref  : (1, C2, Ho, Wo)  VMEM   relu(conv1x1(upsample(x))), interior only
    _, C, H, W = x_ref.shape
    _, C2, Ho, Wo = o_ref.shape
    rh = rh_ref[...]
    rwt = rwt_ref[...]
    # Bias splat hoisted: one (Ho, Wo) init per output channel.
    accs = [jnp.full((Ho, Wo), b_ref[co], dtype=jnp.float32) for co in range(C2)]
    for ci in range(C):
        xc = x_ref[0, ci]                       # (H, W)
        up = jnp.dot(jnp.dot(rh, xc), rwt)      # (Ho, Wo) separable bilinear upsample
        for co in range(C2):
            # 1x1 conv over channels: SMEM scalar x vector FMA on the VPU.
            accs[co] = accs[co] + w_ref[co * C + ci] * up
    for co in range(C2):
        o_ref[0, co] = jnp.maximum(accs[co], 0.0).astype(o_ref.dtype)


def up_conv1x1_relu(x1, w1, b1):
    """relu(Conv2d(C, C//2, 1)(bilinear_upsample_x2(x1))) — interior (no pad border)."""
    N, C, H, W = x1.shape
    C2 = w1.shape[0]
    Ho, Wo = 2 * H, 2 * W
    rh = _bilinear_matrix(H, Ho)                 # (Ho, H)
    rwt = _bilinear_matrix(W, Wo).T              # (W, Wo)
    w_flat = jnp.asarray(w1, jnp.float32).reshape(C2 * C)
    b_flat = jnp.asarray(b1, jnp.float32).reshape(C2)

    flops = N * C * (2 * Ho * W * H + 2 * Ho * Wo * W) + 2 * N * C * C2 * Ho * Wo
    bytes_accessed = 4 * (N * C * H * W + N * C2 * Ho * Wo
                          + Ho * H + W * Wo + C2 * C + C2)

    return pl.pallas_call(
        _up_conv1x1_relu_kernel,
        out_shape=jax.ShapeDtypeStruct((N, C2, Ho, Wo), x1.dtype),
        grid_spec=pltpu.PrefetchScalarGridSpec(
            num_scalar_prefetch=0,
            grid=(N,),
            in_specs=[
                pl.BlockSpec(memory_space=pltpu.MemorySpace.SMEM),      # w_flat
                pl.BlockSpec(memory_space=pltpu.MemorySpace.SMEM),      # b_flat
                pl.BlockSpec((1, C, H, W), lambda n: (n, 0, 0, 0)),     # x1 image
                pl.BlockSpec((Ho, H), lambda n: (0, 0)),                # Rh
                pl.BlockSpec((W, Wo), lambda n: (0, 0)),                # Rw^T
            ],
            out_specs=pl.BlockSpec((1, C2, Ho, Wo), lambda n: (n, 0, 0, 0)),
        ),
        compiler_params=pltpu.CompilerParams(dimension_semantics=("parallel",)),
        cost_estimate=pl.CostEstimate(flops=flops, transcendentals=0,
                                      bytes_accessed=bytes_accessed),
    )(w_flat, b_flat, x1, rh, rwt)


# ----------------------------------------------------------------------------
# Kernel 2: 3x3 conv (+ folded BN) + ReLU                  (one image per step)
# ----------------------------------------------------------------------------
def _conv3x3_bias_relu_kernel(w_ref, b_ref, x_ref, o_ref):
    # x_ref : (1, Cin, H+2, W+2)  VMEM  zero-padded input
    # w_ref : (Cout*Cin*9,)       SMEM  folded conv*BN weights, flat [co, ci, kh, kw]
    # b_ref : (Cout,)             SMEM  folded bias
    # o_ref : (1, Cout, H, W)     VMEM
    _, Cin, Hp, Wp = x_ref.shape
    _, Cout, H, W = o_ref.shape
    xs = [x_ref[0, ci] for ci in range(Cin)]        # load each input channel once
    for co in range(Cout):
        acc = jnp.full((H, W), b_ref[co], dtype=jnp.float32)   # bias splat hoisted
        for ci in range(Cin):
            xc = xs[ci]
            for kh in range(3):
                for kw in range(3):
                    wgt = w_ref[((co * Cin + ci) * 3 + kh) * 3 + kw]
                    acc = acc + wgt * xc[kh:kh + H, kw:kw + W]  # VPU FMA, shifted window
        o_ref[0, co] = jnp.maximum(acc, 0.0).astype(o_ref.dtype)


def conv3x3_bn_relu(x, w, b, gamma, beta, mean, var, eps=1e-5):
    """ReLU(BatchNorm(Conv2d(Cin, Cout, 3, padding=1)(x))), BN folded (inference)."""
    N, Cin, H, W = x.shape
    Cout = w.shape[0]
    scale = gamma / jnp.sqrt(var + eps)
    eff_w = (w * scale[:, None, None, None]).astype(jnp.float32)
    eff_b = (scale * (b - mean) + beta).astype(jnp.float32)
    xp = jnp.pad(x, ((0, 0), (0, 0), (1, 1), (1, 1)))           # halo glue
    w_flat = eff_w.reshape(Cout * Cin * 9)

    flops = 2 * N * Cout * Cin * 9 * H * W
    bytes_accessed = 4 * (N * Cin * (H + 2) * (W + 2) + N * Cout * H * W
                          + Cout * Cin * 9 + Cout)

    return pl.pallas_call(
        _conv3x3_bias_relu_kernel,
        out_shape=jax.ShapeDtypeStruct((N, Cout, H, W), x.dtype),
        grid_spec=pltpu.PrefetchScalarGridSpec(
            num_scalar_prefetch=0,
            grid=(N,),
            in_specs=[
                pl.BlockSpec(memory_space=pltpu.MemorySpace.SMEM),          # w_flat
                pl.BlockSpec(memory_space=pltpu.MemorySpace.SMEM),          # eff_b
                pl.BlockSpec((1, Cin, H + 2, W + 2), lambda n: (n, 0, 0, 0)),
            ],
            out_specs=pl.BlockSpec((1, Cout, H, W), lambda n: (n, 0, 0, 0)),
        ),
        compiler_params=pltpu.CompilerParams(dimension_semantics=("parallel",)),
        cost_estimate=pl.CostEstimate(flops=flops, transcendentals=0,
                                      bytes_accessed=bytes_accessed),
    )(w_flat, eff_b, xp)


# ----------------------------------------------------------------------------
# Full Up.forward
# ----------------------------------------------------------------------------
def up_forward(x1, x2, params):
    """Pallas forward pass of the PyTorch `Up` module (bilinear=True)."""
    w1, b1 = params["up_w"], params["up_b"]
    C2 = w1.shape[0]

    # ---- self.up: Upsample -> Conv1x1(padding=1) -> ReLU --------------------
    y_core = up_conv1x1_relu(x1, w1, b1)                   # (N, C2, 2H, 2W)
    N, _, Ho, Wo = y_core.shape
    # Conv padding=1 border: conv of zero input == bias, then ReLU.
    border = jnp.maximum(b1.astype(y_core.dtype), 0.0)
    y = jnp.broadcast_to(border[None, :, None, None], (N, C2, Ho + 2, Wo + 2))
    y = y.at[:, :, 1:-1, 1:-1].set(y_core)

    # ---- F.pad(x1, diff): negative values crop, same as torch ---------------
    diffy = x2.shape[2] - y.shape[2]
    diffx = x2.shape[3] - y.shape[3]
    y = jax.lax.pad(y, jnp.zeros((), y.dtype),
                    [(0, 0, 0), (0, 0, 0),
                     (diffy // 2, diffy - diffy // 2, 0),
                     (diffx // 2, diffx - diffx // 2, 0)])

    # ---- concat along channels, then DoubleConv ------------------------------
    x = jnp.concatenate([x2, y], axis=1)
    # TODO(synk): BatchNorm is applied in inference mode (running stats folded
    # into the conv); training-mode batch statistics are not implemented.
    x = conv3x3_bn_relu(x, params["c1_w"], params["c1_b"], params["bn1_g"],
                        params["bn1_b"], params["bn1_m"], params["bn1_v"])
    x = conv3x3_bn_relu(x, params["c2_w"], params["c2_b"], params["bn2_g"],
                        params["bn2_b"], params["bn2_m"], params["bn2_v"])
    return x


# ----------------------------------------------------------------------------
# Pure-JAX reference (same math, XLA ops only)
# ----------------------------------------------------------------------------
def up_forward_reference(x1, x2, params):
    w1, b1 = params["up_w"], params["up_b"]
    N, C, H, W = x1.shape
    C2 = w1.shape[0]
    Ho, Wo = 2 * H, 2 * W
    rh = _bilinear_matrix(H, Ho)
    rw = _bilinear_matrix(W, Wo)
    up = jnp.einsum("oh,nchw->ncow", rh, x1)
    up = jnp.einsum("vw,ncow->ncov", rw, up)               # (N, C, Ho, Wo)
    upp = jnp.pad(up, ((0, 0), (0, 0), (1, 1), (1, 1)))    # conv1x1 padding=1
    y = jnp.einsum("oc,nchw->nohw", w1.reshape(C2, C), upp) + b1[None, :, None, None]
    y = jnp.maximum(y, 0.0)
    diffy = x2.shape[2] - y.shape[2]
    diffx = x2.shape[3] - y.shape[3]
    y = jax.lax.pad(y, jnp.zeros((), y.dtype),
                    [(0, 0, 0), (0, 0, 0),
                     (diffy // 2, diffy - diffy // 2, 0),
                     (diffx // 2, diffx - diffx // 2, 0)])
    x = jnp.concatenate([x2, y], axis=1)

    def conv_bn_relu_ref(x, w, b, g, bt, mu, vr, eps=1e-5):
        scale = g / jnp.sqrt(vr + eps)
        ew = w * scale[:, None, None, None]
        eb = scale * (b - mu) + bt
        out = jax.lax.conv_general_dilated(
            x, ew, window_strides=(1, 1), padding=((1, 1), (1, 1)),
            dimension_numbers=("NCHW", "OIHW", "NCHW"))
        return jnp.maximum(out + eb[None, :, None, None], 0.0)

    x = conv_bn_relu_ref(x, params["c1_w"], params["c1_b"], params["bn1_g"],
                         params["bn1_b"], params["bn1_m"], params["bn1_v"])
    x = conv_bn_relu_ref(x, params["c2_w"], params["c2_b"], params["bn2_g"],
                         params["bn2_b"], params["bn2_m"], params["bn2_v"])
    return x


if __name__ == "__main__":
    in_channels, out_channels = 4, 3
    N, H, W = 2, 8, 8
    C2 = in_channels // 2

    key = jax.random.PRNGKey(0)
    ks = jax.random.split(key, 16)

    # x1: low-res decoder feature; x2: skip connection at 2x resolution.
    x1 = jax.random.normal(ks[0], (N, in_channels, H, W), jnp.float32)
    x2 = jax.random.normal(ks[1], (N, C2, 2 * H, 2 * W), jnp.float32)

    params = {
        # self.up: Conv2d(in_channels, in_channels // 2, kernel_size=1, padding=1)
        "up_w": 0.3 * jax.random.normal(ks[2], (C2, in_channels, 1, 1), jnp.float32),
        "up_b": 0.1 * jax.random.normal(ks[3], (C2,), jnp.float32),
        # DoubleConv conv1 + bn1
        "c1_w": 0.2 * jax.random.normal(ks[4], (out_channels, in_channels, 3, 3), jnp.float32),
        "c1_b": 0.1 * jax.random.normal(ks[5], (out_channels,), jnp.float32),
        "bn1_g": 1.0 + 0.1 * jax.random.normal(ks[6], (out_channels,), jnp.float32),
        "bn1_b": 0.1 * jax.random.normal(ks[7], (out_channels,), jnp.float32),
        "bn1_m": 0.1 * jax.random.normal(ks[8], (out_channels,), jnp.float32),
        "bn1_v": 1.0 + 0.5 * jax.random.uniform(ks[9], (out_channels,), jnp.float32),
        # DoubleConv conv2 + bn2
        "c2_w": 0.2 * jax.random.normal(ks[10], (out_channels, out_channels, 3, 3), jnp.float32),
        "c2_b": 0.1 * jax.random.normal(ks[11], (out_channels,), jnp.float32),
        "bn2_g": 1.0 + 0.1 * jax.random.normal(ks[12], (out_channels,), jnp.float32),
        "bn2_b": 0.1 * jax.random.normal(ks[13], (out_channels,), jnp.float32),
        "bn2_m": 0.1 * jax.random.normal(ks[14], (out_channels,), jnp.float32),
        "bn2_v": 1.0 + 0.5 * jax.random.uniform(ks[15], (out_channels,), jnp.float32),
    }

    up_fn = jax.jit(up_forward)
    y = up_fn(x1, x2, params)
    y = jax.block_until_ready(y)

    ref = up_forward_reference(x1, x2, params)
    ref = jax.block_until_ready(ref)

    assert y.shape == (N, out_channels, 2 * H, 2 * W), y.shape
    assert jnp.allclose(y, ref, atol=1e-4, rtol=1e-4), float(jnp.max(jnp.abs(y - ref)))

    print("KERNEL_OK")
</pallas_src>

<mosaic_0001>
module attributes {stable_mosaic.version = 11 : i64} {
  func.func @_up_conv1x1_relu_kernel(%arg0: i32, %arg1: memref<8xf32, #tpu.memory_space<smem>>, %arg2: memref<2xf32, #tpu.memory_space<smem>>, %arg3: memref<1x4x8x8xf32, #tpu.memory_space<vmem>>, %arg4: memref<16x8xf32, #tpu.memory_space<vmem>>, %arg5: memref<8x16xf32, #tpu.memory_space<vmem>>, %arg6: memref<1x2x16x16xf32, #tpu.memory_space<vmem>>) attributes {dimension_semantics = [#tpu.dimension_semantics<parallel>], iteration_bounds = array<i64: 2>, scalar_prefetch = 0 : i64, scratch_operands = 0 : i64, tpu.core_type = #tpu.core_type<tc>, window_params = [{transform_indices = @transform_0, window_bounds = array<i64: 8>}, {transform_indices = @transform_1, window_bounds = array<i64: 2>}, {transform_indices = @transform_2, window_bounds = array<i64: 1, 4, 8, 8>}, {pipeline_mode = #tpu.pipeline_mode<synchronous>, transform_indices = @transform_3, window_bounds = array<i64: 16, 8>}, {pipeline_mode = #tpu.pipeline_mode<synchronous>, transform_indices = @transform_4, window_bounds = array<i64: 8, 16>}, {transform_indices = @transform_5, window_bounds = array<i64: 1, 2, 16, 16>}]} {
    %c0 = arith.constant 0 : index
    %c0_0 = arith.constant 0 : index
    %0 = vector.load %arg4[%c0, %c0_0] : memref<16x8xf32, #tpu.memory_space<vmem>>, vector<16x8xf32>
    %c0_1 = arith.constant 0 : index
    %c0_2 = arith.constant 0 : index
    %1 = vector.load %arg5[%c0_1, %c0_2] : memref<8x16xf32, #tpu.memory_space<vmem>>, vector<8x16xf32>
    %c0_3 = arith.constant 0 : index
    %2 = memref.load %arg2[%c0_3] : memref<2xf32, #tpu.memory_space<smem>>
    %3 = vector.broadcast %2 : f32 to vector<16x16xf32>
    %c1 = arith.constant 1 : index
    %4 = memref.load %arg2[%c1] : memref<2xf32, #tpu.memory_space<smem>>
    %5 = vector.broadcast %4 : f32 to vector<16x16xf32>
    %c0_4 = arith.constant 0 : index
    %c0_5 = arith.constant 0 : index
    %c0_6 = arith.constant 0 : index
    %c0_7 = arith.constant 0 : index
    %6 = vector.load %arg3[%c0_4, %c0_5, %c0_6, %c0_7] : memref<1x4x8x8xf32, #tpu.memory_space<vmem>>, vector<1x1x8x8xf32>
    %7 = vector.shape_cast %6 : vector<1x1x8x8xf32> to vector<8x8xf32>
    %cst = arith.constant dense<0.000000e+00> : vector<16x8xf32>
    %8 = tpu.matmul %0, %7, %cst {dimension_numbers = #tpu.dot_dimension_numbers<[1], [0], [0], [1], [0, 0, 1, 1], [], []>} : vector<16x8xf32>, vector<8x8xf32>, vector<16x8xf32> -> vector<16x8xf32>
    %cst_8 = arith.constant dense<0.000000e+00> : vector<16x16xf32>
    %9 = tpu.matmul %8, %1, %cst_8 {dimension_numbers = #tpu.dot_dimension_numbers<[1], [0], [0], [1], [0, 0, 1, 1], [], []>} : vector<16x8xf32>, vector<8x16xf32>, vector<16x16xf32> -> vector<16x16xf32>
    %c0_9 = arith.constant 0 : index
    %10 = memref.load %arg1[%c0_9] : memref<8xf32, #tpu.memory_space<smem>>
    %11 = vector.broadcast %10 : f32 to vector<16x16xf32>
    %12 = arith.mulf %11, %9 : vector<16x16xf32>
    %13 = arith.addf %3, %12 : vector<16x16xf32>
    %c4 = arith.constant 4 : index
    %14 = memref.load %arg1[%c4] : memref<8xf32, #tpu.memory_space<smem>>
    %15 = vector.broadcast %14 : f32 to vector<16x16xf32>
    %16 = arith.mulf %15, %9 : vector<16x16xf32>
    %17 = arith.addf %5, %16 : vector<16x16xf32>
    %c0_10 = arith.constant 0 : index
    %c1_11 = arith.constant 1 : index
    %c0_12 = arith.constant 0 : index
    %c0_13 = arith.constant 0 : index
    %18 = vector.load %arg3[%c0_10, %c1_11, %c0_12, %c0_13] : memref<1x4x8x8xf32, #tpu.memory_space<vmem>>, vector<1x1x8x8xf32>
    %19 = vector.shape_cast %18 : vector<1x1x8x8xf32> to vector<8x8xf32>
    %cst_14 = arith.constant dense<0.000000e+00> : vector<16x8xf32>
    %20 = tpu.matmul %0, %19, %cst_14 {dimension_numbers = #tpu.dot_dimension_numbers<[1], [0], [0], [1], [0, 0, 1, 1], [], []>} : vector<16x8xf32>, vector<8x8xf32>, vector<16x8xf32> -> vector<16x8xf32>
    %cst_15 = arith.constant dense<0.000000e+00> : vector<16x16xf32>
    %21 = tpu.matmul %20, %1, %cst_15 {dimension_numbers = #tpu.dot_dimension_numbers<[1], [0], [0], [1], [0, 0, 1, 1], [], []>} : vector<16x8xf32>, vector<8x16xf32>, vector<16x16xf32> -> vector<16x16xf32>
    %c1_16 = arith.constant 1 : index
    %22 = memref.load %arg1[%c1_16] : memref<8xf32, #tpu.memory_space<smem>>
    %23 = vector.broadcast %22 : f32 to vector<16x16xf32>
    %24 = arith.mulf %23, %21 : vector<16x16xf32>
    %25 = arith.addf %13, %24 : vector<16x16xf32>
    %c5 = arith.constant 5 : index
    %26 = memref.load %arg1[%c5] : memref<8xf32, #tpu.memory_space<smem>>
    %27 = vector.broadcast %26 : f32 to vector<16x16xf32>
    %28 = arith.mulf %27, %21 : vector<16x16xf32>
    %29 = arith.addf %17, %28 : vector<16x16xf32>
    %c0_17 = arith.constant 0 : index
    %c2 = arith.constant 2 : index
    %c0_18 = arith.constant 0 : index
    %c0_19 = arith.constant 0 : index
    %30 = vector.load %arg3[%c0_17, %c2, %c0_18, %c0_19] : memref<1x4x8x8xf32, #tpu.memory_space<vmem>>, vector<1x1x8x8xf32>
    %31 = vector.shape_cast %30 : vector<1x1x8x8xf32> to vector<8x8xf32>
    %cst_20 = arith.constant dense<0.000000e+00> : vector<16x8xf32>
    %32 = tpu.matmul %0, %31, %cst_20 {dimension_numbers = #tpu.dot_dimension_numbers<[1], [0], [0], [1], [0, 0, 1, 1], [], []>} : vector<16x8xf32>, vector<8x8xf32>, vector<16x8xf32> -> vector<16x8xf32>
    %cst_21 = arith.constant dense<0.000000e+00> : vector<16x16xf32>
    %33 = tpu.matmul %32, %1, %cst_21 {dimension_numbers = #tpu.dot_dimension_numbers<[1], [0], [0], [1], [0, 0, 1, 1], [], []>} : vector<16x8xf32>, vector<8x16xf32>, vector<16x16xf32> -> vector<16x16xf32>
    %c2_22 = arith.constant 2 : index
    %34 = memref.load %arg1[%c2_22] : memref<8xf32, #tpu.memory_space<smem>>
    %35 = vector.broadcast %34 : f32 to vector<16x16xf32>
    %36 = arith.mulf %35, %33 : vector<16x16xf32>
    %37 = arith.addf %25, %36 : vector<16x16xf32>
    %c6 = arith.constant 6 : index
    %38 = memref.load %arg1[%c6] : memref<8xf32, #tpu.memory_space<smem>>
    %39 = vector.broadcast %38 : f32 to vector<16x16xf32>
    %40 = arith.mulf %39, %33 : vector<16x16xf32>
    %41 = arith.addf %29, %40 : vector<16x16xf32>
    %c0_23 = arith.constant 0 : index
    %c3 = arith.constant 3 : index
    %c0_24 = arith.constant 0 : index
    %c0_25 = arith.constant 0 : index
    %42 = vector.load %arg3[%c0_23, %c3, %c0_24, %c0_25] : memref<1x4x8x8xf32, #tpu.memory_space<vmem>>, vector<1x1x8x8xf32>
    %43 = vector.shape_cast %42 : vector<1x1x8x8xf32> to vector<8x8xf32>
    %cst_26 = arith.constant dense<0.000000e+00> : vector<16x8xf32>
    %44 = tpu.matmul %0, %43, %cst_26 {dimension_numbers = #tpu.dot_dimension_numbers<[1], [0], [0], [1], [0, 0, 1, 1], [], []>} : vector<16x8xf32>, vector<8x8xf32>, vector<16x8xf32> -> vector<16x8xf32>
    %cst_27 = arith.constant dense<0.000000e+00> : vector<16x16xf32>
    %45 = tpu.matmul %44, %1, %cst_27 {dimension_numbers = #tpu.dot_dimension_numbers<[1], [0], [0], [1], [0, 0, 1, 1], [], []>} : vector<16x8xf32>, vector<8x16xf32>, vector<16x16xf32> -> vector<16x16xf32>
    %c3_28 = arith.constant 3 : index
    %46 = memref.load %arg1[%c3_28] : memref<8xf32, #tpu.memory_space<smem>>
    %47 = vector.broadcast %46 : f32 to vector<16x16xf32>
    %48 = arith.mulf %47, %45 : vector<16x16xf32>
    %49 = arith.addf %37, %48 : vector<16x16xf32>
    %c7 = arith.constant 7 : index
    %50 = memref.load %arg1[%c7] : memref<8xf32, #tpu.memory_space<smem>>
    %51 = vector.broadcast %50 : f32 to vector<16x16xf32>
    %52 = arith.mulf %51, %45 : vector<16x16xf32>
    %53 = arith.addf %41, %52 : vector<16x16xf32>
    %cst_29 = arith.constant 0.000000e+00 : f32
    %54 = vector.broadcast %cst_29 : f32 to vector<16x16xf32>
    %55 = arith.maximumf %49, %54 : vector<16x16xf32>
    %c0_30 = arith.constant 0 : index
    %c0_31 = arith.constant 0 : index
    %c0_32 = arith.constant 0 : index
    %c0_33 = arith.constant 0 : index
    %56 = vector.load %arg6[%c0_30, %c0_31, %c0_32, %c0_33] : memref<1x2x16x16xf32, #tpu.memory_space<vmem>>, vector<1x1x16x16xf32>
    %57 = vector.shape_cast %56 : vector<1x1x16x16xf32> to vector<16x16xf32>
    %58 = vector.shape_cast %55 : vector<16x16xf32> to vector<1x1x16x16xf32>
    tpu.vector_store %arg6[%c0_30, %c0_31, %c0_32, %c0_33], %58 {strides = array<i32>} : memref<1x2x16x16xf32, #tpu.memory_space<vmem>>, vector<1x1x16x16xf32>,
    %cst_34 = arith.constant 0.000000e+00 : f32
    %59 = vector.broadcast %cst_34 : f32 to vector<16x16xf32>
    %60 = arith.maximumf %53, %59 : vector<16x16xf32>
    %c0_35 = arith.constant 0 : index
    %c1_36 = arith.constant 1 : index
    %c0_37 = arith.constant 0 : index
    %c0_38 = arith.constant 0 : index
    %61 = vector.load %arg6[%c0_35, %c1_36, %c0_37, %c0_38] : memref<1x2x16x16xf32, #tpu.memory_space<vmem>>, vector<1x1x16x16xf32>
    %62 = vector.shape_cast %61 : vector<1x1x16x16xf32> to vector<16x16xf32>
    %63 = vector.shape_cast %60 : vector<16x16xf32> to vector<1x1x16x16xf32>
    tpu.vector_store %arg6[%c0_35, %c1_36, %c0_37, %c0_38], %63 {strides = array<i32>} : memref<1x2x16x16xf32, #tpu.memory_space<vmem>>, vector<1x1x16x16xf32>,
    return
  }
  func.func @transform_0(%arg0: i32) -> i32 {
    %c0_i32 = arith.constant 0 : i32
    %c0_i32_0 = arith.constant 0 : i32
    return %c0_i32 : i32
  }
  func.func @transform_1(%arg0: i32) -> i32 {
    %c0_i32 = arith.constant 0 : i32
    %c0_i32_0 = arith.constant 0 : i32
    return %c0_i32 : i32
  }
  func.func @transform_2(%arg0: i32) -> (i32, i32, i32, i32) {
    %c0_i32 = arith.constant 0 : i32
    %c0_i32_0 = arith.constant 0 : i32
    %c0_i32_1 = arith.constant 0 : i32
    %c0_i32_2 = arith.constant 0 : i32
    return %arg0, %c0_i32, %c0_i32_0, %c0_i32_1 : i32, i32, i32, i32
  }
  func.func @transform_3(%arg0: i32) -> (i32, i32) {
    %c0_i32 = arith.constant 0 : i32
    %c0_i32_0 = arith.constant 0 : i32
    %c0_i32_1 = arith.constant 0 : i32
    return %c0_i32, %c0_i32_0 : i32, i32
  }
  func.func @transform_4(%arg0: i32) -> (i32, i32) {
    %c0_i32 = arith.constant 0 : i32
    %c0_i32_0 = arith.constant 0 : i32
    %c0_i32_1 = arith.constant 0 : i32
    return %c0_i32, %c0_i32_0 : i32, i32
  }
  func.func @transform_5(%arg0: i32) -> (i32, i32, i32, i32) {
    %c0_i32 = arith.constant 0 : i32
    %c0_i32_0 = arith.constant 0 : i32
    %c0_i32_1 = arith.constant 0 : i32
    %c0_i32_2 = arith.constant 0 : i32
    return %arg0, %c0_i32, %c0_i32_0, %c0_i32_1 : i32, i32, i32, i32
  }
}

module attributes {stable_mosaic.version = 11 : i64} {
  func.func @_conv3x3_bias_relu_kernel(%arg0: i32, %arg1: memref<108xf32, #tpu.memory_space<smem>>, %arg2: memref<3xf32, #tpu.memory_space<smem>>, %arg3: memref<1x4x18x18xf32, #tpu.memory_space<vmem>>, %arg4: memref<1x3x16x16xf32, #tpu.memory_space<vmem>>) attributes {dimension_semantics = [#tpu.dimension_semantics<parallel>], iteration_bounds = array<i64: 2>, scalar_prefetch = 0 : i64, scratch_operands = 0 : i64, tpu.core_type = #tpu.core_type<tc>, window_params = [{transform_indices = @transform_0, window_bounds = array<i64: 108>}, {transform_indices = @transform_1, window_bounds = array<i64: 3>}, {transform_indices = @transform_2, window_bounds = array<i64: 1, 4, 18, 18>}, {transform_indices = @transform_3, window_bounds = array<i64: 1, 3, 16, 16>}]} {
    %c0 = arith.constant 0 : index
    %c0_0 = arith.constant 0 : index
    %c0_1 = arith.constant 0 : index
    %c0_2 = arith.constant 0 : index
    %0 = vector.load %arg3[%c0, %c0_0, %c0_1, %c0_2] : memref<1x4x18x18xf32, #tpu.memory_space<vmem>>, vector<1x1x18x18xf32>
    %1 = vector.shape_cast %0 : vector<1x1x18x18xf32> to vector<18x18xf32>
    %c0_3 = arith.constant 0 : index
    %c1 = arith.constant 1 : index
    %c0_4 = arith.constant 0 : index
    %c0_5 = arith.constant 0 : index
    %2 = vector.load %arg3[%c0_3, %c1, %c0_4, %c0_5] : memref<1x4x18x18xf32, #tpu.memory_space<vmem>>, vector<1x1x18x18xf32>
    %3 = vector.shape_cast %2 : vector<1x1x18x18xf32> to vector<18x18xf32>
    %c0_6 = arith.constant 0 : index
    %c2 = arith.constant 2 : index
    %c0_7 = arith.constant 0 : index
    %c0_8 = arith.constant 0 : index
    %4 = vector.load %arg3[%c0_6, %c2, %c0_7, %c0_8] : memref<1x4x18x18xf32, #tpu.memory_space<vmem>>, vector<1x1x18x18xf32>
    %5 = vector.shape_cast %4 : vector<1x1x18x18xf32> to vector<18x18xf32>
    %c0_9 = arith.constant 0 : index
    %c3 = arith.constant 3 : index
    %c0_10 = arith.constant 0 : index
    %c0_11 = arith.constant 0 : index
    %6 = vector.load %arg3[%c0_9, %c3, %c0_10, %c0_11] : memref<1x4x18x18xf32, #tpu.memory_space<vmem>>, vector<1x1x18x18xf32>
    %7 = vector.shape_cast %6 : vector<1x1x18x18xf32> to vector<18x18xf32>
    %c0_12 = arith.constant 0 : index
    %8 = memref.load %arg2[%c0_12] : memref<3xf32, #tpu.memory_space<smem>>
    %9 = vector.broadcast %8 : f32 to vector<16x16xf32>
    %c0_13 = arith.constant 0 : index
    %10 = memref.load %arg1[%c0_13] : memref<108xf32, #tpu.memory_space<smem>>
    %11 = vector.extract_strided_slice %1 {offsets = [0, 0], sizes = [16, 16], strides = [1, 1]} : vector<18x18xf32> to vector<16x16xf32>
    %12 = vector.broadcast %10 : f32 to vector<16x16xf32>
    %13 = arith.mulf %12, %11 : vector<16x16xf32>
    %14 = arith.addf %9, %13 : vector<16x16xf32>
    %c1_14 = arith.constant 1 : index
    %15 = memref.load %arg1[%c1_14] : memref<108xf32, #tpu.memory_space<smem>>
    %16 = vector.extract_strided_slice %1 {offsets = [0, 1], sizes = [16, 16], strides = [1, 1]} : vector<18x18xf32> to vector<16x16xf32>
    %17 = vector.broadcast %15 : f32 to vector<16x16xf32>
    %18 = arith.mulf %17, %16 : vector<16x16xf32>
    %19 = arith.addf %14, %18 : vector<16x16xf32>
    %c2_15 = arith.constant 2 : index
    %20 = memref.load %arg1[%c2_15] : memref<108xf32, #tpu.memory_space<smem>>
    %21 = vector.extract_strided_slice %1 {offsets = [0, 2], sizes = [16, 16], strides = [1, 1]} : vector<18x18xf32> to vector<16x16xf32>
    %22 = vector.broadcast %20 : f32 to vector<16x16xf32>
    %23 = arith.mulf %22, %21 : vector<16x16xf32>
    %24 = arith.addf %19, %23 : vector<16x16xf32>
    %c3_16 = arith.constant 3 : index
    %25 = memref.load %arg1[%c3_16] : memref<108xf32, #tpu.memory_space<smem>>
    %26 = vector.extract_strided_slice %1 {offsets = [1, 0], sizes = [16, 16], strides = [1, 1]} : vector<18x18xf32> to vector<16x16xf32>
    %27 = vector.broadcast %25 : f32 to vector<16x16xf32>
    %28 = arith.mulf %27, %26 : vector<16x16xf32>
    %29 = arith.addf %24, %28 : vector<16x16xf32>
    %c4 = arith.constant 4 : index
    %30 = memref.load %arg1[%c4] : memref<108xf32, #tpu.memory_space<smem>>
    %31 = vector.extract_strided_slice %1 {offsets = [1, 1], sizes = [16, 16], strides = [1, 1]} : vector<18x18xf32> to vector<16x16xf32>
    %32 = vector.broadcast %30 : f32 to vector<16x16xf32>
    %33 = arith.mulf %32, %31 : vector<16x16xf32>
    %34 = arith.addf %29, %33 : vector<16x16xf32>
    %c5 = arith.constant 5 : index
    %35 = memref.load %arg1[%c5] : memref<108xf32, #tpu.memory_space<smem>>
    %36 = vector.extract_strided_slice %1 {offsets = [1, 2], sizes = [16, 16], strides = [1, 1]} : vector<18x18xf32> to vector<16x16xf32>
    %37 = vector.broadcast %35 : f32 to vector<16x16xf32>
    %38 = arith.mulf %37, %36 : vector<16x16xf32>
    %39 = arith.addf %34, %38 : vector<16x16xf32>
    %c6 = arith.constant 6 : index
    %40 = memref.load %arg1[%c6] : memref<108xf32, #tpu.memory_space<smem>>
    %41 = vector.extract_strided_slice %1 {offsets = [2, 0], sizes = [16, 16], strides = [1, 1]} : vector<18x18xf32> to vector<16x16xf32>
    %42 = vector.broadcast %40 : f32 to vector<16x16xf32>
    %43 = arith.mulf %42, %41 : vector<16x16xf32>
    %44 = arith.addf %39, %43 : vector<16x16xf32>
    %c7 = arith.constant 7 : index
    %45 = memref.load %arg1[%c7] : memref<108xf32, #tpu.memory_space<smem>>
    %46 = vector.extract_strided_slice %1 {offsets = [2, 1], sizes = [16, 16], strides = [1, 1]} : vector<18x18xf32> to vector<16x16xf32>
    %47 = vector.broadcast %45 : f32 to vector<16x16xf32>
    %48 = arith.mulf %47, %46 : vector<16x16xf32>
    %49 = arith.addf %44, %48 : vector<16x16xf32>
    %c8 = arith.constant 8 : index
    %50 = memref.load %arg1[%c8] : memref<108xf32, #tpu.memory_space<smem>>
    %51 = vector.extract_strided_slice %1 {offsets = [2, 2], sizes = [16, 16], strides = [1, 1]} : vector<18x18xf32> to vector<16x16xf32>
    %52 = vector.broadcast %50 : f32 to vector<16x16xf32>
    %53 = arith.mulf %52, %51 : vector<16x16xf32>
    %54 = arith.addf %49, %53 : vector<16x16xf32>
    %c9 = arith.constant 9 : index
    %55 = memref.load %arg1[%c9] : memref<108xf32, #tpu.memory_space<smem>>
    %56 = vector.extract_strided_slice %3 {offsets = [0, 0], sizes = [16, 16], strides = [1, 1]} : vector<18x18xf32> to vector<16x16xf32>
    %57 = vector.broadcast %55 : f32 to vector<16x16xf32>
    %58 = arith.mulf %57, %56 : vector<16x16xf32>
    %59 = arith.addf %54, %58 : vector<16x16xf32>
    %c10 = arith.constant 10 : index
    %60 = memref.load %arg1[%c10] : memref<108xf32, #tpu.memory_space<smem>>
    %61 = vector.extract_strided_slice %3 {offsets = [0, 1], sizes = [16, 16], strides = [1, 1]} : vector<18x18xf32> to vector<16x16xf32>
    %62 = vector.broadcast %60 : f32 to vector<16x16xf32>
    %63 = arith.mulf %62, %61 : vector<16x16xf32>
    %64 = arith.addf %59, %63 : vector<16x16xf32>
    %c11 = arith.constant 11 : index
    %65 = memref.load %arg1[%c11] : memref<108xf32, #tpu.memory_space<smem>>
    %66 = vector.extract_strided_slice %3 {offsets = [0, 2], sizes = [16, 16], strides = [1, 1]} : vector<18x18xf32> to vector<16x16xf32>
    %67 = vector.broadcast %65 : f32 to vector<16x16xf32>
    %68 = arith.mulf %67, %66 : vector<16x16xf32>
    %69 = arith.addf %64, %68 : vector<16x16xf32>
    %c12 = arith.constant 12 : index
    %70 = memref.load %arg1[%c12] : memref<108xf32, #tpu.memory_space<smem>>
    %71 = vector.extract_strided_slice %3 {offsets = [1, 0], sizes = [16, 16], strides = [1, 1]} : vector<18x18xf32> to vector<16x16xf32>
    %72 = vector.broadcast %70 : f32 to vector<16x16xf32>
    %73 = arith.mulf %72, %71 : vector<16x16xf32>
    %74 = arith.addf %69, %73 : vector<16x16xf32>
    %c13 = arith.constant 13 : index
    %75 = memref.load %arg1[%c13] : memref<108xf32, #tpu.memory_space<smem>>
    %76 = vector.extract_strided_slice %3 {offsets = [1, 1], sizes = [16, 16], strides = [1, 1]} : vector<18x18xf32> to vector<16x16xf32>
    %77 = vector.broadcast %75 : f32 to vector<16x16xf32>
    %78 = arith.mulf %77, %76 : vector<16x16xf32>
    %79 = arith.addf %74, %78 : vector<16x16xf32>
    %c14 = arith.constant 14 : index
    %80 = memref.load %arg1[%c14] : memref<108xf32, #tpu.memory_space<smem>>
    %81 = vector.extract_strided_slice %3 {offsets = [1, 2], sizes = [16, 16], strides = [1, 1]} : vector<18x18xf32> to vector<16x16xf32>
    %82 = vector.broadcast %80 : f32 to vector<16x16xf32>
    %83 = arith.mulf %82, %81 : vector<16x16xf32>
    %84 = arith.addf %79, %83 : vector<16x16xf32>
    %c15 = arith.constant 15 : index
    %85 = memref.load %arg1[%c15] : memref<108xf32, #tpu.memory_space<smem>>
    %86 = vector.extract_strided_slice %3 {offsets = [2, 0], sizes = [16, 16], strides = [1, 1]} : vector<18x18xf32> to vector<16x16xf32>
    %87 = vector.broadcast %85 : f32 to vector<16x16xf32>
    %88 = arith.mulf %87, %86 : vector<16x16xf32>
    %89 = arith.addf %84, %88 : vector<16x16xf32>
    %c16 = arith.constant 16 : index
    %90 = memref.load %arg1[%c16] : memref<108xf32, #tpu.memory_space<smem>>
    %91 = vector.extract_strided_slice %3 {offsets = [2, 1], sizes = [16, 16], strides = [1, 1]} : vector<18x18xf32> to vector<16x16xf32>
    %92 = vector.broadcast %90 : f32 to vector<16x16xf32>
    %93 = arith.mulf %92, %91 : vector<16x16xf32>
    %94 = arith.addf %89, %93 : vector<16x16xf32>
    %c17 = arith.constant 17 : index
    %95 = memref.load %arg1[%c17] : memref<108xf32, #tpu.memory_space<smem>>
    %96 = vector.extract_strided_slice %3 {offsets = [2, 2], sizes = [16, 16], strides = [1, 1]} : vector<18x18xf32> to vector<16x16xf32>
    %97 = vector.broadcast %95 : f32 to vector<16x16xf32>
    %98 = arith.mulf %97, %96 : vector<16x16xf32>
    %99 = arith.addf %94, %98 : vector<16x16xf32>
    %c18 = arith.constant 18 : index
    %100 = memref.load %arg1[%c18] : memref<108xf32, #tpu.memory_space<smem>>
    %101 = vector.extract_strided_slice %5 {offsets = [0, 0], sizes = [16, 16], strides = [1, 1]} : vector<18x18xf32> to vector<16x16xf32>
    %102 = vector.broadcast %100 : f32 to vector<16x16xf32>
    %103 = arith.mulf %102, %101 : vector<16x16xf32>
    %104 = arith.addf %99, %103 : vector<16x16xf32>
    %c19 = arith.constant 19 : index
    %105 = memref.load %arg1[%c19] : memref<108xf32, #tpu.memory_space<smem>>
    %106 = vector.extract_strided_slice %5 {offsets = [0, 1], sizes = [16, 16], strides = [1, 1]} : vector<18x18xf32> to vector<16x16xf32>
    %107 = vector.broadcast %105 : f32 to vector<16x16xf32>
    %108 = arith.mulf %107, %106 : vector<16x16xf32>
    %109 = arith.addf %104, %108 : vector<16x16xf32>
    %c20 = arith.constant 20 : index
    %110 = memref.load %arg1[%c20] : memref<108xf32, #tpu.memory_space<smem>>
    %111 = vector.extract_strided_slice %5 {offsets = [0, 2], sizes = [16, 16], strides = [1, 1]} : vector<18x18xf32> to vector<16x16xf32>
    %112 = vector.broadcast %110 : f32 to vector<16x16xf32>
    %113 = arith.mulf %112, %111 : vector<16x16xf32>
    %114 = arith.addf %109, %113 : vector<16x16xf32>
    %c21 = arith.constant 21 : index
    %115 = memref.load %arg1[%c21] : memref<108xf32, #tpu.memory_space<smem>>
    %116 = vector.extract_strided_slice %5 {offsets = [1, 0], sizes = [16, 16], strides = [1, 1]} : vector<18x18xf32> to vector<16x16xf32>
    %117 = vector.broadcast %115 : f32 to vector<16x16xf32>
    %118 = arith.mulf %117, %116 : vector<16x16xf32>
    %119 = arith.addf %114, %118 : vector<16x16xf32>
    %c22 = arith.constant 22 : index
    %120 = memref.load %arg1[%c22] : memref<108xf32, #tpu.memory_space<smem>>
    %121 = vector.extract_strided_slice %5 {offsets = [1, 1], sizes = [16, 16], strides = [1, 1]} : vector<18x18xf32> to vector<16x16xf32>
    %122 = vector.broadcast %120 : f32 to vector<16x16xf32>
    %123 = arith.mulf %122, %121 : vector<16x16xf32>
    %124 = arith.addf %119, %123 : vector<16x16xf32>
    %c23 = arith.constant 23 : index
    %125 = memref.load %arg1[%c23] : memref<108xf32, #tpu.memory_space<smem>>
    %126 = vector.extract_strided_slice %5 {offsets = [1, 2], sizes = [16, 16], strides = [1, 1]} : vector<18x18xf32> to vector<16x16xf32>
    %127 = vector.broadcast %125 : f32 to vector<16x16xf32>
    %128 = arith.mulf %127, %126 : vector<16x16xf32>
    %129 = arith.addf %124, %128 : vector<16x16xf32>
    %c24 = arith.constant 24 : index
    %130 = memref.load %arg1[%c24] : memref<108xf32, #tpu.memory_space<smem>>
    %131 = vector.extract_strided_slice %5 {offsets = [2, 0], sizes = [16, 16], strides = [1, 1]} : vector<18x18xf32> to vector<16x16xf32>
    %132 = vector.broadcast %130 : f32 to vector<16x16xf32>
    %133 = arith.mulf %132, %131 : vector<16x16xf32>
    %134 = arith.addf %129, %133 : vector<16x16xf32>
    %c25 = arith.constant 25 : index
    %135 = memref.load %arg1[%c25] : memref<108xf32, #tpu.memory_space<smem>>
    %136 = vector.extract_strided_slice %5 {offsets = [2, 1], sizes = [16, 16], strides = [1, 1]} : vector<18x18xf32> to vector<16x16xf32>
    %137 = vector.broadcast %135 : f32 to vector<16x16xf32>
    %138 = arith.mulf %137, %136 : vector<16x16xf32>
    %139 = arith.addf %134, %138 : vector<16x16xf32>
    %c26 = arith.constant 26 : index
    %140 = memref.load %arg1[%c26] : memref<108xf32, #tpu.memory_space<smem>>
    %141 = vector.extract_strided_slice %5 {offsets = [2, 2], sizes = [16, 16], strides = [1, 1]} : vector<18x18xf32> to vector<16x16xf32>
    %142 = vector.broadcast %140 : f32 to vector<16x16xf32>
    %143 = arith.mulf %142, %141 : vector<16x16xf32>
    %144 = arith.addf %139, %143 : vector<16x16xf32>
    %c27 = arith.constant 27 : index
    %145 = memref.load %arg1[%c27] : memref<108xf32, #tpu.memory_space<smem>>
    %146 = vector.extract_strided_slice %7 {offsets = [0, 0], sizes = [16, 16], strides = [1, 1]} : vector<18x18xf32> to vector<16x16xf32>
    %147 = vector.broadcast %145 : f32 to vector<16x16xf32>
    %148 = arith.mulf %147, %146 : vector<16x16xf32>
    %149 = arith.addf %144, %148 : vector<16x16xf32>
    %c28 = arith.constant 28 : index
    %150 = memref.load %arg1[%c28] : memref<108xf32, #tpu.memory_space<smem>>
    %151 = vector.extract_strided_slice %7 {offsets = [0, 1], sizes = [16, 16], strides = [1, 1]} : vector<18x18xf32> to vector<16x16xf32>
    %152 = vector.broadcast %150 : f32 to vector<16x16xf32>
    %153 = arith.mulf %152, %151 : vector<16x16xf32>
    %154 = arith.addf %149, %153 : vector<16x16xf32>
    %c29 = arith.constant 29 : index
    %155 = memref.load %arg1[%c29] : memref<108xf32, #tpu.memory_space<smem>>
    %156 = vector.extract_strided_slice %7 {offsets = [0, 2], sizes = [16, 16], strides = [1, 1]} : vector<18x18xf32> to vector<16x16xf32>
    %157 = vector.broadcast %155 : f32 to vector<16x16xf32>
    %158 = arith.mulf %157, %156 : vector<16x16xf32>
    %159 = arith.addf %154, %158 : vector<16x16xf32>
    %c30 = arith.constant 30 : index
    %160 = memref.load %arg1[%c30] : memref<108xf32, #tpu.memory_space<smem>>
    %161 = vector.extract_strided_slice %7 {offsets = [1, 0], sizes = [16, 16], strides = [1, 1]} : vector<18x18xf32> to vector<16x16xf32>
    %162 = vector.broadcast %160 : f32 to vector<16x16xf32>
    %163 = arith.mulf %162, %161 : vector<16x16xf32>
    %164 = arith.addf %159, %163 : vector<16x16xf32>
    %c31 = arith.constant 31 : index
    %165 = memref.load %arg1[%c31] : memref<108xf32, #tpu.memory_space<smem>>
    %166 = vector.extract_strided_slice %7 {offsets = [1, 1], sizes = [16, 16], strides = [1, 1]} : vector<18x18xf32> to vector<16x16xf32>
    %167 = vector.broadcast %165 : f32 to vector<16x16xf32>
    %168 = arith.mulf %167, %166 : vector<16x16xf32>
    %169 = arith.addf %164, %168 : vector<16x16xf32>
    %c32 = arith.constant 32 : index
    %170 = memref.load %arg1[%c32] : memref<108xf32, #tpu.memory_space<smem>>
    %171 = vector.extract_strided_slice %7 {offsets = [1, 2], sizes = [16, 16], strides = [1, 1]} : vector<18x18xf32> to vector<16x16xf32>
    %172 = vector.broadcast %170 : f32 to vector<16x16xf32>
    %173 = arith.mulf %172, %171 : vector<16x16xf32>
    %174 = arith.addf %169, %173 : vector<16x16xf32>
    %c33 = arith.constant 33 : index
    %175 = memref.load %arg1[%c33] : memref<108xf32, #tpu.memory_space<smem>>
    %176 = vector.extract_strided_slice %7 {offsets = [2, 0], sizes = [16, 16], strides = [1, 1]} : vector<18x18xf32> to vector<16x16xf32>
    %177 = vector.broadcast %175 : f32 to vector<16x16xf32>
    %178 = arith.mulf %177, %176 : vector<16x16xf32>
    %179 = arith.addf %174, %178 : vector<16x16xf32>
    %c34 = arith.constant 34 : index
    %180 = memref.load %arg1[%c34] : memref<108xf32, #tpu.memory_space<smem>>
    %181 = vector.extract_strided_slice %7 {offsets = [2, 1], sizes = [16, 16], strides = [1, 1]} : vector<18x18xf32> to vector<16x16xf32>
    %182 = vector.broadcast %180 : f32 to vector<16x16xf32>
    %183 = arith.mulf %182, %181 : vector<16x16xf32>
    %184 = arith.addf %179, %183 : vector<16x16xf32>
    %c35 = arith.constant 35 : index
    %185 = memref.load %arg1[%c35] : memref<108xf32, #tpu.memory_space<smem>>
    %186 = vector.extract_strided_slice %7 {offsets = [2, 2], sizes = [16, 16], strides = [1, 1]} : vector<18x18xf32> to vector<16x16xf32>
    %187 = vector.broadcast %185 : f32 to vector<16x16xf32>
    %188 = arith.mulf %187, %186 : vector<16x16xf32>
    %189 = arith.addf %184, %188 : vector<16x16xf32>
    %cst = arith.constant 0.000000e+00 : f32
    %190 = vector.broadcast %cst : f32 to vector<16x16xf32>
    %191 = arith.maximumf %189, %190 : vector<16x16xf32>
    %c0_17 = arith.constant 0 : index
    %c0_18 = arith.constant 0 : index
    %c0_19 = arith.constant 0 : index
    %c0_20 = arith.constant 0 : index
    %192 = vector.load %arg4[%c0_17, %c0_18, %c0_19, %c0_20] : memref<1x3x16x16xf32, #tpu.memory_space<vmem>>, vector<1x1x16x16xf32>
    %193 = vector.shape_cast %192 : vector<1x1x16x16xf32> to vector<16x16xf32>
    %194 = vector.shape_cast %191 : vector<16x16xf32> to vector<1x1x16x16xf32>
    tpu.vector_store %arg4[%c0_17, %c0_18, %c0_19, %c0_20], %194 {strides = array<i32>} : memref<1x3x16x16xf32, #tpu.memory_space<vmem>>, vector<1x1x16x16xf32>,
    %c1_21 = arith.constant 1 : index
    %195 = memref.load %arg2[%c1_21] : memref<3xf32, #tpu.memory_space<smem>>
    %196 = vector.broadcast %195 : f32 to vector<16x16xf32>
    %c36 = arith.constant 36 : index
    %197 = memref.load %arg1[%c36] : memref<108xf32, #tpu.memory_space<smem>>
    %198 = vector.extract_strided_slice %1 {offsets = [0, 0], sizes = [16, 16], strides = [1, 1]} : vector<18x18xf32> to vector<16x16xf32>
    %199 = vector.broadcast %197 : f32 to vector<16x16xf32>
    %200 = arith.mulf %199, %198 : vector<16x16xf32>
    %201 = arith.addf %196, %200 : vector<16x16xf32>
    %c37 = arith.constant 37 : index
    %202 = memref.load %arg1[%c37] : memref<108xf32, #tpu.memory_space<smem>>
    %203 = vector.extract_strided_slice %1 {offsets = [0, 1], sizes = [16, 16], strides = [1, 1]} : vector<18x18xf32> to vector<16x16xf32>
    %204 = vector.broadcast %202 : f32 to vector<16x16xf32>
    %205 = arith.mulf %204, %203 : vector<16x16xf32>
    %206 = arith.addf %201, %205 : vector<16x16xf32>
    %c38 = arith.constant 38 : index
    %207 = memref.load %arg1[%c38] : memref<108xf32, #tpu.memory_space<smem>>
    %208 = vector.extract_strided_slice %1 {offsets = [0, 2], sizes = [16, 16], strides = [1, 1]} : vector<18x18xf32> to vector<16x16xf32>
    %209 = vector.broadcast %207 : f32 to vector<16x16xf32>
    %210 = arith.mulf %209, %208 : vector<16x16xf32>
    %211 = arith.addf %206, %210 : vector<16x16xf32>
    %c39 = arith.constant 39 : index
    %212 = memref.load %arg1[%c39] : memref<108xf32, #tpu.memory_space<smem>>
    %213 = vector.extract_strided_slice %1 {offsets = [1, 0], sizes = [16, 16], strides = [1, 1]} : vector<18x18xf32> to vector<16x16xf32>
    %214 = vector.broadcast %212 : f32 to vector<16x16xf32>
    %215 = arith.mulf %214, %213 : vector<16x16xf32>
    %216 = arith.addf %211, %215 : vector<16x16xf32>
    %c40 = arith.constant 40 : index
    %217 = memref.load %arg1[%c40] : memref<108xf32, #tpu.memory_space<smem>>
    %218 = vector.extract_strided_slice %1 {offsets = [1, 1], sizes = [16, 16], strides = [1, 1]} : vector<18x18xf32> to vector<16x16xf32>
    %219 = vector.broadcast %217 : f32 to vector<16x16xf32>
    %220 = arith.mulf %219, %218 : vector<16x16xf32>
    %221 = arith.addf %216, %220 : vector<16x16xf32>
    %c41 = arith.constant 41 : index
    %222 = memref.load %arg1[%c41] : memref<108xf32, #tpu.memory_space<smem>>
    %223 = vector.extract_strided_slice %1 {offsets = [1, 2], sizes = [16, 16], strides = [1, 1]} : vector<18x18xf32> to vector<16x16xf32>
    %224 = vector.broadcast %222 : f32 to vector<16x16xf32>
    %225 = arith.mulf %224, %223 : vector<16x16xf32>
    %226 = arith.addf %221, %225 : vector<16x16xf32>
    %c42 = arith.constant 42 : index
    %227 = memref.load %arg1[%c42] : memref<108xf32, #tpu.memory_space<smem>>
    %228 = vector.extract_strided_slice %1 {offsets = [2, 0], sizes = [16, 16], strides = [1, 1]} : vector<18x18xf32> to vector<16x16xf32>
    %229 = vector.broadcast %227 : f32 to vector<16x16xf32>
    %230 = arith.mulf %229, %228 : vector<16x16xf32>
    %231 = arith.addf %226, %230 : vector<16x16xf32>
    %c43 = arith.constant 43 : index
    %232 = memref.load %arg1[%c43] : memref<108xf32, #tpu.memory_space<smem>>
    %233 = vector.extract_strided_slice %1 {offsets = [2, 1], sizes = [16, 16], strides = [1, 1]} : vector<18x18xf32> to vector<16x16xf32>
    %234 = vector.broadcast %232 : f32 to vector<16x16xf32>
    %235 = arith.mulf %234, %233 : vector<16x16xf32>
    %236 = arith.addf %231, %235 : vector<16x16xf32>
    %c44 = arith.constant 44 : index
    %237 = memref.load %arg1[%c44] : memref<108xf32, #tpu.memory_space<smem>>
    %238 = vector.extract_strided_slice %1 {offsets = [2, 2], sizes = [16, 16], strides = [1, 1]} : vector<18x18xf32> to vector<16x16xf32>
    %239 = vector.broadcast %237 : f32 to vector<16x16xf32>
    %240 = arith.mulf %239, %238 : vector<16x16xf32>
    %241 = arith.addf %236, %240 : vector<16x16xf32>
    %c45 = arith.constant 45 : index
    %242 = memref.load %arg1[%c45] : memref<108xf32, #tpu.memory_space<smem>>
    %243 = vector.extract_strided_slice %3 {offsets = [0, 0], sizes = [16, 16], strides = [1, 1]} : vector<18x18xf32> to vector<16x16xf32>
    %244 = vector.broadcast %242 : f32 to vector<16x16xf32>
    %245 = arith.mulf %244, %243 : vector<16x16xf32>
    %246 = arith.addf %241, %245 : vector<16x16xf32>
    %c46 = arith.constant 46 : index
    %247 = memref.load %arg1[%c46] : memref<108xf32, #tpu.memory_space<smem>>
    %248 = vector.extract_strided_slice %3 {offsets = [0, 1], sizes = [16, 16], strides = [1, 1]} : vector<18x18xf32> to vector<16x16xf32>
    %249 = vector.broadcast %247 : f32 to vector<16x16xf32>
    %250 = arith.mulf %249, %248 : vector<16x16xf32>
    %251 = arith.addf %246, %250 : vector<16x16xf32>
    %c47 = arith.constant 47 : index
    %252 = memref.load %arg1[%c47] : memref<108xf32, #tpu.memory_space<smem>>
    %253 = vector.extract_strided_slice %3 {offsets = [0, 2], sizes = [16, 16], strides = [1, 1]} : vector<18x18xf32> to vector<16x16xf32>
    %254 = vector.broadcast %252 : f32 to vector<16x16xf32>
    %255 = arith.mulf %254, %253 : vector<16x16xf32>
    %256 = arith.addf %251, %255 : vector<16x16xf32>
    %c48 = arith.constant 48 : index
    %257 = memref.load %arg1[%c48] : memref<108xf32, #tpu.memory_space<smem>>
    %258 = vector.extract_strided_slice %3 {offsets = [1, 0], sizes = [16, 16], strides = [1, 1]} : vector<18x18xf32> to vector<16x16xf32>
    %259 = vector.broadcast %257 : f32 to vector<16x16xf32>
    %260 = arith.mulf %259, %258 : vector<16x16xf32>
    %261 = arith.addf %256, %260 : vector<16x16xf32>
    %c49 = arith.constant 49 : index
    %262 = memref.load %arg1[%c49] : memref<108xf32, #tpu.memory_space<smem>>
    %263 = vector.extract_strided_slice %3 {offsets = [1, 1], sizes = [16, 16], strides = [1, 1]} : vector<18x18xf32> to vector<16x16xf32>
    %264 = vector.broadcast %262 : f32 to vector<16x16xf32>
    %265 = arith.mulf %264, %263 : vector<16x16xf32>
    %266 = arith.addf %261, %265 : vector<16x16xf32>
    %c50 = arith.constant 50 : index
    %267 = memref.load %arg1[%c50] : memref<108xf32, #tpu.memory_space<smem>>
    %268 = vector.extract_strided_slice %3 {offsets = [1, 2], sizes = [16, 16], strides = [1, 1]} : vector<18x18xf32> to vector<16x16xf32>
    %269 = vector.broadcast %267 : f32 to vector<16x16xf32>
    %270 = arith.mulf %269, %268 : vector<16x16xf32>
    %271 = arith.addf %266, %270 : vector<16x16xf32>
    %c51 = arith.constant 51 : index
    %272 = memref.load %arg1[%c51] : memref<108xf32, #tpu.memory_space<smem>>
    %273 = vector.extract_strided_slice %3 {offsets = [2, 0], sizes = [16, 16], strides = [1, 1]} : vector<18x18xf32> to vector<16x16xf32>
    %274 = vector.broadcast %272 : f32 to vector<16x16xf32>
    %275 = arith.mulf %274, %273 : vector<16x16xf32>
    %276 = arith.addf %271, %275 : vector<16x16xf32>
    %c52 = arith.constant 52 : index
    %277 = memref.load %arg1[%c52] : memref<108xf32, #tpu.memory_space<smem>>
    %278 = vector.extract_strided_slice %3 {offsets = [2, 1], sizes = [16, 16], strides = [1, 1]} : vector<18x18xf32> to vector<16x16xf32>
    %279 = vector.broadcast %277 : f32 to vector<16x16xf32>
    %280 = arith.mulf %279, %278 : vector<16x16xf32>
    %281 = arith.addf %276, %280 : vector<16x16xf32>
    %c53 = arith.constant 53 : index
    %282 = memref.load %arg1[%c53] : memref<108xf32, #tpu.memory_space<smem>>
    %283 = vector.extract_strided_slice %3 {offsets = [2, 2], sizes = [16, 16], strides = [1, 1]} : vector<18x18xf32> to vector<16x16xf32>
    %284 = vector.broadcast %282 : f32 to vector<16x16xf32>
    %285 = arith.mulf %284, %283 : vector<16x16xf32>
    %286 = arith.addf %281, %285 : vector<16x16xf32>
    %c54 = arith.constant 54 : index
    %287 = memref.load %arg1[%c54] : memref<108xf32, #tpu.memory_space<smem>>
    %288 = vector.extract_strided_slice %5 {offsets = [0, 0], sizes = [16, 16], strides = [1, 1]} : vector<18x18xf32> to vector<16x16xf32>
    %289 = vector.broadcast %287 : f32 to vector<16x16xf32>
    %290 = arith.mulf %289, %288 : vector<16x16xf32>
    %291 = arith.addf %286, %290 : vector<16x16xf32>
    %c55 = arith.constant 55 : index
    %292 = memref.load %arg1[%c55] : memref<108xf32, #tpu.memory_space<smem>>
    %293 = vector.extract_strided_slice %5 {offsets = [0, 1], sizes = [16, 16], strides = [1, 1]} : vector<18x18xf32> to vector<16x16xf32>
    %294 = vector.broadcast %292 : f32 to vector<16x16xf32>
    %295 = arith.mulf %294, %293 : vector<16x16xf32>
    %296 = arith.addf %291, %295 : vector<16x16xf32>
    %c56 = arith.constant 56 : index
    %297 = memref.load %arg1[%c56] : memref<108xf32, #tpu.memory_space<smem>>
    %298 = vector.extract_strided_slice %5 {offsets = [0, 2], sizes = [16, 16], strides = [1, 1]} : vector<18x18xf32> to vector<16x16xf32>
    %299 = vector.broadcast %297 : f32 to vector<16x16xf32>
    %300 = arith.mulf %299, %298 : vector<16x16xf32>
    %301 = arith.addf %296, %300 : vector<16x16xf32>
    %c57 = arith.constant 57 : index
    %302 = memref.load %arg1[%c57] : memref<108xf32, #tpu.memory_space<smem>>
    %303 = vector.extract_strided_slice %5 {offsets = [1, 0], sizes = [16, 16], strides = [1, 1]} : vector<18x18xf32> to vector<16x16xf32>
    %304 = vector.broadcast %302 : f32 to vector<16x16xf32>
    %305 = arith.mulf %304, %303 : vector<16x16xf32>
    %306 = arith.addf %301, %305 : vector<16x16xf32>
    %c58 = arith.constant 58 : index
    %307 = memref.load %arg1[%c58] : memref<108xf32, #tpu.memory_space<smem>>
    %308 = vector.extract_strided_slice %5 {offsets = [1, 1], sizes = [16, 16], strides = [1, 1]} : vector<18x18xf32> to vector<16x16xf32>
    %309 = vector.broadcast %307 : f32 to vector<16x16xf32>
    %310 = arith.mulf %309, %308 : vector<16x16xf32>
    %311 = arith.addf %306, %310 : vector<16x16xf32>
    %c59 = arith.constant 59 : index
    %312 = memref.load %arg1[%c59] : memref<108xf32, #tpu.memory_space<smem>>
    %313 = vector.extract_strided_slice %5 {offsets = [1, 2], sizes = [16, 16], strides = [1, 1]} : vector<18x18xf32> to vector<16x16xf32>
    %314 = vector.broadcast %312 : f32 to vector<16x16xf32>
    %315 = arith.mulf %314, %313 : vector<16x16xf32>
    %316 = arith.addf %311, %315 : vector<16x16xf32>
    %c60 = arith.constant 60 : index
    %317 = memref.load %arg1[%c60] : memref<108xf32, #tpu.memory_space<smem>>
    %318 = vector.extract_strided_slice %5 {offsets = [2, 0], sizes = [16, 16], strides = [1, 1]} : vector<18x18xf32> to vector<16x16xf32>
    %319 = vector.broadcast %317 : f32 to vector<16x16xf32>
    %320 = arith.mulf %319, %318 : vector<16x16xf32>
    %321 = arith.addf %316, %320 : vector<16x16xf32>
    %c61 = arith.constant 61 : index
    %322 = memref.load %arg1[%c61] : memref<108xf32, #tpu.memory_space<smem>>
    %323 = vector.extract_strided_slice %5 {offsets = [2, 1], sizes = [16, 16], strides = [1, 1]} : vector<18x18xf32> to vector<16x16xf32>
    %324 = vector.broadcast %322 : f32 to vector<16x16xf32>
    %325 = arith.mulf %324, %323 : vector<16x16xf32>
    %326 = arith.addf %321, %325 : vector<16x16xf32>
    %c62 = arith.constant 62 : index
    %327 = memref.load %arg1[%c62] : memref<108xf32, #tpu.memory_space<smem>>
    %328 = vector.extract_strided_slice %5 {offsets = [2, 2], sizes = [16, 16], strides = [1, 1]} : vector<18x18xf32> to vector<16x16xf32>
    %329 = vector.broadcast %327 : f32 to vector<16x16xf32>
    %330 = arith.mulf %329, %328 : vector<16x16xf32>
    %331 = arith.addf %326, %330 : vector<16x16xf32>
    %c63 = arith.constant 63 : index
    %332 = memref.load %arg1[%c63] : memref<108xf32, #tpu.memory_space<smem>>
    %333 = vector.extract_strided_slice %7 {offsets = [0, 0], sizes = [16, 16], strides = [1, 1]} : vector<18x18xf32> to vector<16x16xf32>
    %334 = vector.broadcast %332 : f32 to vector<16x16xf32>
    %335 = arith.mulf %334, %333 : vector<16x16xf32>
    %336 = arith.addf %331, %335 : vector<16x16xf32>
    %c64 = arith.constant 64 : index
    %337 = memref.load %arg1[%c64] : memref<108xf32, #tpu.memory_space<smem>>
    %338 = vector.extract_strided_slice %7 {offsets = [0, 1], sizes = [16, 16], strides = [1, 1]} : vector<18x18xf32> to vector<16x16xf32>
    %339 = vector.broadcast %337 : f32 to vector<16x16xf32>
    %340 = arith.mulf %339, %338 : vector<16x16xf32>
    %341 = arith.addf %336, %340 : vector<16x16xf32>
    %c65 = arith.constant 65 : index
    %342 = memref.load %arg1[%c65] : memref<108xf32, #tpu.memory_space<smem>>
    %343 = vector.extract_strided_slice %7 {offsets = [0, 2], sizes = [16, 16], strides = [1, 1]} : vector<18x18xf32> to vector<16x16xf32>
    %344 = vector.broadcast %342 : f32 to vector<16x16xf32>
    %345 = arith.mulf %344, %343 : vector<16x16xf32>
    %346 = arith.addf %341, %345 : vector<16x16xf32>
    %c66 = arith.constant 66 : index
    %347 = memref.load %arg1[%c66] : memref<108xf32, #tpu.memory_space<smem>>
    %348 = vector.extract_strided_slice %7 {offsets = [1, 0], sizes = [16, 16], strides = [1, 1]} : vector<18x18xf32> to vector<16x16xf32>
    %349 = vector.broadcast %347 : f32 to vector<16x16xf32>
    %350 = arith.mulf %349, %348 : vector<16x16xf32>
    %351 = arith.addf %346, %350 : vector<16x16xf32>
    %c67 = arith.constant 67 : index
    %352 = memref.load %arg1[%c67] : memref<108xf32, #tpu.memory_space<smem>>
    %353 = vector.extract_strided_slice %7 {offsets = [1, 1], sizes = [16, 16], strides = [1, 1]} : vector<18x18xf32> to vector<16x16xf32>
    %354 = vector.broadcast %352 : f32 to vector<16x16xf32>
    %355 = arith.mulf %354, %353 : vector<16x16xf32>
    %356 = arith.addf %351, %355 : vector<16x16xf32>
    %c68 = arith.constant 68 : index
    %357 = memref.load %arg1[%c68] : memref<108xf32, #tpu.memory_space<smem>>
    %358 = vector.extract_strided_slice %7 {offsets = [1, 2], sizes = [16, 16], strides = [1, 1]} : vector<18x18xf32> to vector<16x16xf32>
    %359 = vector.broadcast %357 : f32 to vector<16x16xf32>
    %360 = arith.mulf %359, %358 : vector<16x16xf32>
    %361 = arith.addf %356, %360 : vector<16x16xf32>
    %c69 = arith.constant 69 : index
    %362 = memref.load %arg1[%c69] : memref<108xf32, #tpu.memory_space<smem>>
    %363 = vector.extract_strided_slice %7 {offsets = [2, 0], sizes = [16, 16], strides = [1, 1]} : vector<18x18xf32> to vector<16x16xf32>
    %364 = vector.broadcast %362 : f32 to vector<16x16xf32>
    %365 = arith.mulf %364, %363 : vector<16x16xf32>
    %366 = arith.addf %361, %365 : vector<16x16xf32>
    %c70 = arith.constant 70 : index
    %367 = memref.load %arg1[%c70] : memref<108xf32, #tpu.memory_space<smem>>
    %368 = vector.extract_strided_slice %7 {offsets = [2, 1], sizes = [16, 16], strides = [1, 1]} : vector<18x18xf32> to vector<16x16xf32>
    %369 = vector.broadcast %367 : f32 to vector<16x16xf32>
    %370 = arith.mulf %369, %368 : vector<16x16xf32>
    %371 = arith.addf %366, %370 : vector<16x16xf32>
    %c71 = arith.constant 71 : index
    %372 = memref.load %arg1[%c71] : memref<108xf32, #tpu.memory_space<smem>>
    %373 = vector.extract_strided_slice %7 {offsets = [2, 2], sizes = [16, 16], strides = [1, 1]} : vector<18x18xf32> to vector<16x16xf32>
    %374 = vector.broadcast %372 : f32 to vector<16x16xf32>
    %375 = arith.mulf %374, %373 : vector<16x16xf32>
    %376 = arith.addf %371, %375 : vector<16x16xf32>
    %cst_22 = arith.constant 0.000000e+00 : f32
    %377 = vector.broadcast %cst_22 : f32 to vector<16x16xf32>
    %378 = arith.maximumf %376, %377 : vector<16x16xf32>
    %c0_23 = arith.constant 0 : index
    %c1_24 = arith.constant 1 : index
    %c0_25 = arith.constant 0 : index
    %c0_26 = arith.constant 0 : index
    %379 = vector.load %arg4[%c0_23, %c1_24, %c0_25, %c0_26] : memref<1x3x16x16xf32, #tpu.memory_space<vmem>>, vector<1x1x16x16xf32>
    %380 = vector.shape_cast %379 : vector<1x1x16x16xf32> to vector<16x16xf32>
    %381 = vector.shape_cast %378 : vector<16x16xf32> to vector<1x1x16x16xf32>
    tpu.vector_store %arg4[%c0_23, %c1_24, %c0_25, %c0_26], %381 {strides = array<i32>} : memref<1x3x16x16xf32, #tpu.memory_space<vmem>>, vector<1x1x16x16xf32>,
    %c2_27 = arith.constant 2 : index
    %382 = memref.load %arg2[%c2_27] : memref<3xf32, #tpu.memory_space<smem>>
    %383 = vector.broadcast %382 : f32 to vector<16x16xf32>
    %c72 = arith.constant 72 : index
    %384 = memref.load %arg1[%c72] : memref<108xf32, #tpu.memory_space<smem>>
    %385 = vector.extract_strided_slice %1 {offsets = [0, 0], sizes = [16, 16], strides = [1, 1]} : vector<18x18xf32> to vector<16x16xf32>
    %386 = vector.broadcast %384 : f32 to vector<16x16xf32>
    %387 = arith.mulf %386, %385 : vector<16x16xf32>
    %388 = arith.addf %383, %387 : vector<16x16xf32>
    %c73 = arith.constant 73 : index
    %389 = memref.load %arg1[%c73] : memref<108xf32, #tpu.memory_space<smem>>
    %390 = vector.extract_strided_slice %1 {offsets = [0, 1], sizes = [16, 16], strides = [1, 1]} : vector<18x18xf32> to vector<16x16xf32>
    %391 = vector.broadcast %389 : f32 to vector<16x16xf32>
    %392 = arith.mulf %391, %390 : vector<16x16xf32>
    %393 = arith.addf %388, %392 : vector<16x16xf32>
    %c74 = arith.constant 74 : index
    %394 = memref.load %arg1[%c74] : memref<108xf32, #tpu.memory_space<smem>>
    %395 = vector.extract_strided_slice %1 {offsets = [0, 2], sizes = [16, 16], strides = [1, 1]} : vector<18x18xf32> to vector<16x16xf32>
    %396 = vector.broadcast %394 : f32 to vector<16x16xf32>
    %397 = arith.mulf %396, %395 : vector<16x16xf32>
    %398 = arith.addf %393, %397 : vector<16x16xf32>
    %c75 = arith.constant 75 : index
    %399 = memref.load %arg1[%c75] : memref<108xf32, #tpu.memory_space<smem>>
    %400 = vector.extract_strided_slice %1 {offsets = [1, 0], sizes = [16, 16], strides = [1, 1]} : vector<18x18xf32> to vector<16x16xf32>
    %401 = vector.broadcast %399 : f32 to vector<16x16xf32>
    %402 = arith.mulf %401, %400 : vector<16x16xf32>
    %403 = arith.addf %398, %402 : vector<16x16xf32>
    %c76 = arith.constant 76 : index
    %404 = memref.load %arg1[%c76] : memref<108xf32, #tpu.memory_space<smem>>
    %405 = vector.extract_strided_slice %1 {offsets = [1, 1], sizes = [16, 16], strides = [1, 1]} : vector<18x18xf32> to vector<16x16xf32>
    %406 = vector.broadcast %404 : f32 to vector<16x16xf32>
    %407 = arith.mulf %406, %405 : vector<16x16xf32>
    %408 = arith.addf %403, %407 : vector<16x16xf32>
    %c77 = arith.constant 77 : index
    %409 = memref.load %arg1[%c77] : memref<108xf32, #tpu.memory_space<smem>>
    %410 = vector.extract_strided_slice %1 {offsets = [1, 2], sizes = [16, 16], strides = [1, 1]} : vector<18x18xf32> to vector<16x16xf32>
    %411 = vector.broadcast %409 : f32 to vector<16x16xf32>
    %412 = arith.mulf %411, %410 : vector<16x16xf32>
    %413 = arith.addf %408, %412 : vector<16x16xf32>
    %c78 = arith.constant 78 : index
    %414 = memref.load %arg1[%c78] : memref<108xf32, #tpu.memory_space<smem>>
    %415 = vector.extract_strided_slice %1 {offsets = [2, 0], sizes = [16, 16], strides = [1, 1]} : vector<18x18xf32> to vector<16x16xf32>
    %416 = vector.broadcast %414 : f32 to vector<16x16xf32>
    %417 = arith.mulf %416, %415 : vector<16x16xf32>
    %418 = arith.addf %413, %417 : vector<16x16xf32>
    %c79 = arith.constant 79 : index
    %419 = memref.load %arg1[%c79] : memref<108xf32, #tpu.memory_space<smem>>
    %420 = vector.extract_strided_slice %1 {offsets = [2, 1], sizes = [16, 16], strides = [1, 1]} : vector<18x18xf32> to vector<16x16xf32>
    %421 = vector.broadcast %419 : f32 to vector<16x16xf32>
    %422 = arith.mulf %421, %420 : vector<16x16xf32>
    %423 = arith.addf %418, %422 : vector<16x16xf32>
    %c80 = arith.constant 80 : index
    %424 = memref.load %arg1[%c80] : memref<108xf32, #tpu.memory_space<smem>>
    %425 = vector.extract_strided_slice %1 {offsets = [2, 2], sizes = [16, 16], strides = [1, 1]} : vector<18x18xf32> to vector<16x16xf32>
    %426 = vector.broadcast %424 : f32 to vector<16x16xf32>
    %427 = arith.mulf %426, %425 : vector<16x16xf32>
    %428 = arith.addf %423, %427 : vector<16x16xf32>
    %c81 = arith.constant 81 : index
    %429 = memref.load %arg1[%c81] : memref<108xf32, #tpu.memory_space<smem>>
    %430 = vector.extract_strided_slice %3 {offsets = [0, 0], sizes = [16, 16], strides = [1, 1]} : vector<18x18xf32> to vector<16x16xf32>
    %431 = vector.broadcast %429 : f32 to vector<16x16xf32>
    %432 = arith.mulf %431, %430 : vector<16x16xf32>
    %433 = arith.addf %428, %432 : vector<16x16xf32>
    %c82 = arith.constant 82 : index
    %434 = memref.load %arg1[%c82] : memref<108xf32, #tpu.memory_space<smem>>
    %435 = vector.extract_strided_slice %3 {offsets = [0, 1], sizes = [16, 16], strides = [1, 1]} : vector<18x18xf32> to vector<16x16xf32>
    %436 = vector.broadcast %434 : f32 to vector<16x16xf32>
    %437 = arith.mulf %436, %435 : vector<16x16xf32>
    %438 = arith.addf %433, %437 : vector<16x16xf32>
    %c83 = arith.constant 83 : index
    %439 = memref.load %arg1[%c83] : memref<108xf32, #tpu.memory_space<smem>>
    %440 = vector.extract_strided_slice %3 {offsets = [0, 2], sizes = [16, 16], strides = [1, 1]} : vector<18x18xf32> to vector<16x16xf32>
    %441 = vector.broadcast %439 : f32 to vector<16x16xf32>
    %442 = arith.mulf %441, %440 : vector<16x16xf32>
    %443 = arith.addf %438, %442 : vector<16x16xf32>
    %c84 = arith.constant 84 : index
    %444 = memref.load %arg1[%c84] : memref<108xf32, #tpu.memory_space<smem>>
    %445 = vector.extract_strided_slice %3 {offsets = [1, 0], sizes = [16, 16], strides = [1, 1]} : vector<18x18xf32> to vector<16x16xf32>
    %446 = vector.broadcast %444 : f32 to vector<16x16xf32>
    %447 = arith.mulf %446, %445 : vector<16x16xf32>
    %448 = arith.addf %443, %447 : vector<16x16xf32>
    %c85 = arith.constant 85 : index
    %449 = memref.load %arg1[%c85] : memref<108xf32, #tpu.memory_space<smem>>
    %450 = vector.extract_strided_slice %3 {offsets = [1, 1], sizes = [16, 16], strides = [1, 1]} : vector<18x18xf32> to vector<16x16xf32>
    %451 = vector.broadcast %449 : f32 to vector<16x16xf32>
    %452 = arith.mulf %451, %450 : vector<16x16xf32>
    %453 = arith.addf %448, %452 : vector<16x16xf32>
    %c86 = arith.constant 86 : index
    %454 = memref.load %arg1[%c86] : memref<108xf32, #tpu.memory_space<smem>>
    %455 = vector.extract_strided_slice %3 {offsets = [1, 2], sizes = [16, 16], strides = [1, 1]} : vector<18x18xf32> to vector<16x16xf32>
    %456 = vector.broadcast %454 : f32 to vector<16x16xf32>
    %457 = arith.mulf %456, %455 : vector<16x16xf32>
    %458 = arith.addf %453, %457 : vector<16x16xf32>
    %c87 = arith.constant 87 : index
    %459 = memref.load %arg1[%c87] : memref<108xf32, #tpu.memory_space<smem>>
    %460 = vector.extract_strided_slice %3 {offsets = [2, 0], sizes = [16, 16], strides = [1, 1]} : vector<18x18xf32> to vector<16x16xf32>
    %461 = vector.broadcast %459 : f32 to vector<16x16xf32>
    %462 = arith.mulf %461, %460 : vector<16x16xf32>
    %463 = arith.addf %458, %462 : vector<16x16xf32>
    %c88 = arith.constant 88 : index
    %464 = memref.load %arg1[%c88] : memref<108xf32, #tpu.memory_space<smem>>
    %465 = vector.extract_strided_slice %3 {offsets = [2, 1], sizes = [16, 16], strides = [1, 1]} : vector<18x18xf32> to vector<16x16xf32>
    %466 = vector.broadcast %464 : f32 to vector<16x16xf32>
    %467 = arith.mulf %466, %465 : vector<16x16xf32>
    %468 = arith.addf %463, %467 : vector<16x16xf32>
    %c89 = arith.constant 89 : index
    %469 = memref.load %arg1[%c89] : memref<108xf32, #tpu.memory_space<smem>>
    %470 = vector.extract_strided_slice %3 {offsets = [2, 2], sizes = [16, 16], strides = [1, 1]} : vector<18x18xf32> to vector<16x16xf32>
    %471 = vector.broadcast %469 : f32 to vector<16x16xf32>
    %472 = arith.mulf %471, %470 : vector<16x16xf32>
    %473 = arith.addf %468, %472 : vector<16x16xf32>
    %c90 = arith.constant 90 : index
    %474 = memref.load %arg1[%c90] : memref<108xf32, #tpu.memory_space<smem>>
    %475 = vector.extract_strided_slice %5 {offsets = [0, 0], sizes = [16, 16], strides = [1, 1]} : vector<18x18xf32> to vector<16x16xf32>
    %476 = vector.broadcast %474 : f32 to vector<16x16xf32>
    %477 = arith.mulf %476, %475 : vector<16x16xf32>
    %478 = arith.addf %473, %477 : vector<16x16xf32>
    %c91 = arith.constant 91 : index
    %479 = memref.load %arg1[%c91] : memref<108xf32, #tpu.memory_space<smem>>
    %480 = vector.extract_strided_slice %5 {offsets = [0, 1], sizes = [16, 16], strides = [1, 1]} : vector<18x18xf32> to vector<16x16xf32>
    %481 = vector.broadcast %479 : f32 to vector<16x16xf32>
    %482 = arith.mulf %481, %480 : vector<16x16xf32>
    %483 = arith.addf %478, %482 : vector<16x16xf32>
    %c92 = arith.constant 92 : index
    %484 = memref.load %arg1[%c92] : memref<108xf32, #tpu.memory_space<smem>>
    %485 = vector.extract_strided_slice %5 {offsets = [0, 2], sizes = [16, 16], strides = [1, 1]} : vector<18x18xf32> to vector<16x16xf32>
    %486 = vector.broadcast %484 : f32 to vector<16x16xf32>
    %487 = arith.mulf %486, %485 : vector<16x16xf32>
    %488 = arith.addf %483, %487 : vector<16x16xf32>
    %c93 = arith.constant 93 : index
    %489 = memref.load %arg1[%c93] : memref<108xf32, #tpu.memory_space<smem>>
    %490 = vector.extract_strided_slice %5 {offsets = [1, 0], sizes = [16, 16], strides = [1, 1]} : vector<18x18xf32> to vector<16x16xf32>
    %491 = vector.broadcast %489 : f32 to vector<16x16xf32>
    %492 = arith.mulf %491, %490 : vector<16x16xf32>
    %493 = arith.addf %488, %492 : vector<16x16xf32>
    %c94 = arith.constant 94 : index
    %494 = memref.load %arg1[%c94] : memref<108xf32, #tpu.memory_space<smem>>
    %495 = vector.extract_strided_slice %5 {offsets = [1, 1], sizes = [16, 16], strides = [1, 1]} : vector<18x18xf32> to vector<16x16xf32>
    %496 = vector.broadcast %494 : f32 to vector<16x16xf32>
    %497 = arith.mulf %496, %495 : vector<16x16xf32>
    %498 = arith.addf %493, %497 : vector<16x16xf32>
    %c95 = arith.constant 95 : index
    %499 = memref.load %arg1[%c95] : memref<108xf32, #tpu.memory_space<smem>>
    %500 = vector.extract_strided_slice %5 {offsets = [1, 2], sizes = [16, 16], strides = [1, 1]} : vector<18x18xf32> to vector<16x16xf32>
    %501 = vector.broadcast %499 : f32 to vector<16x16xf32>
    %502 = arith.mulf %501, %500 : vector<16x16xf32>
    %503 = arith.addf %498, %502 : vector<16x16xf32>
    %c96 = arith.constant 96 : index
    %504 = memref.load %arg1[%c96] : memref<108xf32, #tpu.memory_space<smem>>
    %505 = vector.extract_strided_slice %5 {offsets = [2, 0], sizes = [16, 16], strides = [1, 1]} : vector<18x18xf32> to vector<16x16xf32>
    %506 = vector.broadcast %504 : f32 to vector<16x16xf32>
    %507 = arith.mulf %506, %505 : vector<16x16xf32>
    %508 = arith.addf %503, %507 : vector<16x16xf32>
    %c97 = arith.constant 97 : index
    %509 = memref.load %arg1[%c97] : memref<108xf32, #tpu.memory_space<smem>>
    %510 = vector.extract_strided_slice %5 {offsets = [2, 1], sizes = [16, 16], strides = [1, 1]} : vector<18x18xf32> to vector<16x16xf32>
    %511 = vector.broadcast %509 : f32 to vector<16x16xf32>
    %512 = arith.mulf %511, %510 : vector<16x16xf32>
    %513 = arith.addf %508, %512 : vector<16x16xf32>
    %c98 = arith.constant 98 : index
    %514 = memref.load %arg1[%c98] : memref<108xf32, #tpu.memory_space<smem>>
    %515 = vector.extract_strided_slice %5 {offsets = [2, 2], sizes = [16, 16], strides = [1, 1]} : vector<18x18xf32> to vector<16x16xf32>
    %516 = vector.broadcast %514 : f32 to vector<16x16xf32>
    %517 = arith.mulf %516, %515 : vector<16x16xf32>
    %518 = arith.addf %513, %517 : vector<16x16xf32>
    %c99 = arith.constant 99 : index
    %519 = memref.load %arg1[%c99] : memref<108xf32, #tpu.memory_space<smem>>
    %520 = vector.extract_strided_slice %7 {offsets = [0, 0], sizes = [16, 16], strides = [1, 1]} : vector<18x18xf32> to vector<16x16xf32>
    %521 = vector.broadcast %519 : f32 to vector<16x16xf32>
    %522 = arith.mulf %521, %520 : vector<16x16xf32>
    %523 = arith.addf %518, %522 : vector<16x16xf32>
    %c100 = arith.constant 100 : index
    %524 = memref.load %arg1[%c100] : memref<108xf32, #tpu.memory_space<smem>>
    %525 = vector.extract_strided_slice %7 {offsets = [0, 1], sizes = [16, 16], strides = [1, 1]} : vector<18x18xf32> to vector<16x16xf32>
    %526 = vector.broadcast %524 : f32 to vector<16x16xf32>
    %527 = arith.mulf %526, %525 : vector<16x16xf32>
    %528 = arith.addf %523, %527 : vector<16x16xf32>
    %c101 = arith.constant 101 : index
    %529 = memref.load %arg1[%c101] : memref<108xf32, #tpu.memory_space<smem>>
    %530 = vector.extract_strided_slice %7 {offsets = [0, 2], sizes = [16, 16], strides = [1, 1]} : vector<18x18xf32> to vector<16x16xf32>
    %531 = vector.broadcast %529 : f32 to vector<16x16xf32>
    %532 = arith.mulf %531, %530 : vector<16x16xf32>
    %533 = arith.addf %528, %532 : vector<16x16xf32>
    %c102 = arith.constant 102 : index
    %534 = memref.load %arg1[%c102] : memref<108xf32, #tpu.memory_space<smem>>
    %535 = vector.extract_strided_slice %7 {offsets = [1, 0], sizes = [16, 16], strides = [1, 1]} : vector<18x18xf32> to vector<16x16xf32>
    %536 = vector.broadcast %534 : f32 to vector<16x16xf32>
    %537 = arith.mulf %536, %535 : vector<16x16xf32>
    %538 = arith.addf %533, %537 : vector<16x16xf32>
    %c103 = arith.constant 103 : index
    %539 = memref.load %arg1[%c103] : memref<108xf32, #tpu.memory_space<smem>>
    %540 = vector.extract_strided_slice %7 {offsets = [1, 1], sizes = [16, 16], strides = [1, 1]} : vector<18x18xf32> to vector<16x16xf32>
    %541 = vector.broadcast %539 : f32 to vector<16x16xf32>
    %542 = arith.mulf %541, %540 : vector<16x16xf32>
    %543 = arith.addf %538, %542 : vector<16x16xf32>
    %c104 = arith.constant 104 : index
    %544 = memref.load %arg1[%c104] : memref<108xf32, #tpu.memory_space<smem>>
    %545 = vector.extract_strided_slice %7 {offsets = [1, 2], sizes = [16, 16], strides = [1, 1]} : vector<18x18xf32> to vector<16x16xf32>
    %546 = vector.broadcast %544 : f32 to vector<16x16xf32>
    %547 = arith.mulf %546, %545 : vector<16x16xf32>
    %548 = arith.addf %543, %547 : vector<16x16xf32>
    %c105 = arith.constant 105 : index
    %549 = memref.load %arg1[%c105] : memref<108xf32, #tpu.memory_space<smem>>
    %550 = vector.extract_strided_slice %7 {offsets = [2, 0], sizes = [16, 16], strides = [1, 1]} : vector<18x18xf32> to vector<16x16xf32>
    %551 = vector.broadcast %549 : f32 to vector<16x16xf32>
    %552 = arith.mulf %551, %550 : vector<16x16xf32>
    %553 = arith.addf %548, %552 : vector<16x16xf32>
    %c106 = arith.constant 106 : index
    %554 = memref.load %arg1[%c106] : memref<108xf32, #tpu.memory_space<smem>>
    %555 = vector.extract_strided_slice %7 {offsets = [2, 1], sizes = [16, 16], strides = [1, 1]} : vector<18x18xf32> to vector<16x16xf32>
    %556 = vector.broadcast %554 : f32 to vector<16x16xf32>
    %557 = arith.mulf %556, %555 : vector<16x16xf32>
    %558 = arith.addf %553, %557 : vector<16x16xf32>
    %c107 = arith.constant 107 : index
    %559 = memref.load %arg1[%c107] : memref<108xf32, #tpu.memory_space<smem>>
    %560 = vector.extract_strided_slice %7 {offsets = [2, 2], sizes = [16, 16], strides = [1, 1]} : vector<18x18xf32> to vector<16x16xf32>
    %561 = vector.broadcast %559 : f32 to vector<16x16xf32>
    %562 = arith.mulf %561, %560 : vector<16x16xf32>
    %563 = arith.addf %558, %562 : vector<16x16xf32>
    %cst_28 = arith.constant 0.000000e+00 : f32
    %564 = vector.broadcast %cst_28 : f32 to vector<16x16xf32>
    %565 = arith.maximumf %563, %564 : vector<16x16xf32>
    %c0_29 = arith.constant 0 : index
    %c2_30 = arith.constant 2 : index
    %c0_31 = arith.constant 0 : index
    %c0_32 = arith.constant 0 : index
    %566 = vector.load %arg4[%c0_29, %c2_30, %c0_31, %c0_32] : memref<1x3x16x16xf32, #tpu.memory_space<vmem>>, vector<1x1x16x16xf32>
    %567 = vector.shape_cast %566 : vector<1x1x16x16xf32> to vector<16x16xf32>
    %568 = vector.shape_cast %565 : vector<16x16xf32> to vector<1x1x16x16xf32>
    tpu.vector_store %arg4[%c0_29, %c2_30, %c0_31, %c0_32], %568 {strides = array<i32>} : memref<1x3x16x16xf32, #tpu.memory_space<vmem>>, vector<1x1x16x16xf32>,
    return
  }
  func.func @transform_0(%arg0: i32) -> i32 {
    %c0_i32 = arith.constant 0 : i32
    %c0_i32_0 = arith.constant 0 : i32
    return %c0_i32 : i32
  }
  func.func @transform_1(%arg0: i32) -> i32 {
    %c0_i32 = arith.constant 0 : i32
    %c0_i32_0 = arith.constant 0 : i32
    return %c0_i32 : i32
  }
  func.func @transform_2(%arg0: i32) -> (i32, i32, i32, i32) {
    %c0_i32 = arith.constant 0 : i32
    %c0_i32_0 = arith.constant 0 : i32
    %c0_i32_1 = arith.constant 0 : i32
    %c0_i32_2 = arith.constant 0 : i32
    return %arg0, %c0_i32, %c0_i32_0, %c0_i32_1 : i32, i32, i32, i32
  }
  func.func @transform_3(%arg0: i32) -> (i32, i32, i32, i32) {
    %c0_i32 = arith.constant 0 : i32
    %c0_i32_0 = arith.constant 0 : i32
    %c0_i32_1 = arith.constant 0 : i32
    %c0_i32_2 = arith.constant 0 : i32
    return %arg0, %c0_i32, %c0_i32_0, %c0_i32_1 : i32, i32, i32, i32
  }
}

module attributes {stable_mosaic.version = 11 : i64} {
  func.func @_conv3x3_bias_relu_kernel(%arg0: i32, %arg1: memref<81xf32, #tpu.memory_space<smem>>, %arg2: memref<3xf32, #tpu.memory_space<smem>>, %arg3: memref<1x3x18x18xf32, #tpu.memory_space<vmem>>, %arg4: memref<1x3x16x16xf32, #tpu.memory_space<vmem>>) attributes {dimension_semantics = [#tpu.dimension_semantics<parallel>], iteration_bounds = array<i64: 2>, scalar_prefetch = 0 : i64, scratch_operands = 0 : i64, tpu.core_type = #tpu.core_type<tc>, window_params = [{transform_indices = @transform_0, window_bounds = array<i64: 81>}, {transform_indices = @transform_1, window_bounds = array<i64: 3>}, {transform_indices = @transform_2, window_bounds = array<i64: 1, 3, 18, 18>}, {transform_indices = @transform_3, window_bounds = array<i64: 1, 3, 16, 16>}]} {
    %c0 = arith.constant 0 : index
    %c0_0 = arith.constant 0 : index
    %c0_1 = arith.constant 0 : index
    %c0_2 = arith.constant 0 : index
    %0 = vector.load %arg3[%c0, %c0_0, %c0_1, %c0_2] : memref<1x3x18x18xf32, #tpu.memory_space<vmem>>, vector<1x1x18x18xf32>
    %1 = vector.shape_cast %0 : vector<1x1x18x18xf32> to vector<18x18xf32>
    %c0_3 = arith.constant 0 : index
    %c1 = arith.constant 1 : index
    %c0_4 = arith.constant 0 : index
    %c0_5 = arith.constant 0 : index
    %2 = vector.load %arg3[%c0_3, %c1, %c0_4, %c0_5] : memref<1x3x18x18xf32, #tpu.memory_space<vmem>>, vector<1x1x18x18xf32>
    %3 = vector.shape_cast %2 : vector<1x1x18x18xf32> to vector<18x18xf32>
    %c0_6 = arith.constant 0 : index
    %c2 = arith.constant 2 : index
    %c0_7 = arith.constant 0 : index
    %c0_8 = arith.constant 0 : index
    %4 = vector.load %arg3[%c0_6, %c2, %c0_7, %c0_8] : memref<1x3x18x18xf32, #tpu.memory_space<vmem>>, vector<1x1x18x18xf32>
    %5 = vector.shape_cast %4 : vector<1x1x18x18xf32> to vector<18x18xf32>
    %c0_9 = arith.constant 0 : index
    %6 = memref.load %arg2[%c0_9] : memref<3xf32, #tpu.memory_space<smem>>
    %7 = vector.broadcast %6 : f32 to vector<16x16xf32>
    %c0_10 = arith.constant 0 : index
    %8 = memref.load %arg1[%c0_10] : memref<81xf32, #tpu.memory_space<smem>>
    %9 = vector.extract_strided_slice %1 {offsets = [0, 0], sizes = [16, 16], strides = [1, 1]} : vector<18x18xf32> to vector<16x16xf32>
    %10 = vector.broadcast %8 : f32 to vector<16x16xf32>
    %11 = arith.mulf %10, %9 : vector<16x16xf32>
    %12 = arith.addf %7, %11 : vector<16x16xf32>
    %c1_11 = arith.constant 1 : index
    %13 = memref.load %arg1[%c1_11] : memref<81xf32, #tpu.memory_space<smem>>
    %14 = vector.extract_strided_slice %1 {offsets = [0, 1], sizes = [16, 16], strides = [1, 1]} : vector<18x18xf32> to vector<16x16xf32>
    %15 = vector.broadcast %13 : f32 to vector<16x16xf32>
    %16 = arith.mulf %15, %14 : vector<16x16xf32>
    %17 = arith.addf %12, %16 : vector<16x16xf32>
    %c2_12 = arith.constant 2 : index
    %18 = memref.load %arg1[%c2_12] : memref<81xf32, #tpu.memory_space<smem>>
    %19 = vector.extract_strided_slice %1 {offsets = [0, 2], sizes = [16, 16], strides = [1, 1]} : vector<18x18xf32> to vector<16x16xf32>
    %20 = vector.broadcast %18 : f32 to vector<16x16xf32>
    %21 = arith.mulf %20, %19 : vector<16x16xf32>
    %22 = arith.addf %17, %21 : vector<16x16xf32>
    %c3 = arith.constant 3 : index
    %23 = memref.load %arg1[%c3] : memref<81xf32, #tpu.memory_space<smem>>
    %24 = vector.extract_strided_slice %1 {offsets = [1, 0], sizes = [16, 16], strides = [1, 1]} : vector<18x18xf32> to vector<16x16xf32>
    %25 = vector.broadcast %23 : f32 to vector<16x16xf32>
    %26 = arith.mulf %25, %24 : vector<16x16xf32>
    %27 = arith.addf %22, %26 : vector<16x16xf32>
    %c4 = arith.constant 4 : index
    %28 = memref.load %arg1[%c4] : memref<81xf32, #tpu.memory_space<smem>>
    %29 = vector.extract_strided_slice %1 {offsets = [1, 1], sizes = [16, 16], strides = [1, 1]} : vector<18x18xf32> to vector<16x16xf32>
    %30 = vector.broadcast %28 : f32 to vector<16x16xf32>
    %31 = arith.mulf %30, %29 : vector<16x16xf32>
    %32 = arith.addf %27, %31 : vector<16x16xf32>
    %c5 = arith.constant 5 : index
    %33 = memref.load %arg1[%c5] : memref<81xf32, #tpu.memory_space<smem>>
    %34 = vector.extract_strided_slice %1 {offsets = [1, 2], sizes = [16, 16], strides = [1, 1]} : vector<18x18xf32> to vector<16x16xf32>
    %35 = vector.broadcast %33 : f32 to vector<16x16xf32>
    %36 = arith.mulf %35, %34 : vector<16x16xf32>
    %37 = arith.addf %32, %36 : vector<16x16xf32>
    %c6 = arith.constant 6 : index
    %38 = memref.load %arg1[%c6] : memref<81xf32, #tpu.memory_space<smem>>
    %39 = vector.extract_strided_slice %1 {offsets = [2, 0], sizes = [16, 16], strides = [1, 1]} : vector<18x18xf32> to vector<16x16xf32>
    %40 = vector.broadcast %38 : f32 to vector<16x16xf32>
    %41 = arith.mulf %40, %39 : vector<16x16xf32>
    %42 = arith.addf %37, %41 : vector<16x16xf32>
    %c7 = arith.constant 7 : index
    %43 = memref.load %arg1[%c7] : memref<81xf32, #tpu.memory_space<smem>>
    %44 = vector.extract_strided_slice %1 {offsets = [2, 1], sizes = [16, 16], strides = [1, 1]} : vector<18x18xf32> to vector<16x16xf32>
    %45 = vector.broadcast %43 : f32 to vector<16x16xf32>
    %46 = arith.mulf %45, %44 : vector<16x16xf32>
    %47 = arith.addf %42, %46 : vector<16x16xf32>
    %c8 = arith.constant 8 : index
    %48 = memref.load %arg1[%c8] : memref<81xf32, #tpu.memory_space<smem>>
    %49 = vector.extract_strided_slice %1 {offsets = [2, 2], sizes = [16, 16], strides = [1, 1]} : vector<18x18xf32> to vector<16x16xf32>
    %50 = vector.broadcast %48 : f32 to vector<16x16xf32>
    %51 = arith.mulf %50, %49 : vector<16x16xf32>
    %52 = arith.addf %47, %51 : vector<16x16xf32>
    %c9 = arith.constant 9 : index
    %53 = memref.load %arg1[%c9] : memref<81xf32, #tpu.memory_space<smem>>
    %54 = vector.extract_strided_slice %3 {offsets = [0, 0], sizes = [16, 16], strides = [1, 1]} : vector<18x18xf32> to vector<16x16xf32>
    %55 = vector.broadcast %53 : f32 to vector<16x16xf32>
    %56 = arith.mulf %55, %54 : vector<16x16xf32>
    %57 = arith.addf %52, %56 : vector<16x16xf32>
    %c10 = arith.constant 10 : index
    %58 = memref.load %arg1[%c10] : memref<81xf32, #tpu.memory_space<smem>>
    %59 = vector.extract_strided_slice %3 {offsets = [0, 1], sizes = [16, 16], strides = [1, 1]} : vector<18x18xf32> to vector<16x16xf32>
    %60 = vector.broadcast %58 : f32 to vector<16x16xf32>
    %61 = arith.mulf %60, %59 : vector<16x16xf32>
    %62 = arith.addf %57, %61 : vector<16x16xf32>
    %c11 = arith.constant 11 : index
    %63 = memref.load %arg1[%c11] : memref<81xf32, #tpu.memory_space<smem>>
    %64 = vector.extract_strided_slice %3 {offsets = [0, 2], sizes = [16, 16], strides = [1, 1]} : vector<18x18xf32> to vector<16x16xf32>
    %65 = vector.broadcast %63 : f32 to vector<16x16xf32>
    %66 = arith.mulf %65, %64 : vector<16x16xf32>
    %67 = arith.addf %62, %66 : vector<16x16xf32>
    %c12 = arith.constant 12 : index
    %68 = memref.load %arg1[%c12] : memref<81xf32, #tpu.memory_space<smem>>
    %69 = vector.extract_strided_slice %3 {offsets = [1, 0], sizes = [16, 16], strides = [1, 1]} : vector<18x18xf32> to vector<16x16xf32>
    %70 = vector.broadcast %68 : f32 to vector<16x16xf32>
    %71 = arith.mulf %70, %69 : vector<16x16xf32>
    %72 = arith.addf %67, %71 : vector<16x16xf32>
    %c13 = arith.constant 13 : index
    %73 = memref.load %arg1[%c13] : memref<81xf32, #tpu.memory_space<smem>>
    %74 = vector.extract_strided_slice %3 {offsets = [1, 1], sizes = [16, 16], strides = [1, 1]} : vector<18x18xf32> to vector<16x16xf32>
    %75 = vector.broadcast %73 : f32 to vector<16x16xf32>
    %76 = arith.mulf %75, %74 : vector<16x16xf32>
    %77 = arith.addf %72, %76 : vector<16x16xf32>
    %c14 = arith.constant 14 : index
    %78 = memref.load %arg1[%c14] : memref<81xf32, #tpu.memory_space<smem>>
    %79 = vector.extract_strided_slice %3 {offsets = [1, 2], sizes = [16, 16], strides = [1, 1]} : vector<18x18xf32> to vector<16x16xf32>
    %80 = vector.broadcast %78 : f32 to vector<16x16xf32>
    %81 = arith.mulf %80, %79 : vector<16x16xf32>
    %82 = arith.addf %77, %81 : vector<16x16xf32>
    %c15 = arith.constant 15 : index
    %83 = memref.load %arg1[%c15] : memref<81xf32, #tpu.memory_space<smem>>
    %84 = vector.extract_strided_slice %3 {offsets = [2, 0], sizes = [16, 16], strides = [1, 1]} : vector<18x18xf32> to vector<16x16xf32>
    %85 = vector.broadcast %83 : f32 to vector<16x16xf32>
    %86 = arith.mulf %85, %84 : vector<16x16xf32>
    %87 = arith.addf %82, %86 : vector<16x16xf32>
    %c16 = arith.constant 16 : index
    %88 = memref.load %arg1[%c16] : memref<81xf32, #tpu.memory_space<smem>>
    %89 = vector.extract_strided_slice %3 {offsets = [2, 1], sizes = [16, 16], strides = [1, 1]} : vector<18x18xf32> to vector<16x16xf32>
    %90 = vector.broadcast %88 : f32 to vector<16x16xf32>
    %91 = arith.mulf %90, %89 : vector<16x16xf32>
    %92 = arith.addf %87, %91 : vector<16x16xf32>
    %c17 = arith.constant 17 : index
    %93 = memref.load %arg1[%c17] : memref<81xf32, #tpu.memory_space<smem>>
    %94 = vector.extract_strided_slice %3 {offsets = [2, 2], sizes = [16, 16], strides = [1, 1]} : vector<18x18xf32> to vector<16x16xf32>
    %95 = vector.broadcast %93 : f32 to vector<16x16xf32>
    %96 = arith.mulf %95, %94 : vector<16x16xf32>
    %97 = arith.addf %92, %96 : vector<16x16xf32>
    %c18 = arith.constant 18 : index
    %98 = memref.load %arg1[%c18] : memref<81xf32, #tpu.memory_space<smem>>
    %99 = vector.extract_strided_slice %5 {offsets = [0, 0], sizes = [16, 16], strides = [1, 1]} : vector<18x18xf32> to vector<16x16xf32>
    %100 = vector.broadcast %98 : f32 to vector<16x16xf32>
    %101 = arith.mulf %100, %99 : vector<16x16xf32>
    %102 = arith.addf %97, %101 : vector<16x16xf32>
    %c19 = arith.constant 19 : index
    %103 = memref.load %arg1[%c19] : memref<81xf32, #tpu.memory_space<smem>>
    %104 = vector.extract_strided_slice %5 {offsets = [0, 1], sizes = [16, 16], strides = [1, 1]} : vector<18x18xf32> to vector<16x16xf32>
    %105 = vector.broadcast %103 : f32 to vector<16x16xf32>
    %106 = arith.mulf %105, %104 : vector<16x16xf32>
    %107 = arith.addf %102, %106 : vector<16x16xf32>
    %c20 = arith.constant 20 : index
    %108 = memref.load %arg1[%c20] : memref<81xf32, #tpu.memory_space<smem>>
    %109 = vector.extract_strided_slice %5 {offsets = [0, 2], sizes = [16, 16], strides = [1, 1]} : vector<18x18xf32> to vector<16x16xf32>
    %110 = vector.broadcast %108 : f32 to vector<16x16xf32>
    %111 = arith.mulf %110, %109 : vector<16x16xf32>
    %112 = arith.addf %107, %111 : vector<16x16xf32>
    %c21 = arith.constant 21 : index
    %113 = memref.load %arg1[%c21] : memref<81xf32, #tpu.memory_space<smem>>
    %114 = vector.extract_strided_slice %5 {offsets = [1, 0], sizes = [16, 16], strides = [1, 1]} : vector<18x18xf32> to vector<16x16xf32>
    %115 = vector.broadcast %113 : f32 to vector<16x16xf32>
    %116 = arith.mulf %115, %114 : vector<16x16xf32>
    %117 = arith.addf %112, %116 : vector<16x16xf32>
    %c22 = arith.constant 22 : index
    %118 = memref.load %arg1[%c22] : memref<81xf32, #tpu.memory_space<smem>>
    %119 = vector.extract_strided_slice %5 {offsets = [1, 1], sizes = [16, 16], strides = [1, 1]} : vector<18x18xf32> to vector<16x16xf32>
    %120 = vector.broadcast %118 : f32 to vector<16x16xf32>
    %121 = arith.mulf %120, %119 : vector<16x16xf32>
    %122 = arith.addf %117, %121 : vector<16x16xf32>
    %c23 = arith.constant 23 : index
    %123 = memref.load %arg1[%c23] : memref<81xf32, #tpu.memory_space<smem>>
    %124 = vector.extract_strided_slice %5 {offsets = [1, 2], sizes = [16, 16], strides = [1, 1]} : vector<18x18xf32> to vector<16x16xf32>
    %125 = vector.broadcast %123 : f32 to vector<16x16xf32>
    %126 = arith.mulf %125, %124 : vector<16x16xf32>
    %127 = arith.addf %122, %126 : vector<16x16xf32>
    %c24 = arith.constant 24 : index
    %128 = memref.load %arg1[%c24] : memref<81xf32, #tpu.memory_space<smem>>
    %129 = vector.extract_strided_slice %5 {offsets = [2, 0], sizes = [16, 16], strides = [1, 1]} : vector<18x18xf32> to vector<16x16xf32>
    %130 = vector.broadcast %128 : f32 to vector<16x16xf32>
    %131 = arith.mulf %130, %129 : vector<16x16xf32>
    %132 = arith.addf %127, %131 : vector<16x16xf32>
    %c25 = arith.constant 25 : index
    %133 = memref.load %arg1[%c25] : memref<81xf32, #tpu.memory_space<smem>>
    %134 = vector.extract_strided_slice %5 {offsets = [2, 1], sizes = [16, 16], strides = [1, 1]} : vector<18x18xf32> to vector<16x16xf32>
    %135 = vector.broadcast %133 : f32 to vector<16x16xf32>
    %136 = arith.mulf %135, %134 : vector<16x16xf32>
    %137 = arith.addf %132, %136 : vector<16x16xf32>
    %c26 = arith.constant 26 : index
    %138 = memref.load %arg1[%c26] : memref<81xf32, #tpu.memory_space<smem>>
    %139 = vector.extract_strided_slice %5 {offsets = [2, 2], sizes = [16, 16], strides = [1, 1]} : vector<18x18xf32> to vector<16x16xf32>
    %140 = vector.broadcast %138 : f32 to vector<16x16xf32>
    %141 = arith.mulf %140, %139 : vector<16x16xf32>
    %142 = arith.addf %137, %141 : vector<16x16xf32>
    %cst = arith.constant 0.000000e+00 : f32
    %143 = vector.broadcast %cst : f32 to vector<16x16xf32>
    %144 = arith.maximumf %142, %143 : vector<16x16xf32>
    %c0_13 = arith.constant 0 : index
    %c0_14 = arith.constant 0 : index
    %c0_15 = arith.constant 0 : index
    %c0_16 = arith.constant 0 : index
    %145 = vector.load %arg4[%c0_13, %c0_14, %c0_15, %c0_16] : memref<1x3x16x16xf32, #tpu.memory_space<vmem>>, vector<1x1x16x16xf32>
    %146 = vector.shape_cast %145 : vector<1x1x16x16xf32> to vector<16x16xf32>
    %147 = vector.shape_cast %144 : vector<16x16xf32> to vector<1x1x16x16xf32>
    tpu.vector_store %arg4[%c0_13, %c0_14, %c0_15, %c0_16], %147 {strides = array<i32>} : memref<1x3x16x16xf32, #tpu.memory_space<vmem>>, vector<1x1x16x16xf32>,
    %c1_17 = arith.constant 1 : index
    %148 = memref.load %arg2[%c1_17] : memref<3xf32, #tpu.memory_space<smem>>
    %149 = vector.broadcast %148 : f32 to vector<16x16xf32>
    %c27 = arith.constant 27 : index
    %150 = memref.load %arg1[%c27] : memref<81xf32, #tpu.memory_space<smem>>
    %151 = vector.extract_strided_slice %1 {offsets = [0, 0], sizes = [16, 16], strides = [1, 1]} : vector<18x18xf32> to vector<16x16xf32>
    %152 = vector.broadcast %150 : f32 to vector<16x16xf32>
    %153 = arith.mulf %152, %151 : vector<16x16xf32>
    %154 = arith.addf %149, %153 : vector<16x16xf32>
    %c28 = arith.constant 28 : index
    %155 = memref.load %arg1[%c28] : memref<81xf32, #tpu.memory_space<smem>>
    %156 = vector.extract_strided_slice %1 {offsets = [0, 1], sizes = [16, 16], strides = [1, 1]} : vector<18x18xf32> to vector<16x16xf32>
    %157 = vector.broadcast %155 : f32 to vector<16x16xf32>
    %158 = arith.mulf %157, %156 : vector<16x16xf32>
    %159 = arith.addf %154, %158 : vector<16x16xf32>
    %c29 = arith.constant 29 : index
    %160 = memref.load %arg1[%c29] : memref<81xf32, #tpu.memory_space<smem>>
    %161 = vector.extract_strided_slice %1 {offsets = [0, 2], sizes = [16, 16], strides = [1, 1]} : vector<18x18xf32> to vector<16x16xf32>
    %162 = vector.broadcast %160 : f32 to vector<16x16xf32>
    %163 = arith.mulf %162, %161 : vector<16x16xf32>
    %164 = arith.addf %159, %163 : vector<16x16xf32>
    %c30 = arith.constant 30 : index
    %165 = memref.load %arg1[%c30] : memref<81xf32, #tpu.memory_space<smem>>
    %166 = vector.extract_strided_slice %1 {offsets = [1, 0], sizes = [16, 16], strides = [1, 1]} : vector<18x18xf32> to vector<16x16xf32>
    %167 = vector.broadcast %165 : f32 to vector<16x16xf32>
    %168 = arith.mulf %167, %166 : vector<16x16xf32>
    %169 = arith.addf %164, %168 : vector<16x16xf32>
    %c31 = arith.constant 31 : index
    %170 = memref.load %arg1[%c31] : memref<81xf32, #tpu.memory_space<smem>>
    %171 = vector.extract_strided_slice %1 {offsets = [1, 1], sizes = [16, 16], strides = [1, 1]} : vector<18x18xf32> to vector<16x16xf32>
    %172 = vector.broadcast %170 : f32 to vector<16x16xf32>
    %173 = arith.mulf %172, %171 : vector<16x16xf32>
    %174 = arith.addf %169, %173 : vector<16x16xf32>
    %c32 = arith.constant 32 : index
    %175 = memref.load %arg1[%c32] : memref<81xf32, #tpu.memory_space<smem>>
    %176 = vector.extract_strided_slice %1 {offsets = [1, 2], sizes = [16, 16], strides = [1, 1]} : vector<18x18xf32> to vector<16x16xf32>
    %177 = vector.broadcast %175 : f32 to vector<16x16xf32>
    %178 = arith.mulf %177, %176 : vector<16x16xf32>
    %179 = arith.addf %174, %178 : vector<16x16xf32>
    %c33 = arith.constant 33 : index
    %180 = memref.load %arg1[%c33] : memref<81xf32, #tpu.memory_space<smem>>
    %181 = vector.extract_strided_slice %1 {offsets = [2, 0], sizes = [16, 16], strides = [1, 1]} : vector<18x18xf32> to vector<16x16xf32>
    %182 = vector.broadcast %180 : f32 to vector<16x16xf32>
    %183 = arith.mulf %182, %181 : vector<16x16xf32>
    %184 = arith.addf %179, %183 : vector<16x16xf32>
    %c34 = arith.constant 34 : index
    %185 = memref.load %arg1[%c34] : memref<81xf32, #tpu.memory_space<smem>>
    %186 = vector.extract_strided_slice %1 {offsets = [2, 1], sizes = [16, 16], strides = [1, 1]} : vector<18x18xf32> to vector<16x16xf32>
    %187 = vector.broadcast %185 : f32 to vector<16x16xf32>
    %188 = arith.mulf %187, %186 : vector<16x16xf32>
    %189 = arith.addf %184, %188 : vector<16x16xf32>
    %c35 = arith.constant 35 : index
    %190 = memref.load %arg1[%c35] : memref<81xf32, #tpu.memory_space<smem>>
    %191 = vector.extract_strided_slice %1 {offsets = [2, 2], sizes = [16, 16], strides = [1, 1]} : vector<18x18xf32> to vector<16x16xf32>
    %192 = vector.broadcast %190 : f32 to vector<16x16xf32>
    %193 = arith.mulf %192, %191 : vector<16x16xf32>
    %194 = arith.addf %189, %193 : vector<16x16xf32>
    %c36 = arith.constant 36 : index
    %195 = memref.load %arg1[%c36] : memref<81xf32, #tpu.memory_space<smem>>
    %196 = vector.extract_strided_slice %3 {offsets = [0, 0], sizes = [16, 16], strides = [1, 1]} : vector<18x18xf32> to vector<16x16xf32>
    %197 = vector.broadcast %195 : f32 to vector<16x16xf32>
    %198 = arith.mulf %197, %196 : vector<16x16xf32>
    %199 = arith.addf %194, %198 : vector<16x16xf32>
    %c37 = arith.constant 37 : index
    %200 = memref.load %arg1[%c37] : memref<81xf32, #tpu.memory_space<smem>>
    %201 = vector.extract_strided_slice %3 {offsets = [0, 1], sizes = [16, 16], strides = [1, 1]} : vector<18x18xf32> to vector<16x16xf32>
    %202 = vector.broadcast %200 : f32 to vector<16x16xf32>
    %203 = arith.mulf %202, %201 : vector<16x16xf32>
    %204 = arith.addf %199, %203 : vector<16x16xf32>
    %c38 = arith.constant 38 : index
    %205 = memref.load %arg1[%c38] : memref<81xf32, #tpu.memory_space<smem>>
    %206 = vector.extract_strided_slice %3 {offsets = [0, 2], sizes = [16, 16], strides = [1, 1]} : vector<18x18xf32> to vector<16x16xf32>
    %207 = vector.broadcast %205 : f32 to vector<16x16xf32>
    %208 = arith.mulf %207, %206 : vector<16x16xf32>
    %209 = arith.addf %204, %208 : vector<16x16xf32>
    %c39 = arith.constant 39 : index
    %210 = memref.load %arg1[%c39] : memref<81xf32, #tpu.memory_space<smem>>
    %211 = vector.extract_strided_slice %3 {offsets = [1, 0], sizes = [16, 16], strides = [1, 1]} : vector<18x18xf32> to vector<16x16xf32>
    %212 = vector.broadcast %210 : f32 to vector<16x16xf32>
    %213 = arith.mulf %212, %211 : vector<16x16xf32>
    %214 = arith.addf %209, %213 : vector<16x16xf32>
    %c40 = arith.constant 40 : index
    %215 = memref.load %arg1[%c40] : memref<81xf32, #tpu.memory_space<smem>>
    %216 = vector.extract_strided_slice %3 {offsets = [1, 1], sizes = [16, 16], strides = [1, 1]} : vector<18x18xf32> to vector<16x16xf32>
    %217 = vector.broadcast %215 : f32 to vector<16x16xf32>
    %218 = arith.mulf %217, %216 : vector<16x16xf32>
    %219 = arith.addf %214, %218 : vector<16x16xf32>
    %c41 = arith.constant 41 : index
    %220 = memref.load %arg1[%c41] : memref<81xf32, #tpu.memory_space<smem>>
    %221 = vector.extract_strided_slice %3 {offsets = [1, 2], sizes = [16, 16], strides = [1, 1]} : vector<18x18xf32> to vector<16x16xf32>
    %222 = vector.broadcast %220 : f32 to vector<16x16xf32>
    %223 = arith.mulf %222, %221 : vector<16x16xf32>
    %224 = arith.addf %219, %223 : vector<16x16xf32>
    %c42 = arith.constant 42 : index
    %225 = memref.load %arg1[%c42] : memref<81xf32, #tpu.memory_space<smem>>
    %226 = vector.extract_strided_slice %3 {offsets = [2, 0], sizes = [16, 16], strides = [1, 1]} : vector<18x18xf32> to vector<16x16xf32>
    %227 = vector.broadcast %225 : f32 to vector<16x16xf32>
    %228 = arith.mulf %227, %226 : vector<16x16xf32>
    %229 = arith.addf %224, %228 : vector<16x16xf32>
    %c43 = arith.constant 43 : index
    %230 = memref.load %arg1[%c43] : memref<81xf32, #tpu.memory_space<smem>>
    %231 = vector.extract_strided_slice %3 {offsets = [2, 1], sizes = [16, 16], strides = [1, 1]} : vector<18x18xf32> to vector<16x16xf32>
    %232 = vector.broadcast %230 : f32 to vector<16x16xf32>
    %233 = arith.mulf %232, %231 : vector<16x16xf32>
    %234 = arith.addf %229, %233 : vector<16x16xf32>
    %c44 = arith.constant 44 : index
    %235 = memref.load %arg1[%c44] : memref<81xf32, #tpu.memory_space<smem>>
    %236 = vector.extract_strided_slice %3 {offsets = [2, 2], sizes = [16, 16], strides = [1, 1]} : vector<18x18xf32> to vector<16x16xf32>
    %237 = vector.broadcast %235 : f32 to vector<16x16xf32>
    %238 = arith.mulf %237, %236 : vector<16x16xf32>
    %239 = arith.addf %234, %238 : vector<16x16xf32>
    %c45 = arith.constant 45 : index
    %240 = memref.load %arg1[%c45] : memref<81xf32, #tpu.memory_space<smem>>
    %241 = vector.extract_strided_slice %5 {offsets = [0, 0], sizes = [16, 16], strides = [1, 1]} : vector<18x18xf32> to vector<16x16xf32>
    %242 = vector.broadcast %240 : f32 to vector<16x16xf32>
    %243 = arith.mulf %242, %241 : vector<16x16xf32>
    %244 = arith.addf %239, %243 : vector<16x16xf32>
    %c46 = arith.constant 46 : index
    %245 = memref.load %arg1[%c46] : memref<81xf32, #tpu.memory_space<smem>>
    %246 = vector.extract_strided_slice %5 {offsets = [0, 1], sizes = [16, 16], strides = [1, 1]} : vector<18x18xf32> to vector<16x16xf32>
    %247 = vector.broadcast %245 : f32 to vector<16x16xf32>
    %248 = arith.mulf %247, %246 : vector<16x16xf32>
    %249 = arith.addf %244, %248 : vector<16x16xf32>
    %c47 = arith.constant 47 : index
    %250 = memref.load %arg1[%c47] : memref<81xf32, #tpu.memory_space<smem>>
    %251 = vector.extract_strided_slice %5 {offsets = [0, 2], sizes = [16, 16], strides = [1, 1]} : vector<18x18xf32> to vector<16x16xf32>
    %252 = vector.broadcast %250 : f32 to vector<16x16xf32>
    %253 = arith.mulf %252, %251 : vector<16x16xf32>
    %254 = arith.addf %249, %253 : vector<16x16xf32>
    %c48 = arith.constant 48 : index
    %255 = memref.load %arg1[%c48] : memref<81xf32, #tpu.memory_space<smem>>
    %256 = vector.extract_strided_slice %5 {offsets = [1, 0], sizes = [16, 16], strides = [1, 1]} : vector<18x18xf32> to vector<16x16xf32>
    %257 = vector.broadcast %255 : f32 to vector<16x16xf32>
    %258 = arith.mulf %257, %256 : vector<16x16xf32>
    %259 = arith.addf %254, %258 : vector<16x16xf32>
    %c49 = arith.constant 49 : index
    %260 = memref.load %arg1[%c49] : memref<81xf32, #tpu.memory_space<smem>>
    %261 = vector.extract_strided_slice %5 {offsets = [1, 1], sizes = [16, 16], strides = [1, 1]} : vector<18x18xf32> to vector<16x16xf32>
    %262 = vector.broadcast %260 : f32 to vector<16x16xf32>
    %263 = arith.mulf %262, %261 : vector<16x16xf32>
    %264 = arith.addf %259, %263 : vector<16x16xf32>
    %c50 = arith.constant 50 : index
    %265 = memref.load %arg1[%c50] : memref<81xf32, #tpu.memory_space<smem>>
    %266 = vector.extract_strided_slice %5 {offsets = [1, 2], sizes = [16, 16], strides = [1, 1]} : vector<18x18xf32> to vector<16x16xf32>
    %267 = vector.broadcast %265 : f32 to vector<16x16xf32>
    %268 = arith.mulf %267, %266 : vector<16x16xf32>
    %269 = arith.addf %264, %268 : vector<16x16xf32>
    %c51 = arith.constant 51 : index
    %270 = memref.load %arg1[%c51] : memref<81xf32, #tpu.memory_space<smem>>
    %271 = vector.extract_strided_slice %5 {offsets = [2, 0], sizes = [16, 16], strides = [1, 1]} : vector<18x18xf32> to vector<16x16xf32>
    %272 = vector.broadcast %270 : f32 to vector<16x16xf32>
    %273 = arith.mulf %272, %271 : vector<16x16xf32>
    %274 = arith.addf %269, %273 : vector<16x16xf32>
    %c52 = arith.constant 52 : index
    %275 = memref.load %arg1[%c52] : memref<81xf32, #tpu.memory_space<smem>>
    %276 = vector.extract_strided_slice %5 {offsets = [2, 1], sizes = [16, 16], strides = [1, 1]} : vector<18x18xf32> to vector<16x16xf32>
    %277 = vector.broadcast %275 : f32 to vector<16x16xf32>
    %278 = arith.mulf %277, %276 : vector<16x16xf32>
    %279 = arith.addf %274, %278 : vector<16x16xf32>
    %c53 = arith.constant 53 : index
    %280 = memref.load %arg1[%c53] : memref<81xf32, #tpu.memory_space<smem>>
    %281 = vector.extract_strided_slice %5 {offsets = [2, 2], sizes = [16, 16], strides = [1, 1]} : vector<18x18xf32> to vector<16x16xf32>
    %282 = vector.broadcast %280 : f32 to vector<16x16xf32>
    %283 = arith.mulf %282, %281 : vector<16x16xf32>
    %284 = arith.addf %279, %283 : vector<16x16xf32>
    %cst_18 = arith.constant 0.000000e+00 : f32
    %285 = vector.broadcast %cst_18 : f32 to vector<16x16xf32>
    %286 = arith.maximumf %284, %285 : vector<16x16xf32>
    %c0_19 = arith.constant 0 : index
    %c1_20 = arith.constant 1 : index
    %c0_21 = arith.constant 0 : index
    %c0_22 = arith.constant 0 : index
    %287 = vector.load %arg4[%c0_19, %c1_20, %c0_21, %c0_22] : memref<1x3x16x16xf32, #tpu.memory_space<vmem>>, vector<1x1x16x16xf32>
    %288 = vector.shape_cast %287 : vector<1x1x16x16xf32> to vector<16x16xf32>
    %289 = vector.shape_cast %286 : vector<16x16xf32> to vector<1x1x16x16xf32>
    tpu.vector_store %arg4[%c0_19, %c1_20, %c0_21, %c0_22], %289 {strides = array<i32>} : memref<1x3x16x16xf32, #tpu.memory_space<vmem>>, vector<1x1x16x16xf32>,
    %c2_23 = arith.constant 2 : index
    %290 = memref.load %arg2[%c2_23] : memref<3xf32, #tpu.memory_space<smem>>
    %291 = vector.broadcast %290 : f32 to vector<16x16xf32>
    %c54 = arith.constant 54 : index
    %292 = memref.load %arg1[%c54] : memref<81xf32, #tpu.memory_space<smem>>
    %293 = vector.extract_strided_slice %1 {offsets = [0, 0], sizes = [16, 16], strides = [1, 1]} : vector<18x18xf32> to vector<16x16xf32>
    %294 = vector.broadcast %292 : f32 to vector<16x16xf32>
    %295 = arith.mulf %294, %293 : vector<16x16xf32>
    %296 = arith.addf %291, %295 : vector<16x16xf32>
    %c55 = arith.constant 55 : index
    %297 = memref.load %arg1[%c55] : memref<81xf32, #tpu.memory_space<smem>>
    %298 = vector.extract_strided_slice %1 {offsets = [0, 1], sizes = [16, 16], strides = [1, 1]} : vector<18x18xf32> to vector<16x16xf32>
    %299 = vector.broadcast %297 : f32 to vector<16x16xf32>
    %300 = arith.mulf %299, %298 : vector<16x16xf32>
    %301 = arith.addf %296, %300 : vector<16x16xf32>
    %c56 = arith.constant 56 : index
    %302 = memref.load %arg1[%c56] : memref<81xf32, #tpu.memory_space<smem>>
    %303 = vector.extract_strided_slice %1 {offsets = [0, 2], sizes = [16, 16], strides = [1, 1]} : vector<18x18xf32> to vector<16x16xf32>
    %304 = vector.broadcast %302 : f32 to vector<16x16xf32>
    %305 = arith.mulf %304, %303 : vector<16x16xf32>
    %306 = arith.addf %301, %305 : vector<16x16xf32>
    %c57 = arith.constant 57 : index
    %307 = memref.load %arg1[%c57] : memref<81xf32, #tpu.memory_space<smem>>
    %308 = vector.extract_strided_slice %1 {offsets = [1, 0], sizes = [16, 16], strides = [1, 1]} : vector<18x18xf32> to vector<16x16xf32>
    %309 = vector.broadcast %307 : f32 to vector<16x16xf32>
    %310 = arith.mulf %309, %308 : vector<16x16xf32>
    %311 = arith.addf %306, %310 : vector<16x16xf32>
    %c58 = arith.constant 58 : index
    %312 = memref.load %arg1[%c58] : memref<81xf32, #tpu.memory_space<smem>>
    %313 = vector.extract_strided_slice %1 {offsets = [1, 1], sizes = [16, 16], strides = [1, 1]} : vector<18x18xf32> to vector<16x16xf32>
    %314 = vector.broadcast %312 : f32 to vector<16x16xf32>
    %315 = arith.mulf %314, %313 : vector<16x16xf32>
    %316 = arith.addf %311, %315 : vector<16x16xf32>
    %c59 = arith.constant 59 : index
    %317 = memref.load %arg1[%c59] : memref<81xf32, #tpu.memory_space<smem>>
    %318 = vector.extract_strided_slice %1 {offsets = [1, 2], sizes = [16, 16], strides = [1, 1]} : vector<18x18xf32> to vector<16x16xf32>
    %319 = vector.broadcast %317 : f32 to vector<16x16xf32>
    %320 = arith.mulf %319, %318 : vector<16x16xf32>
    %321 = arith.addf %316, %320 : vector<16x16xf32>
    %c60 = arith.constant 60 : index
    %322 = memref.load %arg1[%c60] : memref<81xf32, #tpu.memory_space<smem>>
    %323 = vector.extract_strided_slice %1 {offsets = [2, 0], sizes = [16, 16], strides = [1, 1]} : vector<18x18xf32> to vector<16x16xf32>
    %324 = vector.broadcast %322 : f32 to vector<16x16xf32>
    %325 = arith.mulf %324, %323 : vector<16x16xf32>
    %326 = arith.addf %321, %325 : vector<16x16xf32>
    %c61 = arith.constant 61 : index
    %327 = memref.load %arg1[%c61] : memref<81xf32, #tpu.memory_space<smem>>
    %328 = vector.extract_strided_slice %1 {offsets = [2, 1], sizes = [16, 16], strides = [1, 1]} : vector<18x18xf32> to vector<16x16xf32>
    %329 = vector.broadcast %327 : f32 to vector<16x16xf32>
    %330 = arith.mulf %329, %328 : vector<16x16xf32>
    %331 = arith.addf %326, %330 : vector<16x16xf32>
    %c62 = arith.constant 62 : index
    %332 = memref.load %arg1[%c62] : memref<81xf32, #tpu.memory_space<smem>>
    %333 = vector.extract_strided_slice %1 {offsets = [2, 2], sizes = [16, 16], strides = [1, 1]} : vector<18x18xf32> to vector<16x16xf32>
    %334 = vector.broadcast %332 : f32 to vector<16x16xf32>
    %335 = arith.mulf %334, %333 : vector<16x16xf32>
    %336 = arith.addf %331, %335 : vector<16x16xf32>
    %c63 = arith.constant 63 : index
    %337 = memref.load %arg1[%c63] : memref<81xf32, #tpu.memory_space<smem>>
    %338 = vector.extract_strided_slice %3 {offsets = [0, 0], sizes = [16, 16], strides = [1, 1]} : vector<18x18xf32> to vector<16x16xf32>
    %339 = vector.broadcast %337 : f32 to vector<16x16xf32>
    %340 = arith.mulf %339, %338 : vector<16x16xf32>
    %341 = arith.addf %336, %340 : vector<16x16xf32>
    %c64 = arith.constant 64 : index
    %342 = memref.load %arg1[%c64] : memref<81xf32, #tpu.memory_space<smem>>
    %343 = vector.extract_strided_slice %3 {offsets = [0, 1], sizes = [16, 16], strides = [1, 1]} : vector<18x18xf32> to vector<16x16xf32>
    %344 = vector.broadcast %342 : f32 to vector<16x16xf32>
    %345 = arith.mulf %344, %343 : vector<16x16xf32>
    %346 = arith.addf %341, %345 : vector<16x16xf32>
    %c65 = arith.constant 65 : index
    %347 = memref.load %arg1[%c65] : memref<81xf32, #tpu.memory_space<smem>>
    %348 = vector.extract_strided_slice %3 {offsets = [0, 2], sizes = [16, 16], strides = [1, 1]} : vector<18x18xf32> to vector<16x16xf32>
    %349 = vector.broadcast %347 : f32 to vector<16x16xf32>
    %350 = arith.mulf %349, %348 : vector<16x16xf32>
    %351 = arith.addf %346, %350 : vector<16x16xf32>
    %c66 = arith.constant 66 : index
    %352 = memref.load %arg1[%c66] : memref<81xf32, #tpu.memory_space<smem>>
    %353 = vector.extract_strided_slice %3 {offsets = [1, 0], sizes = [16, 16], strides = [1, 1]} : vector<18x18xf32> to vector<16x16xf32>
    %354 = vector.broadcast %352 : f32 to vector<16x16xf32>
    %355 = arith.mulf %354, %353 : vector<16x16xf32>
    %356 = arith.addf %351, %355 : vector<16x16xf32>
    %c67 = arith.constant 67 : index
    %357 = memref.load %arg1[%c67] : memref<81xf32, #tpu.memory_space<smem>>
    %358 = vector.extract_strided_slice %3 {offsets = [1, 1], sizes = [16, 16], strides = [1, 1]} : vector<18x18xf32> to vector<16x16xf32>
    %359 = vector.broadcast %357 : f32 to vector<16x16xf32>
    %360 = arith.mulf %359, %358 : vector<16x16xf32>
    %361 = arith.addf %356, %360 : vector<16x16xf32>
    %c68 = arith.constant 68 : index
    %362 = memref.load %arg1[%c68] : memref<81xf32, #tpu.memory_space<smem>>
    %363 = vector.extract_strided_slice %3 {offsets = [1, 2], sizes = [16, 16], strides = [1, 1]} : vector<18x18xf32> to vector<16x16xf32>
    %364 = vector.broadcast %362 : f32 to vector<16x16xf32>
    %365 = arith.mulf %364, %363 : vector<16x16xf32>
    %366 = arith.addf %361, %365 : vector<16x16xf32>
    %c69 = arith.constant 69 : index
    %367 = memref.load %arg1[%c69] : memref<81xf32, #tpu.memory_space<smem>>
    %368 = vector.extract_strided_slice %3 {offsets = [2, 0], sizes = [16, 16], strides = [1, 1]} : vector<18x18xf32> to vector<16x16xf32>
    %369 = vector.broadcast %367 : f32 to vector<16x16xf32>
    %370 = arith.mulf %369, %368 : vector<16x16xf32>
    %371 = arith.addf %366, %370 : vector<16x16xf32>
    %c70 = arith.constant 70 : index
    %372 = memref.load %arg1[%c70] : memref<81xf32, #tpu.memory_space<smem>>
    %373 = vector.extract_strided_slice %3 {offsets = [2, 1], sizes = [16, 16], strides = [1, 1]} : vector<18x18xf32> to vector<16x16xf32>
    %374 = vector.broadcast %372 : f32 to vector<16x16xf32>
    %375 = arith.mulf %374, %373 : vector<16x16xf32>
    %376 = arith.addf %371, %375 : vector<16x16xf32>
    %c71 = arith.constant 71 : index
    %377 = memref.load %arg1[%c71] : memref<81xf32, #tpu.memory_space<smem>>
    %378 = vector.extract_strided_slice %3 {offsets = [2, 2], sizes = [16, 16], strides = [1, 1]} : vector<18x18xf32> to vector<16x16xf32>
    %379 = vector.broadcast %377 : f32 to vector<16x16xf32>
    %380 = arith.mulf %379, %378 : vector<16x16xf32>
    %381 = arith.addf %376, %380 : vector<16x16xf32>
    %c72 = arith.constant 72 : index
    %382 = memref.load %arg1[%c72] : memref<81xf32, #tpu.memory_space<smem>>
    %383 = vector.extract_strided_slice %5 {offsets = [0, 0], sizes = [16, 16], strides = [1, 1]} : vector<18x18xf32> to vector<16x16xf32>
    %384 = vector.broadcast %382 : f32 to vector<16x16xf32>
    %385 = arith.mulf %384, %383 : vector<16x16xf32>
    %386 = arith.addf %381, %385 : vector<16x16xf32>
    %c73 = arith.constant 73 : index
    %387 = memref.load %arg1[%c73] : memref<81xf32, #tpu.memory_space<smem>>
    %388 = vector.extract_strided_slice %5 {offsets = [0, 1], sizes = [16, 16], strides = [1, 1]} : vector<18x18xf32> to vector<16x16xf32>
    %389 = vector.broadcast %387 : f32 to vector<16x16xf32>
    %390 = arith.mulf %389, %388 : vector<16x16xf32>
    %391 = arith.addf %386, %390 : vector<16x16xf32>
    %c74 = arith.constant 74 : index
    %392 = memref.load %arg1[%c74] : memref<81xf32, #tpu.memory_space<smem>>
    %393 = vector.extract_strided_slice %5 {offsets = [0, 2], sizes = [16, 16], strides = [1, 1]} : vector<18x18xf32> to vector<16x16xf32>
    %394 = vector.broadcast %392 : f32 to vector<16x16xf32>
    %395 = arith.mulf %394, %393 : vector<16x16xf32>
    %396 = arith.addf %391, %395 : vector<16x16xf32>
    %c75 = arith.constant 75 : index
    %397 = memref.load %arg1[%c75] : memref<81xf32, #tpu.memory_space<smem>>
    %398 = vector.extract_strided_slice %5 {offsets = [1, 0], sizes = [16, 16], strides = [1, 1]} : vector<18x18xf32> to vector<16x16xf32>
    %399 = vector.broadcast %397 : f32 to vector<16x16xf32>
    %400 = arith.mulf %399, %398 : vector<16x16xf32>
    %401 = arith.addf %396, %400 : vector<16x16xf32>
    %c76 = arith.constant 76 : index
    %402 = memref.load %arg1[%c76] : memref<81xf32, #tpu.memory_space<smem>>
    %403 = vector.extract_strided_slice %5 {offsets = [1, 1], sizes = [16, 16], strides = [1, 1]} : vector<18x18xf32> to vector<16x16xf32>
    %404 = vector.broadcast %402 : f32 to vector<16x16xf32>
    %405 = arith.mulf %404, %403 : vector<16x16xf32>
    %406 = arith.addf %401, %405 : vector<16x16xf32>
    %c77 = arith.constant 77 : index
    %407 = memref.load %arg1[%c77] : memref<81xf32, #tpu.memory_space<smem>>
    %408 = vector.extract_strided_slice %5 {offsets = [1, 2], sizes = [16, 16], strides = [1, 1]} : vector<18x18xf32> to vector<16x16xf32>
    %409 = vector.broadcast %407 : f32 to vector<16x16xf32>
    %410 = arith.mulf %409, %408 : vector<16x16xf32>
    %411 = arith.addf %406, %410 : vector<16x16xf32>
    %c78 = arith.constant 78 : index
    %412 = memref.load %arg1[%c78] : memref<81xf32, #tpu.memory_space<smem>>
    %413 = vector.extract_strided_slice %5 {offsets = [2, 0], sizes = [16, 16], strides = [1, 1]} : vector<18x18xf32> to vector<16x16xf32>
    %414 = vector.broadcast %412 : f32 to vector<16x16xf32>
    %415 = arith.mulf %414, %413 : vector<16x16xf32>
    %416 = arith.addf %411, %415 : vector<16x16xf32>
    %c79 = arith.constant 79 : index
    %417 = memref.load %arg1[%c79] : memref<81xf32, #tpu.memory_space<smem>>
    %418 = vector.extract_strided_slice %5 {offsets = [2, 1], sizes = [16, 16], strides = [1, 1]} : vector<18x18xf32> to vector<16x16xf32>
    %419 = vector.broadcast %417 : f32 to vector<16x16xf32>
    %420 = arith.mulf %419, %418 : vector<16x16xf32>
    %421 = arith.addf %416, %420 : vector<16x16xf32>
    %c80 = arith.constant 80 : index
    %422 = memref.load %arg1[%c80] : memref<81xf32, #tpu.memory_space<smem>>
    %423 = vector.extract_strided_slice %5 {offsets = [2, 2], sizes = [16, 16], strides = [1, 1]} : vector<18x18xf32> to vector<16x16xf32>
    %424 = vector.broadcast %422 : f32 to vector<16x16xf32>
    %425 = arith.mulf %424, %423 : vector<16x16xf32>
    %426 = arith.addf %421, %425 : vector<16x16xf32>
    %cst_24 = arith.constant 0.000000e+00 : f32
    %427 = vector.broadcast %cst_24 : f32 to vector<16x16xf32>
    %428 = arith.maximumf %426, %427 : vector<16x16xf32>
    %c0_25 = arith.constant 0 : index
    %c2_26 = arith.constant 2 : index
    %c0_27 = arith.constant 0 : index
    %c0_28 = arith.constant 0 : index
    %429 = vector.load %arg4[%c0_25, %c2_26, %c0_27, %c0_28] : memref<1x3x16x16xf32, #tpu.memory_space<vmem>>, vector<1x1x16x16xf32>
    %430 = vector.shape_cast %429 : vector<1x1x16x16xf32> to vector<16x16xf32>
    %431 = vector.shape_cast %428 : vector<16x16xf32> to vector<1x1x16x16xf32>
    tpu.vector_store %arg4[%c0_25, %c2_26, %c0_27, %c0_28], %431 {strides = array<i32>} : memref<1x3x16x16xf32, #tpu.memory_space<vmem>>, vector<1x1x16x16xf32>,
    return
  }
  func.func @transform_0(%arg0: i32) -> i32 {
    %c0_i32 = arith.constant 0 : i32
    %c0_i32_0 = arith.constant 0 : i32
    return %c0_i32 : i32
  }
  func.func @transform_1(%arg0: i32) -> i32 {
    %c0_i32 = arith.constant 0 : i32
    %c0_i32_0 = arith.constant 0 : i32
    return %c0_i32 : i32
  }
  func.func @transform_2(%arg0: i32) -> (i32, i32, i32, i32) {
    %c0_i32 = arith.constant 0 : i32
    %c0_i32_0 = arith.constant 0 : i32
    %c0_i32_1 = arith.constant 0 : i32
    %c0_i32_2 = arith.constant 0 : i32
    return %arg0, %c0_i32, %c0_i32_0, %c0_i32_1 : i32, i32, i32, i32
  }
  func.func @transform_3(%arg0: i32) -> (i32, i32, i32, i32) {
    %c0_i32 = arith.constant 0 : i32
    %c0_i32_0 = arith.constant 0 : i32
    %c0_i32_1 = arith.constant 0 : i32
    %c0_i32_2 = arith.constant 0 : i32
    return %arg0, %c0_i32, %c0_i32_0, %c0_i32_1 : i32, i32, i32, i32
  }
}

</mosaic_0001>

<llo_original>
// kernel: up_forward.3
$region0: #{up_forward.3}
  #allocation0 [shape = 'u32[]', space=smem, size = 0x4, offset = 0x4, fixed_abs, tag = 'smem constant byte address 0x4 - core index']
  #allocation1 [shape = 'u32[144,128]{1,0:T(1,128)}', space=vmem, size = 0x12000, scoped, tag = 'internal scratch']
  %s0 = inlined_call_operand.vmem [shape: f32[8], index: 0, kind: input, shape index: {}]
  %s1 = inlined_call_operand.vmem [shape: f32[2], index: 1, kind: input, shape index: {}]
  %s2 = inlined_call_operand.vmem [shape: f32[2,4,8,8], index: 2, kind: input, shape index: {}]
  %s3 = inlined_call_operand.vmem [shape: f32[16,8], index: 3, kind: input, shape index: {}]
  %s4 = inlined_call_operand.vmem [shape: f32[8,16], index: 4, kind: input, shape index: {}]
  %s5 = inlined_call_operand.vmem [shape: f32[2,2,16,16], index: 5, kind: output, shape index: {}]
  %s6 = sld [smem:[#allocation0]]
  $region61: #{up_forward.3} parent=0
    _
  %s8 = ssub.s32 1, %s6
  %s9 = scalar_select 0, %s8, %s6
  $region1: #{up_forward.3} parent=0
    #allocation2 [shape = 'u8[512]{0}', space=smem, size = 0x200, scoped, tag = 'input window, operand 0, single buffered']
    #allocation3 [shape = 's32[2]{0}', space=sflag, size = 0x8, scoped, tag = 'scoped memory for up_forward.3']
    #allocation4 [shape = 'u8[512]{0}', space=smem, size = 0x200, scoped, tag = 'input window, operand 1, single buffered']
    #allocation5 [shape = 's32[1]{0}', space=sflag, size = 0x4, scoped, tag = 'scoped memory for up_forward.3']
    %10 = vsyncpa [#allocation3], 0
    %11 = vsyncpa [#allocation5], 0
    loop: start=0, step=1, limit=4
    $region2: #{up_forward.3} parent=1 // loop_pre_header
      _
    $region3: #{up_forward.3} parent=1 // loop_header
      %s13 = sphi 0, %s17
      %p14 = scmp.ge.s32.totalorder %s13, 4
      %s21 = sphi 0, %s21
      %s23 = sphi 0, %s21
      %s24 = sphi 0, %s23
      %s38 = sphi 0, %s24
      %s42 = sphi 0, %s42
      %s44 = sphi 0, %s42
      %s45 = sphi 0, %s44
      %s59 = sphi 0, %s45
      %s65 = sphi 0, %s67
      %s68 = sphi 0, %s65
      %s69 = sphi 0, %s68
      %s85 = sphi 0, %s69
      %s89 = sphi 0, %s89
      %s91 = sphi 0, %s89
      %s92 = sphi 0, %s91
      %s106 = sphi 0, %s92
      %s110 = sphi 0, %s110
      %s112 = sphi 0, %s110
      %s113 = sphi 0, %s112
      %s127 = sphi 0, %s113
      %s133 = sphi 0, %s135
      %s136 = sphi 0, %s133
      %s137 = sphi 0, %s136
      %s153 = sphi 0, %s137
    $region4: #{up_forward.3} parent=1 // loop_header_branch
      %16 = sbr.rel (%p14) target = $region8
    $region5: #{up_forward.3} parent=1 // loop_body
      %s18 = ssub.s32 %s13, 1
      %s19 = ssub.s32 %s13, 2
      %s20 = sadd.s32 %s13, 1
      %s22 = sadd.s32 %s21, 1
      %p25 = scmp.eq.s32.totalorder %s13, 1
      %p26 = scmp.ne.s32.totalorder %s21, %s23
      %p27 = scmp.eq.s32.totalorder %s13, 0
      %p28 = por %p26, %p27
      %p29 = scmp.ne.s32.totalorder %s21, %s23
      %p30 = scmp.eq.s32.totalorder %s18, 1
      %p31 = por %p29, %p30
      %p32 = scmp.ne.s32.totalorder %s23, %s24
      %p33 = scmp.eq.s32.totalorder %s18, 0
      %p34 = por %p32, %p33
      %p35 = scmp.ne.s32.totalorder %s23, %s24
      %p36 = scmp.eq.s32.totalorder %s19, 1
      %p37 = por %p35, %p36
      %p39 = scmp.ne.s32.totalorder %s24, %s38
      %p40 = scmp.eq.s32.totalorder %s19, 0
      %p41 = por %p39, %p40
      %s43 = sadd.s32 %s42, 1
      %p46 = scmp.eq.s32.totalorder %s13, 1
      %p47 = scmp.ne.s32.totalorder %s42, %s44
      %p48 = scmp.eq.s32.totalorder %s13, 0
      %p49 = por %p47, %p48
      %p50 = scmp.ne.s32.totalorder %s42, %s44
      %p51 = scmp.eq.s32.totalorder %s18, 1
      %p52 = por %p50, %p51
      %p53 = scmp.ne.s32.totalorder %s44, %s45
      %p54 = scmp.eq.s32.totalorder %s18, 0
      %p55 = por %p53, %p54
      %p56 = scmp.ne.s32.totalorder %s44, %s45
      %p57 = scmp.eq.s32.totalorder %s19, 1
      %p58 = por %p56, %p57
      %p60 = scmp.ne.s32.totalorder %s45, %s59
      %p61 = scmp.eq.s32.totalorder %s19, 0
      %p62 = por %p60, %p61
      %s63 = ssub.s32 %s13, %s20
      %p64 = scmp.eq.s32.totalorder %s63, 0
      %s66 = sadd.s32 %s65, 1
      %s67 = scalar_select %p64, %s65, %s66
      %p70 = pneg %p64
      %p71 = scmp.eq.s32.totalorder %s13, 1
      %p72 = por %p70, %p71
      %p73 = scmp.ne.s32.totalorder %s65, %s68
      %p74 = scmp.eq.s32.totalorder %s13, 0
      %p75 = por %p73, %p74
      %p76 = scmp.ne.s32.totalorder %s65, %s68
      %p77 = scmp.eq.s32.totalorder %s18, 1
      %p78 = por %p76, %p77
      %p79 = scmp.ne.s32.totalorder %s68, %s69
      %p80 = scmp.eq.s32.totalorder %s18, 0
      %p81 = por %p79, %p80
      %p82 = scmp.ne.s32.totalorder %s68, %s69
      %p83 = scmp.eq.s32.totalorder %s19, 1
      %p84 = por %p82, %p83
      %p86 = scmp.ne.s32.totalorder %s69, %s85
      %p87 = scmp.eq.s32.totalorder %s19, 0
      %p88 = por %p86, %p87
      %s90 = sadd.s32 %s89, 1
      %p93 = scmp.eq.s32.totalorder %s13, 1
      %p94 = scmp.ne.s32.totalorder %s89, %s91
      %p95 = scmp.eq.s32.totalorder %s13, 0
      %p96 = por %p94, %p95
      %p97 = scmp.ne.s32.totalorder %s89, %s91
      %p98 = scmp.eq.s32.totalorder %s18, 1
      %p99 = por %p97, %p98
      %p100 = scmp.ne.s32.totalorder %s91, %s92
      %p101 = scmp.eq.s32.totalorder %s18, 0
      %p102 = por %p100, %p101
      %p103 = scmp.ne.s32.totalorder %s91, %s92
      %p104 = scmp.eq.s32.totalorder %s19, 1
      %p105 = por %p103, %p104
      %p107 = scmp.ne.s32.totalorder %s92, %s106
      %p108 = scmp.eq.s32.totalorder %s19, 0
      %p109 = por %p107, %p108
      %s111 = sadd.s32 %s110, 1
      %p114 = scmp.eq.s32.totalorder %s13, 1
      %p115 = scmp.ne.s32.totalorder %s110, %s112
      %p116 = scmp.eq.s32.totalorder %s13, 0
      %p117 = por %p115, %p116
      %p118 = scmp.ne.s32.totalorder %s110, %s112
      %p119 = scmp.eq.s32.totalorder %s18, 1
      %p120 = por %p118, %p119
      %p121 = scmp.ne.s32.totalorder %s112, %s113
      %p122 = scmp.eq.s32.totalorder %s18, 0
      %p123 = por %p121, %p122
      %p124 = scmp.ne.s32.totalorder %s112, %s113
      %p125 = scmp.eq.s32.totalorder %s19, 1
      %p126 = por %p124, %p125
      %p128 = scmp.ne.s32.totalorder %s113, %s127
      %p129 = scmp.eq.s32.totalorder %s19, 0
      %p130 = por %p128, %p129
      %s131 = ssub.s32 %s13, %s20
      %p132 = scmp.eq.s32.totalorder %s131, 0
      %s134 = sadd.s32 %s133, 1
      %s135 = scalar_select %p132, %s133, %s134
      %p138 = pneg %p132
      %p139 = scmp.eq.s32.totalorder %s13, 1
      %p140 = por %p138, %p139
      %p141 = scmp.ne.s32.totalorder %s133, %s136
      %p142 = scmp.eq.s32.totalorder %s13, 0
      %p143 = por %p141, %p142
      %p144 = scmp.ne.s32.totalorder %s133, %s136
      %p145 = scmp.eq.s32.totalorder %s18, 1
      %p146 = por %p144, %p145
      %p147 = scmp.ne.s32.totalorder %s136, %s137
      %p148 = scmp.eq.s32.totalorder %s18, 0
      %p149 = por %p147, %p148
      %p150 = scmp.ne.s32.totalorder %s136, %s137
      %p151 = scmp.eq.s32.totalorder %s19, 1
      %p152 = por %p150, %p151
      %p154 = scmp.ne.s32.totalorder %s137, %s153
      %p155 = scmp.eq.s32.totalorder %s19, 0
      %p156 = por %p154, %p155
      %p157 = scmp.le.s32.totalorder 1, %s13
      %p158 = scmp.lt.s32.totalorder %s13, 3
      %p159 = pnand %p157, %p158
      %p160 = pneg %p159
      // Predicated region
      $region9: #{up_forward.3} parent=5 // pred_check
        _
      $region10: #{up_forward.3} parent=5 // pred_check_branch
        %162 = sbr.rel (%p159) target = $region12
      $region11: #{up_forward.3} parent=5 // pred_region
        %s163 = ssub.s32 %s13, 1
        // Predicated region
        $region13: #{up_forward.3} parent=11 // pred_check
          %p164 = pneg %p34
        $region14: #{up_forward.3} parent=11 // pred_check_branch
          %166 = sbr.rel (%p164) target = $region16
        $region15: #{up_forward.3} parent=11 // pred_region
          %s168 = ssub.s32 16, 16
          %169 = vsyncadd [#allocation3], %s168
          %s171 = sshll.u32 %s0, 4
          %s172 = int_to_ptr.vmem [resolvable:$true] %s171
          %174 = dma.vmem_to_smem %s172, 16, [#allocation2], [#allocation3]
        $region16: #{up_forward.3} parent=11 // pred_fallthru
          _
        // Predicated region
        $region17: #{up_forward.3} parent=11 // pred_check
          %p175 = pneg %p55
        $region18: #{up_forward.3} parent=11 // pred_check_branch
          %177 = sbr.rel (%p175) target = $region20
        $region19: #{up_forward.3} parent=11 // pred_region
          %s179 = ssub.s32 16, 16
          %180 = vsyncadd [#allocation5], %s179
          %s182 = sshll.u32 %s1, 4
          %s183 = int_to_ptr.vmem [resolvable:$true] %s182
          %185 = dma.vmem_to_smem %s183, 16, [#allocation4], [#allocation5]
        $region20: #{up_forward.3} parent=11 // pred_fallthru
          _
        // Predicated region
        $region21: #{up_forward.3} parent=11 // pred_check
          %p186 = pneg %p102
        $region22: #{up_forward.3} parent=11 // pred_check_branch
          %188 = sbr.rel (%p186) target = $region24
        $region23: #{up_forward.3} parent=11 // pred_region
          _
        $region24: #{up_forward.3} parent=11 // pred_fallthru
          _
        // Predicated region
        $region25: #{up_forward.3} parent=11 // pred_check
          %p189 = pneg %p123
        $region26: #{up_forward.3} parent=11 // pred_check_branch
          %191 = sbr.rel (%p189) target = $region28
        $region27: #{up_forward.3} parent=11 // pred_region
          _
        $region28: #{up_forward.3} parent=11 // pred_fallthru
          _
      $region12: #{up_forward.3} parent=5 // pred_fallthru
        _
      %p192 = scmp.lt.s32.totalorder %s13, 2
      // Predicated region
      $region29: #{up_forward.3} parent=5 // pred_check
        %p193 = pneg %p192
      $region30: #{up_forward.3} parent=5 // pred_check_branch
        %195 = sbr.rel (%p193) target = $region32
      $region31: #{up_forward.3} parent=5 // pred_region
        // Predicated region
        $region33: #{up_forward.3} parent=31 // pred_check
          %p196 = pneg %p75
        $region34: #{up_forward.3} parent=31 // pred_check_branch
          %198 = sbr.rel (%p196) target = $region36
        $region35: #{up_forward.3} parent=31 // pred_region
          %p199 = scmp.lt.s32.totalorder %s13, 1
          %s200 = scalar_select %p199, %s13, 1
          %s201 = smul.addr %s200, 4
          %s202 = smul.addr %s201, 8
          %s203 = scalar_lea.vmem %s2, %s202
        $region36: #{up_forward.3} parent=31 // pred_fallthru
          _
      $region32: #{up_forward.3} parent=5 // pred_fallthru
        _
      %p204 = scmp.le.s32.totalorder 1, %s13
      %p205 = scmp.lt.s32.totalorder %s13, 3
      %p206 = pnand %p204, %p205
      %p207 = pneg %p206
      // Predicated region
      $region37: #{up_forward.3} parent=5 // pred_check
        _
      $region38: #{up_forward.3} parent=5 // pred_check_branch
        %209 = sbr.rel (%p206) target = $region40
      $region39: #{up_forward.3} parent=5 // pred_region
        %s210 = ssub.s32 %s13, 1
        // Predicated region
        $region41: #{up_forward.3} parent=39 // pred_check
          %p211 = pneg %p34
        $region42: #{up_forward.3} parent=39 // pred_check_branch
          %213 = sbr.rel (%p211) target = $region44
        $region43: #{up_forward.3} parent=39 // pred_region
          %214 = dma.done [#allocation3], 16
        $region44: #{up_forward.3} parent=39 // pred_fallthru
          _
        // Predicated region
        $region45: #{up_forward.3} parent=39 // pred_check
          %p215 = pneg %p55
        $region46: #{up_forward.3} parent=39 // pred_check_branch
          %217 = sbr.rel (%p215) target = $region48
        $region47: #{up_forward.3} parent=39 // pred_region
          %218 = dma.done [#allocation5], 16
        $region48: #{up_forward.3} parent=39 // pred_fallthru
          _
        %219 = sfence
        %p220 = pneg %p34
        %p221 = pneg %p31
        %p222 = pneg %p55
        %p223 = pneg %p52
        %p224 = scmp.lt.s32.totalorder %s18, 1
        %s225 = scalar_select %p224, %s18, 1
        %s226 = smul.addr %s225, 4
        %s227 = smul.addr %s226, 8
        %s228 = scalar_lea.vmem %s2, %s227
        %p229 = pneg %p81
        %p230 = pneg %p78
        %p231 = pneg %p102
        %p232 = pneg %p99
        %p233 = pneg %p123
        %p234 = pneg %p120
        %p235 = pneg %p149
        %p236 = pneg %p146
        %p237 = scmp.lt.s32.totalorder %s18, 1
        %s238 = scalar_select %p237, %s18, 1
        %s239 = smul.addr %s238, 4
        %s240 = smul.addr %s239, 8
        %s241 = scalar_lea.vmem %s5, %s240
        %p242 = scmp.lt.s32.totalorder %s18, 1
        %s243 = scalar_select %p242, %s18, 1
        %s244 = smul.addr %s243, 4
        %s245 = smul.addr %s244, 8
        %s246 = scalar_lea.vmem %s2, %s245
        %p247 = scmp.lt.s32.totalorder %s18, 1
        %s248 = scalar_select %p247, %s18, 1
        %s249 = smul.addr %s248, 4
        %s250 = smul.addr %s249, 8
        %s251 = scalar_lea.vmem %s5, %s250
        %v252 = vld [vmem:[%s3] sm:$0xff]
        %v253 = vld [vmem:[%s3 + $0x8] sm:$0xff]
        %v254 = vld [vmem:[%s4] sm:$0xff]
        %s255 = sld [smem:[#allocation4]]
        %v256 = vstv %s255
        %s257 = sld [smem:[#allocation4 + $0x1]]
        %v258 = vstv %s257
        %v259 = vld [vmem:[%s246] sm:$0xff]
        %vm260 = vcmask 64512
        %v262 = vsel %vm260, %v252, 0
        %v265 = vsel %vm260, %v253, 0
        %267 = vmatprep.subr.mxu0 0.0
        %268 = vmatpush1.msra.mxu0 0.0
        %269 = vmatprep.subr.mxu0 0.0
        %270 = vmatpush1.msra.mxu0 0.0
        %271 = vmatprep.subr.mxu0 0.0
        %272 = vmatpush1.msra.mxu0 0.0
        %273 = vmatprep.subr.mxu0 0.0
        %274 = vmatpush1.msra.mxu0 0.0
        %275 = vmatprep.subr.mxu0 0.0
        %276 = vmatpush1.msra.mxu0 0.0
        %277 = vmatprep.subr.mxu0 0.0
        %278 = vmatpush1.msra.mxu0 0.0
        %279 = vmatprep.subr.mxu0 0.0
        %280 = vmatpush1.msra.mxu0 0.0
        %281 = vmatprep.subr.mxu0 0.0
        %282 = vmatpush1.msra.mxu0 0.0
        %283 = vmatprep.subr.mxu0 0.0
        %284 = vmatpush1.msra.mxu0 0.0
        %285 = vmatprep.subr.mxu0 0.0
        %286 = vmatpush1.msra.mxu0 0.0
        %287 = vmatprep.subr.mxu0 0.0
        %288 = vmatpush1.msra.mxu0 0.0
        %289 = vmatprep.subr.mxu0 0.0
        %290 = vmatpush1.msra.mxu0 0.0
        %291 = vmatprep.subr.mxu0 0.0
        %292 = vmatpush1.msra.mxu0 0.0
        %293 = vmatprep.subr.mxu0 0.0
        %294 = vmatpush1.msra.mxu0 0.0
        %295 = vmatprep.subr.mxu0 0.0
        %296 = vmatpush1.msra.mxu0 0.0
        %297 = vmatprep.subr.mxu0 0.0
        %298 = vmatpush1.msra.mxu0 %v259
        %299 = vmatprep.subr.mxu0 0.0
        %300 = vmatpush2.msra.mxu0 0.0
        %301 = vmatprep.subr.mxu0 0.0
        %302 = vmatpush2.msra.mxu0 0.0
        %303 = vmatprep.subr.mxu0 0.0
        %304 = vmatpush2.msra.mxu0 0.0
        %305 = vmatprep.subr.mxu0 0.0
        %306 = vmatpush2.msra.mxu0 0.0
        %307 = vmatprep.subr.mxu0 0.0
        %308 = vmatpush2.msra.mxu0 0.0
        %309 = vmatprep.subr.mxu0 0.0
        %310 = vmatpush2.msra.mxu0 0.0
        %311 = vmatprep.subr.mxu0 0.0
        %312 = vmatpush2.msra.mxu0 0.0
        %313 = vmatprep.subr.mxu0 0.0
        %314 = vmatpush2.msra.mxu0 0.0
        %315 = vmatprep.subr.mxu0 0.0
        %316 = vmatpush2.msra.mxu0 0.0
        %317 = vmatprep.subr.mxu0 0.0
        %318 = vmatpush2.msra.mxu0 0.0
        %319 = vmatprep.subr.mxu0 0.0
        %320 = vmatpush2.msra.mxu0 0.0
        %321 = vmatprep.subr.mxu0 0.0
        %322 = vmatpush2.msra.mxu0 0.0
        %323 = vmatprep.subr.mxu0 0.0
        %324 = vmatpush2.msra.mxu0 0.0
        %325 = vmatprep.subr.mxu0 0.0
        %326 = vmatpush2.msra.mxu0 0.0
        %327 = vmatprep.subr.mxu0 0.0
        %328 = vmatpush2.msra.mxu0 0.0
        %329 = vmatprep.subr.mxu0 0.0
        %330 = vmatpush2.msra.mxu0 0.0
        %331 = vmatprep.mubr.f32.mxu0 0.0
        %332 = vmatmul.mubr.f32.gmra.mxu0 %v262
        %v333 = vpop.f32.mrf.mxu0
        %v334 = vadd.f32 0.0, %v333
        %v335 = vpop.f32.mrf.mxu0
        %336 = vmatprep.mubr.f32.mxu0 0.0
        %337 = vmatmul.mubr.f32.gmra.mxu0 %v265
        %v338 = vpop.f32.mrf.mxu0
        %v339 = vadd.f32 0.0, %v338
        %v340 = vpop.f32.mrf.mxu0
        %341 = vdwg.mxu0
        %v343 = vsel %vm260, %v334, 0
        %v346 = vsel %vm260, %v339, 0
        %348 = vmatprep.subr.mxu0 0.0
        %349 = vmatpush1.msra.mxu0 0.0
        %350 = vmatprep.subr.mxu0 0.0
        %351 = vmatpush1.msra.mxu0 0.0
        %352 = vmatprep.subr.mxu0 0.0
        %353 = vmatpush1.msra.mxu0 0.0
        %354 = vmatprep.subr.mxu0 0.0
        %355 = vmatpush1.msra.mxu0 0.0
        %356 = vmatprep.subr.mxu0 0.0
        %357 = vmatpush1.msra.mxu0 0.0
        %358 = vmatprep.subr.mxu0 0.0
        %359 = vmatpush1.msra.mxu0 0.0
        %360 = vmatprep.subr.mxu0 0.0
        %361 = vmatpush1.msra.mxu0 0.0
        %362 = vmatprep.subr.mxu0 0.0
        %363 = vmatpush1.msra.mxu0 0.0
        %364 = vmatprep.subr.mxu0 0.0
        %365 = vmatpush1.msra.mxu0 0.0
        %366 = vmatprep.subr.mxu0 0.0
        %367 = vmatpush1.msra.mxu0 0.0
        %368 = vmatprep.subr.mxu0 0.0
        %369 = vmatpush1.msra.mxu0 0.0
        %370 = vmatprep.subr.mxu0 0.0
        %371 = vmatpush1.msra.mxu0 0.0
        %372 = vmatprep.subr.mxu0 0.0
        %373 = vmatpush1.msra.mxu0 0.0
        %374 = vmatprep.subr.mxu0 0.0
        %375 = vmatpush1.msra.mxu0 0.0
        %376 = vmatprep.subr.mxu0 0.0
        %377 = vmatpush1.msra.mxu0 0.0
        %378 = vmatprep.subr.mxu0 0.0
        %379 = vmatpush1.msra.mxu0 %v254
        %380 = vmatprep.subr.mxu0 0.0
        %381 = vmatpush2.msra.mxu0 0.0
        %382 = vmatprep.subr.mxu0 0.0
        %383 = vmatpush2.msra.mxu0 0.0
        %384 = vmatprep.subr.mxu0 0.0
        %385 = vmatpush2.msra.mxu0 0.0
        %386 = vmatprep.subr.mxu0 0.0
        %387 = vmatpush2.msra.mxu0 0.0
        %388 = vmatprep.subr.mxu0 0.0
        %389 = vmatpush2.msra.mxu0 0.0
        %390 = vmatprep.subr.mxu0 0.0
        %391 = vmatpush2.msra.mxu0 0.0
        %392 = vmatprep.subr.mxu0 0.0
        %393 = vmatpush2.msra.mxu0 0.0
        %394 = vmatprep.subr.mxu0 0.0
        %395 = vmatpush2.msra.mxu0 0.0
        %396 = vmatprep.subr.mxu0 0.0
        %397 = vmatpush2.msra.mxu0 0.0
        %398 = vmatprep.subr.mxu0 0.0
        %399 = vmatpush2.msra.mxu0 0.0
        %400 = vmatprep.subr.mxu0 0.0
        %401 = vmatpush2.msra.mxu0 0.0
        %402 = vmatprep.subr.mxu0 0.0
        %403 = vmatpush2.msra.mxu0 0.0
        %404 = vmatprep.subr.mxu0 0.0
        %405 = vmatpush2.msra.mxu0 0.0
        %406 = vmatprep.subr.mxu0 0.0
        %407 = vmatpush2.msra.mxu0 0.0
        %408 = vmatprep.subr.mxu0 0.0
        %409 = vmatpush2.msra.mxu0 0.0
        %410 = vmatprep.subr.mxu0 0.0
        %411 = vmatpush2.msra.mxu0 0.0
        %412 = vmatprep.mubr.f32.mxu0 0.0
        %413 = vmatmul.mubr.f32.gmra.mxu0 %v343
        %v414 = vpop.f32.mrf.mxu0
        %v415 = vadd.f32 0.0, %v414
        %v416 = vpop.f32.mrf.mxu0
        %417 = vmatprep.mubr.f32.mxu0 0.0
        %418 = vmatmul.mubr.f32.gmra.mxu0 %v346
        %v419 = vpop.f32.mrf.mxu0
        %v420 = vadd.f32 0.0, %v419
        %v421 = vpop.f32.mrf.mxu0
        %422 = vdwg.mxu0
        %s423 = sld [smem:[#allocation2]]
        %v424 = vstv %s423
        %v425 = vmul.f32 %v424, %v415
        %v426 = vmul.f32 %v424, %v420
        %v427 = vadd.f32 %v256, %v425
        %v428 = vadd.f32 %v256, %v426
        %s429 = sld [smem:[#allocation2 + $0x4]]
        %v430 = vstv %s429
        %v431 = vmul.f32 %v430, %v415
        %v432 = vmul.f32 %v430, %v420
        %v433 = vadd.f32 %v258, %v431
        %v434 = vadd.f32 %v258, %v432
        %s435 = scalar_lea.vmem %s246, 8
        %v436 = vld [vmem:[%s435] sm:$0xff]
        %437 = vmatprep.subr.mxu0 0.0
        %438 = vmatpush1.msra.mxu0 0.0
        %439 = vmatprep.subr.mxu0 0.0
        %440 = vmatpush1.msra.mxu0 0.0
        %441 = vmatprep.subr.mxu0 0.0
        %442 = vmatpush1.msra.mxu0 0.0
        %443 = vmatprep.subr.mxu0 0.0
        %444 = vmatpush1.msra.mxu0 0.0
        %445 = vmatprep.subr.mxu0 0.0
        %446 = vmatpush1.msra.mxu0 0.0
        %447 = vmatprep.subr.mxu0 0.0
        %448 = vmatpush1.msra.mxu0 0.0
        %449 = vmatprep.subr.mxu0 0.0
        %450 = vmatpush1.msra.mxu0 0.0
        %451 = vmatprep.subr.mxu0 0.0
        %452 = vmatpush1.msra.mxu0 0.0
        %453 = vmatprep.subr.mxu0 0.0
        %454 = vmatpush1.msra.mxu0 0.0
        %455 = vmatprep.subr.mxu0 0.0
        %456 = vmatpush1.msra.mxu0 0.0
        %457 = vmatprep.subr.mxu0 0.0
        %458 = vmatpush1.msra.mxu0 0.0
        %459 = vmatprep.subr.mxu0 0.0
        %460 = vmatpush1.msra.mxu0 0.0
        %461 = vmatprep.subr.mxu0 0.0
        %462 = vmatpush1.msra.mxu0 0.0
        %463 = vmatprep.subr.mxu0 0.0
        %464 = vmatpush1.msra.mxu0 0.0
        %465 = vmatprep.subr.mxu0 0.0
        %466 = vmatpush1.msra.mxu0 0.0
        %467 = vmatprep.subr.mxu0 0.0
        %468 = vmatpush1.msra.mxu0 %v436
        %469 = vmatprep.subr.mxu0 0.0
        %470 = vmatpush2.msra.mxu0 0.0
        %471 = vmatprep.subr.mxu0 0.0
        %472 = vmatpush2.msra.mxu0 0.0
        %473 = vmatprep.subr.mxu0 0.0
        %474 = vmatpush2.msra.mxu0 0.0
        %475 = vmatprep.subr.mxu0 0.0
        %476 = vmatpush2.msra.mxu0 0.0
        %477 = vmatprep.subr.mxu0 0.0
        %478 = vmatpush2.msra.mxu0 0.0
        %479 = vmatprep.subr.mxu0 0.0
        %480 = vmatpush2.msra.mxu0 0.0
        %481 = vmatprep.subr.mxu0 0.0
        %482 = vmatpush2.msra.mxu0 0.0
        %483 = vmatprep.subr.mxu0 0.0
        %484 = vmatpush2.msra.mxu0 0.0
        %485 = vmatprep.subr.mxu0 0.0
        %486 = vmatpush2.msra.mxu0 0.0
        %487 = vmatprep.subr.mxu0 0.0
        %488 = vmatpush2.msra.mxu0 0.0
        %489 = vmatprep.subr.mxu0 0.0
        %490 = vmatpush2.msra.mxu0 0.0
        %491 = vmatprep.subr.mxu0 0.0
        %492 = vmatpush2.msra.mxu0 0.0
        %493 = vmatprep.subr.mxu0 0.0
        %494 = vmatpush2.msra.mxu0 0.0
        %495 = vmatprep.subr.mxu0 0.0
        %496 = vmatpush2.msra.mxu0 0.0
        %497 = vmatprep.subr.mxu0 0.0
        %498 = vmatpush2.msra.mxu0 0.0
        %499 = vmatprep.subr.mxu0 0.0
        %500 = vmatpush2.msra.mxu0 0.0
        %501 = vmatprep.mubr.f32.mxu0 0.0
        %502 = vmatmul.mubr.f32.gmra.mxu0 %v262
        %v503 = vpop.f32.mrf.mxu0
        %v504 = vadd.f32 0.0, %v503
        %v505 = vpop.f32.mrf.mxu0
        %506 = vmatprep.mubr.f32.mxu0 0.0
        %507 = vmatmul.mubr.f32.gmra.mxu0 %v265
        %v508 = vpop.f32.mrf.mxu0
        %v509 = vadd.f32 0.0, %v508
        %v510 = vpop.f32.mrf.mxu0
        %511 = vdwg.mxu0
        %v513 = vsel %vm260, %v504, 0
        %v516 = vsel %vm260, %v509, 0
        %518 = vmatprep.subr.mxu0 0.0
        %519 = vmatpush1.msra.mxu0 0.0
        %520 = vmatprep.subr.mxu0 0.0
        %521 = vmatpush1.msra.mxu0 0.0
        %522 = vmatprep.subr.mxu0 0.0
        %523 = vmatpush1.msra.mxu0 0.0
        %524 = vmatprep.subr.mxu0 0.0
        %525 = vmatpush1.msra.mxu0 0.0
        %526 = vmatprep.subr.mxu0 0.0
        %527 = vmatpush1.msra.mxu0 0.0
        %528 = vmatprep.subr.mxu0 0.0
        %529 = vmatpush1.msra.mxu0 0.0
        %530 = vmatprep.subr.mxu0 0.0
        %531 = vmatpush1.msra.mxu0 0.0
        %532 = vmatprep.subr.mxu0 0.0
        %533 = vmatpush1.msra.mxu0 0.0
        %534 = vmatprep.subr.mxu0 0.0
        %535 = vmatpush1.msra.mxu0 0.0
        %536 = vmatprep.subr.mxu0 0.0
        %537 = vmatpush1.msra.mxu0 0.0
        %538 = vmatprep.subr.mxu0 0.0
        %539 = vmatpush1.msra.mxu0 0.0
        %540 = vmatprep.subr.mxu0 0.0
        %541 = vmatpush1.msra.mxu0 0.0
        %542 = vmatprep.subr.mxu0 0.0
        %543 = vmatpush1.msra.mxu0 0.0
        %544 = vmatprep.subr.mxu0 0.0
        %545 = vmatpush1.msra.mxu0 0.0
        %546 = vmatprep.subr.mxu0 0.0
        %547 = vmatpush1.msra.mxu0 0.0
        %548 = vmatprep.subr.mxu0 0.0
        %549 = vmatpush1.msra.mxu0 %v254
        %550 = vmatprep.subr.mxu0 0.0
        %551 = vmatpush2.msra.mxu0 0.0
        %552 = vmatprep.subr.mxu0 0.0
        %553 = vmatpush2.msra.mxu0 0.0
        %554 = vmatprep.subr.mxu0 0.0
        %555 = vmatpush2.msra.mxu0 0.0
        %556 = vmatprep.subr.mxu0 0.0
        %557 = vmatpush2.msra.mxu0 0.0
        %558 = vmatprep.subr.mxu0 0.0
        %559 = vmatpush2.msra.mxu0 0.0
        %560 = vmatprep.subr.mxu0 0.0
        %561 = vmatpush2.msra.mxu0 0.0
        %562 = vmatprep.subr.mxu0 0.0
        %563 = vmatpush2.msra.mxu0 0.0
        %564 = vmatprep.subr.mxu0 0.0
        %565 = vmatpush2.msra.mxu0 0.0
        %566 = vmatprep.subr.mxu0 0.0
        %567 = vmatpush2.msra.mxu0 0.0
        %568 = vmatprep.subr.mxu0 0.0
        %569 = vmatpush2.msra.mxu0 0.0
        %570 = vmatprep.subr.mxu0 0.0
        %571 = vmatpush2.msra.mxu0 0.0
        %572 = vmatprep.subr.mxu0 0.0
        %573 = vmatpush2.msra.mxu0 0.0
        %574 = vmatprep.subr.mxu0 0.0
        %575 = vmatpush2.msra.mxu0 0.0
        %576 = vmatprep.subr.mxu0 0.0
        %577 = vmatpush2.msra.mxu0 0.0
        %578 = vmatprep.subr.mxu0 0.0
        %579 = vmatpush2.msra.mxu0 0.0
        %580 = vmatprep.subr.mxu0 0.0
        %581 = vmatpush2.msra.mxu0 0.0
        %582 = vmatprep.mubr.f32.mxu0 0.0
        %583 = vmatmul.mubr.f32.gmra.mxu0 %v513
        %v584 = vpop.f32.mrf.mxu0
        %v585 = vadd.f32 0.0, %v584
        %v586 = vpop.f32.mrf.mxu0
        %587 = vmatprep.mubr.f32.mxu0 0.0
        %588 = vmatmul.mubr.f32.gmra.mxu0 %v516
        %v589 = vpop.f32.mrf.mxu0
        %v590 = vadd.f32 0.0, %v589
        %v591 = vpop.f32.mrf.mxu0
        %592 = vdwg.mxu0
        %s593 = sld [smem:[#allocation2 + $0x1]]
        %v594 = vstv %s593
        %v595 = vmul.f32 %v594, %v585
        %v596 = vmul.f32 %v594, %v590
        %v597 = vadd.f32 %v427, %v595
        %v598 = vadd.f32 %v428, %v596
        %s599 = sld [smem:[#allocation2 + $0x5]]
        %v600 = vstv %s599
        %v601 = vmul.f32 %v600, %v585
        %v602 = vmul.f32 %v600, %v590
        %v603 = vadd.f32 %v433, %v601
        %v604 = vadd.f32 %v434, %v602
        %s605 = scalar_lea.vmem %s246, 16
        %v606 = vld [vmem:[%s605] sm:$0xff]
        %607 = vmatprep.subr.mxu0 0.0
        %608 = vmatpush1.msra.mxu0 0.0
        %609 = vmatprep.subr.mxu0 0.0
        %610 = vmatpush1.msra.mxu0 0.0
        %611 = vmatprep.subr.mxu0 0.0
        %612 = vmatpush1.msra.mxu0 0.0
        %613 = vmatprep.subr.mxu0 0.0
        %614 = vmatpush1.msra.mxu0 0.0
        %615 = vmatprep.subr.mxu0 0.0
        %616 = vmatpush1.msra.mxu0 0.0
        %617 = vmatprep.subr.mxu0 0.0
        %618 = vmatpush1.msra.mxu0 0.0
        %619 = vmatprep.subr.mxu0 0.0
        %620 = vmatpush1.msra.mxu0 0.0
        %621 = vmatprep.subr.mxu0 0.0
        %622 = vmatpush1.msra.mxu0 0.0
        %623 = vmatprep.subr.mxu0 0.0
        %624 = vmatpush1.msra.mxu0 0.0
        %625 = vmatprep.subr.mxu0 0.0
        %626 = vmatpush1.msra.mxu0 0.0
        %627 = vmatprep.subr.mxu0 0.0
        %628 = vmatpush1.msra.mxu0 0.0
        %629 = vmatprep.subr.mxu0 0.0
        %630 = vmatpush1.msra.mxu0 0.0
        %631 = vmatprep.subr.mxu0 0.0
        %632 = vmatpush1.msra.mxu0 0.0
        %633 = vmatprep.subr.mxu0 0.0
        %634 = vmatpush1.msra.mxu0 0.0
        %635 = vmatprep.subr.mxu0 0.0
        %636 = vmatpush1.msra.mxu0 0.0
        %637 = vmatprep.subr.mxu0 0.0
        %638 = vmatpush1.msra.mxu0 %v606
        %639 = vmatprep.subr.mxu0 0.0
        %640 = vmatpush2.msra.mxu0 0.0
        %641 = vmatprep.subr.mxu0 0.0
        %642 = vmatpush2.msra.mxu0 0.0
        %643 = vmatprep.subr.mxu0 0.0
        %644 = vmatpush2.msra.mxu0 0.0
        %645 = vmatprep.subr.mxu0 0.0
        %646 = vmatpush2.msra.mxu0 0.0
        %647 = vmatprep.subr.mxu0 0.0
        %648 = vmatpush2.msra.mxu0 0.0
        %649 = vmatprep.subr.mxu0 0.0
        %650 = vmatpush2.msra.mxu0 0.0
        %651 = vmatprep.subr.mxu0 0.0
        %652 = vmatpush2.msra.mxu0 0.0
        %653 = vmatprep.subr.mxu0 0.0
        %654 = vmatpush2.msra.mxu0 0.0
        %655 = vmatprep.subr.mxu0 0.0
        %656 = vmatpush2.msra.mxu0 0.0
        %657 = vmatprep.subr.mxu0 0.0
        %658 = vmatpush2.msra.mxu0 0.0
        %659 = vmatprep.subr.mxu0 0.0
        %660 = vmatpush2.msra.mxu0 0.0
        %661 = vmatprep.subr.mxu0 0.0
        %662 = vmatpush2.msra.mxu0 0.0
        %663 = vmatprep.subr.mxu0 0.0
        %664 = vmatpush2.msra.mxu0 0.0
        %665 = vmatprep.subr.mxu0 0.0
        %666 = vmatpush2.msra.mxu0 0.0
        %667 = vmatprep.subr.mxu0 0.0
        %668 = vmatpush2.msra.mxu0 0.0
        %669 = vmatprep.subr.mxu0 0.0
        %670 = vmatpush2.msra.mxu0 0.0
        %671 = vmatprep.mubr.f32.mxu0 0.0
        %672 = vmatmul.mubr.f32.gmra.mxu0 %v262
        %v673 = vpop.f32.mrf.mxu0
        %v674 = vadd.f32 0.0, %v673
        %v675 = vpop.f32.mrf.mxu0
        %676 = vmatprep.mubr.f32.mxu0 0.0
        %677 = vmatmul.mubr.f32.gmra.mxu0 %v265
        %v678 = vpop.f32.mrf.mxu0
        %v679 = vadd.f32 0.0, %v678
        %v680 = vpop.f32.mrf.mxu0
        %681 = vdwg.mxu0
        %v683 = vsel %vm260, %v674, 0
        %v686 = vsel %vm260, %v679, 0
        %688 = vmatprep.subr.mxu0 0.0
        %689 = vmatpush1.msra.mxu0 0.0
        %690 = vmatprep.subr.mxu0 0.0
        %691 = vmatpush1.msra.mxu0 0.0
        %692 = vmatprep.subr.mxu0 0.0
        %693 = vmatpush1.msra.mxu0 0.0
        %694 = vmatprep.subr.mxu0 0.0
        %695 = vmatpush1.msra.mxu0 0.0
        %696 = vmatprep.subr.mxu0 0.0
        %697 = vmatpush1.msra.mxu0 0.0
        %698 = vmatprep.subr.mxu0 0.0
        %699 = vmatpush1.msra.mxu0 0.0
        %700 = vmatprep.subr.mxu0 0.0
        %701 = vmatpush1.msra.mxu0 0.0
        %702 = vmatprep.subr.mxu0 0.0
        %703 = vmatpush1.msra.mxu0 0.0
        %704 = vmatprep.subr.mxu0 0.0
        %705 = vmatpush1.msra.mxu0 0.0
        %706 = vmatprep.subr.mxu0 0.0
        %707 = vmatpush1.msra.mxu0 0.0
        %708 = vmatprep.subr.mxu0 0.0
        %709 = vmatpush1.msra.mxu0 0.0
        %710 = vmatprep.subr.mxu0 0.0
        %711 = vmatpush1.msra.mxu0 0.0
        %712 = vmatprep.subr.mxu0 0.0
        %713 = vmatpush1.msra.mxu0 0.0
        %714 = vmatprep.subr.mxu0 0.0
        %715 = vmatpush1.msra.mxu0 0.0
        %716 = vmatprep.subr.mxu0 0.0
        %717 = vmatpush1.msra.mxu0 0.0
        %718 = vmatprep.subr.mxu0 0.0
        %719 = vmatpush1.msra.mxu0 %v254
        %720 = vmatprep.subr.mxu0 0.0
        %721 = vmatpush2.msra.mxu0 0.0
        %722 = vmatprep.subr.mxu0 0.0
        %723 = vmatpush2.msra.mxu0 0.0
        %724 = vmatprep.subr.mxu0 0.0
        %725 = vmatpush2.msra.mxu0 0.0
        %726 = vmatprep.subr.mxu0 0.0
        %727 = vmatpush2.msra.mxu0 0.0
        %728 = vmatprep.subr.mxu0 0.0
        %729 = vmatpush2.msra.mxu0 0.0
        %730 = vmatprep.subr.mxu0 0.0
        %731 = vmatpush2.msra.mxu0 0.0
        %732 = vmatprep.subr.mxu0 0.0
        %733 = vmatpush2.msra.mxu0 0.0
        %734 = vmatprep.subr.mxu0 0.0
        %735 = vmatpush2.msra.mxu0 0.0
        %736 = vmatprep.subr.mxu0 0.0
        %737 = vmatpush2.msra.mxu0 0.0
        %738 = vmatprep.subr.mxu0 0.0
        %739 = vmatpush2.msra.mxu0 0.0
        %740 = vmatprep.subr.mxu0 0.0
        %741 = vmatpush2.msra.mxu0 0.0
        %742 = vmatprep.subr.mxu0 0.0
        %743 = vmatpush2.msra.mxu0 0.0
        %744 = vmatprep.subr.mxu0 0.0
        %745 = vmatpush2.msra.mxu0 0.0
        %746 = vmatprep.subr.mxu0 0.0
        %747 = vmatpush2.msra.mxu0 0.0
        %748 = vmatprep.subr.mxu0 0.0
        %749 = vmatpush2.msra.mxu0 0.0
        %750 = vmatprep.subr.mxu0 0.0
        %751 = vmatpush2.msra.mxu0 0.0
        %752 = vmatprep.mubr.f32.mxu0 0.0
        %753 = vmatmul.mubr.f32.gmra.mxu0 %v683
        %v754 = vpop.f32.mrf.mxu0
        %v755 = vadd.f32 0.0, %v754
        %v756 = vpop.f32.mrf.mxu0
        %757 = vmatprep.mubr.f32.mxu0 0.0
        %758 = vmatmul.mubr.f32.gmra.mxu0 %v686
        %v759 = vpop.f32.mrf.mxu0
        %v760 = vadd.f32 0.0, %v759
        %v761 = vpop.f32.mrf.mxu0
        %762 = vdwg.mxu0
        %s763 = sld [smem:[#allocation2 + $0x2]]
        %v764 = vstv %s763
        %v765 = vmul.f32 %v764, %v755
        %v766 = vmul.f32 %v764, %v760
        %v767 = vadd.f32 %v597, %v765
        %v768 = vadd.f32 %v598, %v766
        %s769 = sld [smem:[#allocation2 + $0x6]]
        %v770 = vstv %s769
        %v771 = vmul.f32 %v770, %v755
        %v772 = vmul.f32 %v770, %v760
        %v773 = vadd.f32 %v603, %v771
        %v774 = vadd.f32 %v604, %v772
        %s775 = scalar_lea.vmem %s246, 24
        %v776 = vld [vmem:[%s775] sm:$0xff]
        %777 = vmatprep.subr.mxu0 0.0
        %778 = vmatpush1.msra.mxu0 0.0
        %779 = vmatprep.subr.mxu0 0.0
        %780 = vmatpush1.msra.mxu0 0.0
        %781 = vmatprep.subr.mxu0 0.0
        %782 = vmatpush1.msra.mxu0 0.0
        %783 = vmatprep.subr.mxu0 0.0
        %784 = vmatpush1.msra.mxu0 0.0
        %785 = vmatprep.subr.mxu0 0.0
        %786 = vmatpush1.msra.mxu0 0.0
        %787 = vmatprep.subr.mxu0 0.0
        %788 = vmatpush1.msra.mxu0 0.0
        %789 = vmatprep.subr.mxu0 0.0
        %790 = vmatpush1.msra.mxu0 0.0
        %791 = vmatprep.subr.mxu0 0.0
        %792 = vmatpush1.msra.mxu0 0.0
        %793 = vmatprep.subr.mxu0 0.0
        %794 = vmatpush1.msra.mxu0 0.0
        %795 = vmatprep.subr.mxu0 0.0
        %796 = vmatpush1.msra.mxu0 0.0
        %797 = vmatprep.subr.mxu0 0.0
        %798 = vmatpush1.msra.mxu0 0.0
        %799 = vmatprep.subr.mxu0 0.0
        %800 = vmatpush1.msra.mxu0 0.0
        %801 = vmatprep.subr.mxu0 0.0
        %802 = vmatpush1.msra.mxu0 0.0
        %803 = vmatprep.subr.mxu0 0.0
        %804 = vmatpush1.msra.mxu0 0.0
        %805 = vmatprep.subr.mxu0 0.0
        %806 = vmatpush1.msra.mxu0 0.0
        %807 = vmatprep.subr.mxu0 0.0
        %808 = vmatpush1.msra.mxu0 %v776
        %809 = vmatprep.subr.mxu0 0.0
        %810 = vmatpush2.msra.mxu0 0.0
        %811 = vmatprep.subr.mxu0 0.0
        %812 = vmatpush2.msra.mxu0 0.0
        %813 = vmatprep.subr.mxu0 0.0
        %814 = vmatpush2.msra.mxu0 0.0
        %815 = vmatprep.subr.mxu0 0.0
        %816 = vmatpush2.msra.mxu0 0.0
        %817 = vmatprep.subr.mxu0 0.0
        %818 = vmatpush2.msra.mxu0 0.0
        %819 = vmatprep.subr.mxu0 0.0
        %820 = vmatpush2.msra.mxu0 0.0
        %821 = vmatprep.subr.mxu0 0.0
        %822 = vmatpush2.msra.mxu0 0.0
        %823 = vmatprep.subr.mxu0 0.0
        %824 = vmatpush2.msra.mxu0 0.0
        %825 = vmatprep.subr.mxu0 0.0
        %826 = vmatpush2.msra.mxu0 0.0
        %827 = vmatprep.subr.mxu0 0.0
        %828 = vmatpush2.msra.mxu0 0.0
        %829 = vmatprep.subr.mxu0 0.0
        %830 = vmatpush2.msra.mxu0 0.0
        %831 = vmatprep.subr.mxu0 0.0
        %832 = vmatpush2.msra.mxu0 0.0
        %833 = vmatprep.subr.mxu0 0.0
        %834 = vmatpush2.msra.mxu0 0.0
        %835 = vmatprep.subr.mxu0 0.0
        %836 = vmatpush2.msra.mxu0 0.0
        %837 = vmatprep.subr.mxu0 0.0
        %838 = vmatpush2.msra.mxu0 0.0
        %839 = vmatprep.subr.mxu0 0.0
        %840 = vmatpush2.msra.mxu0 0.0
        %841 = vmatprep.mubr.f32.mxu0 0.0
        %842 = vmatmul.mubr.f32.gmra.mxu0 %v262
        %v843 = vpop.f32.mrf.mxu0
        %v844 = vadd.f32 0.0, %v843
        %v845 = vpop.f32.mrf.mxu0
        %846 = vmatprep.mubr.f32.mxu0 0.0
        %847 = vmatmul.mubr.f32.gmra.mxu0 %v265
        %v848 = vpop.f32.mrf.mxu0
        %v849 = vadd.f32 0.0, %v848
        %v850 = vpop.f32.mrf.mxu0
        %851 = vdwg.mxu0
        %v853 = vsel %vm260, %v844, 0
        %v856 = vsel %vm260, %v849, 0
        %858 = vmatprep.subr.mxu0 0.0
        %859 = vmatpush1.msra.mxu0 0.0
        %860 = vmatprep.subr.mxu0 0.0
        %861 = vmatpush1.msra.mxu0 0.0
        %862 = vmatprep.subr.mxu0 0.0
        %863 = vmatpush1.msra.mxu0 0.0
        %864 = vmatprep.subr.mxu0 0.0
        %865 = vmatpush1.msra.mxu0 0.0
        %866 = vmatprep.subr.mxu0 0.0
        %867 = vmatpush1.msra.mxu0 0.0
        %868 = vmatprep.subr.mxu0 0.0
        %869 = vmatpush1.msra.mxu0 0.0
        %870 = vmatprep.subr.mxu0 0.0
        %871 = vmatpush1.msra.mxu0 0.0
        %872 = vmatprep.subr.mxu0 0.0
        %873 = vmatpush1.msra.mxu0 0.0
        %874 = vmatprep.subr.mxu0 0.0
        %875 = vmatpush1.msra.mxu0 0.0
        %876 = vmatprep.subr.mxu0 0.0
        %877 = vmatpush1.msra.mxu0 0.0
        %878 = vmatprep.subr.mxu0 0.0
        %879 = vmatpush1.msra.mxu0 0.0
        %880 = vmatprep.subr.mxu0 0.0
        %881 = vmatpush1.msra.mxu0 0.0
        %882 = vmatprep.subr.mxu0 0.0
        %883 = vmatpush1.msra.mxu0 0.0
        %884 = vmatprep.subr.mxu0 0.0
        %885 = vmatpush1.msra.mxu0 0.0
        %886 = vmatprep.subr.mxu0 0.0
        %887 = vmatpush1.msra.mxu0 0.0
        %888 = vmatprep.subr.mxu0 0.0
        %889 = vmatpush1.msra.mxu0 %v254
        %890 = vmatprep.subr.mxu0 0.0
        %891 = vmatpush2.msra.mxu0 0.0
        %892 = vmatprep.subr.mxu0 0.0
        %893 = vmatpush2.msra.mxu0 0.0
        %894 = vmatprep.subr.mxu0 0.0
        %895 = vmatpush2.msra.mxu0 0.0
        %896 = vmatprep.subr.mxu0 0.0
        %897 = vmatpush2.msra.mxu0 0.0
        %898 = vmatprep.subr.mxu0 0.0
        %899 = vmatpush2.msra.mxu0 0.0
        %900 = vmatprep.subr.mxu0 0.0
        %901 = vmatpush2.msra.mxu0 0.0
        %902 = vmatprep.subr.mxu0 0.0
        %903 = vmatpush2.msra.mxu0 0.0
        %904 = vmatprep.subr.mxu0 0.0
        %905 = vmatpush2.msra.mxu0 0.0
        %906 = vmatprep.subr.mxu0 0.0
        %907 = vmatpush2.msra.mxu0 0.0
        %908 = vmatprep.subr.mxu0 0.0
        %909 = vmatpush2.msra.mxu0 0.0
        %910 = vmatprep.subr.mxu0 0.0
        %911 = vmatpush2.msra.mxu0 0.0
        %912 = vmatprep.subr.mxu0 0.0
        %913 = vmatpush2.msra.mxu0 0.0
        %914 = vmatprep.subr.mxu0 0.0
        %915 = vmatpush2.msra.mxu0 0.0
        %916 = vmatprep.subr.mxu0 0.0
        %917 = vmatpush2.msra.mxu0 0.0
        %918 = vmatprep.subr.mxu0 0.0
        %919 = vmatpush2.msra.mxu0 0.0
        %920 = vmatprep.subr.mxu0 0.0
        %921 = vmatpush2.msra.mxu0 0.0
        %922 = vmatprep.mubr.f32.mxu0 0.0
        %923 = vmatmul.mubr.f32.gmra.mxu0 %v853
        %v924 = vpop.f32.mrf.mxu0
        %v925 = vadd.f32 0.0, %v924
        %v926 = vpop.f32.mrf.mxu0
        %927 = vmatprep.mubr.f32.mxu0 0.0
        %928 = vmatmul.mubr.f32.gmra.mxu0 %v856
        %v929 = vpop.f32.mrf.mxu0
        %v930 = vadd.f32 0.0, %v929
        %v931 = vpop.f32.mrf.mxu0
        %932 = vdwg.mxu0
        %s933 = sld [smem:[#allocation2 + $0x3]]
        %v934 = vstv %s933
        %v935 = vmul.f32 %v934, %v925
        %v936 = vmul.f32 %v934, %v930
        %v937 = vadd.f32 %v767, %v935
        %v938 = vadd.f32 %v768, %v936
        %s939 = sld [smem:[#allocation2 + $0x7]]
        %v940 = vstv %s939
        %v941 = vmul.f32 %v940, %v925
        %v942 = vmul.f32 %v940, %v930
        %v943 = vadd.f32 %v773, %v941
        %v944 = vadd.f32 %v774, %v942
        %v945 = vmax.f32 %v937, 0.0
        %v946 = vmax.f32 %v938, 0.0
        %vm947 = vcmask 130048
        %948 = vst.msk [vmem:[%s251] sm:$0xff] %vm947, %v945
        %949 = vst.msk [vmem:[%s251 + $0x8] sm:$0xff] %vm947, %v946
        %v950 = vmax.f32 %v943, 0.0
        %v951 = vmax.f32 %v944, 0.0
        %s952 = scalar_lea.vmem %s251, 16
        %953 = vst.msk [vmem:[%s952] sm:$0xff] %vm947, %v950
        %954 = vst.msk [vmem:[%s952 + $0x8] sm:$0xff] %vm947, %v951
        %p955 = scmp.lt.s32.totalorder %s18, 1
        %s956 = scalar_select %p955, %s18, 1
        %s957 = smul.addr %s956, 4
        %s958 = smul.addr %s957, 8
        %s959 = scalar_lea.vmem %s5, %s958
        // Predicated region
        $region49: #{up_forward.3} parent=39 // pred_check
          %p960 = pneg %p146
        $region50: #{up_forward.3} parent=39 // pred_check_branch
          %962 = sbr.rel (%p960) target = $region52
        $region51: #{up_forward.3} parent=39 // pred_region
          _
        $region52: #{up_forward.3} parent=39 // pred_fallthru
          _
      $region40: #{up_forward.3} parent=5 // pred_fallthru
        _
      %p963 = scmp.le.s32.totalorder 2, %s13
      // Predicated region
      $region53: #{up_forward.3} parent=5 // pred_check
        %p964 = pneg %p963
      $region54: #{up_forward.3} parent=5 // pred_check_branch
        %966 = sbr.rel (%p964) target = $region56
      $region55: #{up_forward.3} parent=5 // pred_region
        %s967 = ssub.s32 %s13, 2
        // Predicated region
        $region57: #{up_forward.3} parent=55 // pred_check
          %p968 = pneg %p152
        $region58: #{up_forward.3} parent=55 // pred_check_branch
          %970 = sbr.rel (%p968) target = $region60
        $region59: #{up_forward.3} parent=55 // pred_region
          %p971 = scmp.lt.s32.totalorder %s19, 1
          %s972 = scalar_select %p971, %s19, 1
          %s973 = smul.addr %s972, 4
          %s974 = smul.addr %s973, 8
          %s975 = scalar_lea.vmem %s5, %s974
        $region60: #{up_forward.3} parent=55 // pred_fallthru
          _
      $region56: #{up_forward.3} parent=5 // pred_fallthru
        _
    $region6: #{up_forward.3} parent=1 // loop_footer
      %s17 = sadd.s32 1, %s13
    $region7: #{up_forward.3} parent=1 // loop_footer_branch
      %12 = sbr.rel target = $region3
    $region8: #{up_forward.3} parent=1 // loop_exit
      _
    %976 = vsyncpa [#allocation3], 1
    %s977 = scalar_lea.sflag [#allocation3], 1
    %978 = vsyncpa %s977, 1
    %979 = vsyncpa [#allocation5], 1

// kernel: up_forward.4
$region0: #{up_forward.4}
  #allocation0 [shape = 'u32[]', space=smem, size = 0x4, offset = 0x4, fixed_abs, tag = 'smem constant byte address 0x4 - core index']
  #allocation1 [shape = 'u32[144,128]{1,0:T(1,128)}', space=vmem, size = 0x12000, scoped, tag = 'internal scratch']
  %s0 = inlined_call_operand.vmem [shape: f32[108], index: 0, kind: input, shape index: {}]
  %s1 = inlined_call_operand.vmem [shape: f32[3], index: 1, kind: input, shape index: {}]
  %s2 = inlined_call_operand.vmem [shape: f32[2,4,18,18], index: 2, kind: input, shape index: {}]
  %s3 = inlined_call_operand.vmem [shape: f32[2,3,16,16], index: 3, kind: output, shape index: {}]
  %s4 = sld [smem:[#allocation0]]
  $region53: #{up_forward.4} parent=0
    _
  %s6 = ssub.s32 1, %s4
  %s7 = scalar_select 0, %s6, %s4
  $region1: #{up_forward.4} parent=0
    #allocation2 [shape = 'u8[512]{0}', space=smem, size = 0x200, scoped, tag = 'input window, operand 0, single buffered']
    #allocation3 [shape = 's32[2]{0}', space=sflag, size = 0x8, scoped, tag = 'scoped memory for up_forward.4']
    #allocation4 [shape = 'u8[512]{0}', space=smem, size = 0x200, scoped, tag = 'input window, operand 1, single buffered']
    #allocation5 [shape = 's32[1]{0}', space=sflag, size = 0x4, scoped, tag = 'scoped memory for up_forward.4']
    %8 = vsyncpa [#allocation3], 0
    %9 = vsyncpa [#allocation5], 0
    loop: start=0, step=1, limit=4
    $region2: #{up_forward.4} parent=1 // loop_pre_header
      _
    $region3: #{up_forward.4} parent=1 // loop_header
      %s11 = sphi 0, %s15
      %p12 = scmp.ge.s32.totalorder %s11, 4
      %s19 = sphi 0, %s19
      %s21 = sphi 0, %s19
      %s22 = sphi 0, %s21
      %s36 = sphi 0, %s22
      %s40 = sphi 0, %s40
      %s42 = sphi 0, %s40
      %s43 = sphi 0, %s42
      %s57 = sphi 0, %s43
      %s63 = sphi 0, %s65
      %s66 = sphi 0, %s63
      %s67 = sphi 0, %s66
      %s83 = sphi 0, %s67
      %s89 = sphi 0, %s91
      %s92 = sphi 0, %s89
      %s93 = sphi 0, %s92
      %s109 = sphi 0, %s93
    $region4: #{up_forward.4} parent=1 // loop_header_branch
      %14 = sbr.rel (%p12) target = $region8
    $region5: #{up_forward.4} parent=1 // loop_body
      %s16 = ssub.s32 %s11, 1
      %s17 = ssub.s32 %s11, 2
      %s18 = sadd.s32 %s11, 1
      %s20 = sadd.s32 %s19, 1
      %p23 = scmp.eq.s32.totalorder %s11, 1
      %p24 = scmp.ne.s32.totalorder %s19, %s21
      %p25 = scmp.eq.s32.totalorder %s11, 0
      %p26 = por %p24, %p25
      %p27 = scmp.ne.s32.totalorder %s19, %s21
      %p28 = scmp.eq.s32.totalorder %s16, 1
      %p29 = por %p27, %p28
      %p30 = scmp.ne.s32.totalorder %s21, %s22
      %p31 = scmp.eq.s32.totalorder %s16, 0
      %p32 = por %p30, %p31
      %p33 = scmp.ne.s32.totalorder %s21, %s22
      %p34 = scmp.eq.s32.totalorder %s17, 1
      %p35 = por %p33, %p34
      %p37 = scmp.ne.s32.totalorder %s22, %s36
      %p38 = scmp.eq.s32.totalorder %s17, 0
      %p39 = por %p37, %p38
      %s41 = sadd.s32 %s40, 1
      %p44 = scmp.eq.s32.totalorder %s11, 1
      %p45 = scmp.ne.s32.totalorder %s40, %s42
      %p46 = scmp.eq.s32.totalorder %s11, 0
      %p47 = por %p45, %p46
      %p48 = scmp.ne.s32.totalorder %s40, %s42
      %p49 = scmp.eq.s32.totalorder %s16, 1
      %p50 = por %p48, %p49
      %p51 = scmp.ne.s32.totalorder %s42, %s43
      %p52 = scmp.eq.s32.totalorder %s16, 0
      %p53 = por %p51, %p52
      %p54 = scmp.ne.s32.totalorder %s42, %s43
      %p55 = scmp.eq.s32.totalorder %s17, 1
      %p56 = por %p54, %p55
      %p58 = scmp.ne.s32.totalorder %s43, %s57
      %p59 = scmp.eq.s32.totalorder %s17, 0
      %p60 = por %p58, %p59
      %s61 = ssub.s32 %s11, %s18
      %p62 = scmp.eq.s32.totalorder %s61, 0
      %s64 = sadd.s32 %s63, 1
      %s65 = scalar_select %p62, %s63, %s64
      %p68 = pneg %p62
      %p69 = scmp.eq.s32.totalorder %s11, 1
      %p70 = por %p68, %p69
      %p71 = scmp.ne.s32.totalorder %s63, %s66
      %p72 = scmp.eq.s32.totalorder %s11, 0
      %p73 = por %p71, %p72
      %p74 = scmp.ne.s32.totalorder %s63, %s66
      %p75 = scmp.eq.s32.totalorder %s16, 1
      %p76 = por %p74, %p75
      %p77 = scmp.ne.s32.totalorder %s66, %s67
      %p78 = scmp.eq.s32.totalorder %s16, 0
      %p79 = por %p77, %p78
      %p80 = scmp.ne.s32.totalorder %s66, %s67
      %p81 = scmp.eq.s32.totalorder %s17, 1
      %p82 = por %p80, %p81
      %p84 = scmp.ne.s32.totalorder %s67, %s83
      %p85 = scmp.eq.s32.totalorder %s17, 0
      %p86 = por %p84, %p85
      %s87 = ssub.s32 %s11, %s18
      %p88 = scmp.eq.s32.totalorder %s87, 0
      %s90 = sadd.s32 %s89, 1
      %s91 = scalar_select %p88, %s89, %s90
      %p94 = pneg %p88
      %p95 = scmp.eq.s32.totalorder %s11, 1
      %p96 = por %p94, %p95
      %p97 = scmp.ne.s32.totalorder %s89, %s92
      %p98 = scmp.eq.s32.totalorder %s11, 0
      %p99 = por %p97, %p98
      %p100 = scmp.ne.s32.totalorder %s89, %s92
      %p101 = scmp.eq.s32.totalorder %s16, 1
      %p102 = por %p100, %p101
      %p103 = scmp.ne.s32.totalorder %s92, %s93
      %p104 = scmp.eq.s32.totalorder %s16, 0
      %p105 = por %p103, %p104
      %p106 = scmp.ne.s32.totalorder %s92, %s93
      %p107 = scmp.eq.s32.totalorder %s17, 1
      %p108 = por %p106, %p107
      %p110 = scmp.ne.s32.totalorder %s93, %s109
      %p111 = scmp.eq.s32.totalorder %s17, 0
      %p112 = por %p110, %p111
      %p113 = scmp.le.s32.totalorder 1, %s11
      %p114 = scmp.lt.s32.totalorder %s11, 3
      %p115 = pnand %p113, %p114
      %p116 = pneg %p115
      // Predicated region
      $region9: #{up_forward.4} parent=5 // pred_check
        _
      $region10: #{up_forward.4} parent=5 // pred_check_branch
        %118 = sbr.rel (%p115) target = $region12
      $region11: #{up_forward.4} parent=5 // pred_region
        %s119 = ssub.s32 %s11, 1
        // Predicated region
        $region13: #{up_forward.4} parent=11 // pred_check
          %p120 = pneg %p32
        $region14: #{up_forward.4} parent=11 // pred_check_branch
          %122 = sbr.rel (%p120) target = $region16
        $region15: #{up_forward.4} parent=11 // pred_region
          %s124 = ssub.s32 16, 16
          %125 = vsyncadd [#allocation3], %s124
          %s127 = sshll.u32 %s0, 4
          %s128 = int_to_ptr.vmem [resolvable:$true] %s127
          %130 = dma.vmem_to_smem %s128, 16, [#allocation2], [#allocation3]
        $region16: #{up_forward.4} parent=11 // pred_fallthru
          _
        // Predicated region
        $region17: #{up_forward.4} parent=11 // pred_check
          %p131 = pneg %p53
        $region18: #{up_forward.4} parent=11 // pred_check_branch
          %133 = sbr.rel (%p131) target = $region20
        $region19: #{up_forward.4} parent=11 // pred_region
          %s135 = ssub.s32 16, 16
          %136 = vsyncadd [#allocation5], %s135
          %s138 = sshll.u32 %s1, 4
          %s139 = int_to_ptr.vmem [resolvable:$true] %s138
          %141 = dma.vmem_to_smem %s139, 16, [#allocation4], [#allocation5]
        $region20: #{up_forward.4} parent=11 // pred_fallthru
          _
      $region12: #{up_forward.4} parent=5 // pred_fallthru
        _
      %p142 = scmp.lt.s32.totalorder %s11, 2
      // Predicated region
      $region21: #{up_forward.4} parent=5 // pred_check
        %p143 = pneg %p142
      $region22: #{up_forward.4} parent=5 // pred_check_branch
        %145 = sbr.rel (%p143) target = $region24
      $region23: #{up_forward.4} parent=5 // pred_region
        // Predicated region
        $region25: #{up_forward.4} parent=23 // pred_check
          %p146 = pneg %p73
        $region26: #{up_forward.4} parent=23 // pred_check_branch
          %148 = sbr.rel (%p146) target = $region28
        $region27: #{up_forward.4} parent=23 // pred_region
          %p149 = scmp.lt.s32.totalorder %s11, 1
          %s150 = scalar_select %p149, %s11, 1
          %s151 = smul.addr %s150, 12
          %s152 = smul.addr %s151, 8
          %s153 = scalar_lea.vmem %s2, %s152
        $region28: #{up_forward.4} parent=23 // pred_fallthru
          _
      $region24: #{up_forward.4} parent=5 // pred_fallthru
        _
      %p154 = scmp.le.s32.totalorder 1, %s11
      %p155 = scmp.lt.s32.totalorder %s11, 3
      %p156 = pnand %p154, %p155
      %p157 = pneg %p156
      // Predicated region
      $region29: #{up_forward.4} parent=5 // pred_check
        _
      $region30: #{up_forward.4} parent=5 // pred_check_branch
        %159 = sbr.rel (%p156) target = $region32
      $region31: #{up_forward.4} parent=5 // pred_region
        %s160 = ssub.s32 %s11, 1
        // Predicated region
        $region33: #{up_forward.4} parent=31 // pred_check
          %p161 = pneg %p32
        $region34: #{up_forward.4} parent=31 // pred_check_branch
          %163 = sbr.rel (%p161) target = $region36
        $region35: #{up_forward.4} parent=31 // pred_region
          %164 = dma.done [#allocation3], 16
        $region36: #{up_forward.4} parent=31 // pred_fallthru
          _
        // Predicated region
        $region37: #{up_forward.4} parent=31 // pred_check
          %p165 = pneg %p53
        $region38: #{up_forward.4} parent=31 // pred_check_branch
          %167 = sbr.rel (%p165) target = $region40
        $region39: #{up_forward.4} parent=31 // pred_region
          %168 = dma.done [#allocation5], 16
        $region40: #{up_forward.4} parent=31 // pred_fallthru
          _
        %169 = sfence
        %p170 = pneg %p32
        %p171 = pneg %p29
        %p172 = pneg %p53
        %p173 = pneg %p50
        %p174 = scmp.lt.s32.totalorder %s16, 1
        %s175 = scalar_select %p174, %s16, 1
        %s176 = smul.addr %s175, 12
        %s177 = smul.addr %s176, 8
        %s178 = scalar_lea.vmem %s2, %s177
        %p179 = pneg %p79
        %p180 = pneg %p76
        %p181 = pneg %p105
        %p182 = pneg %p102
        %p183 = scmp.lt.s32.totalorder %s16, 1
        %s184 = scalar_select %p183, %s16, 1
        %s185 = smul.addr %s184, 6
        %s186 = smul.addr %s185, 8
        %s187 = scalar_lea.vmem %s3, %s186
        %p188 = scmp.lt.s32.totalorder %s16, 1
        %s189 = scalar_select %p188, %s16, 1
        %s190 = smul.addr %s189, 12
        %s191 = smul.addr %s190, 8
        %s192 = scalar_lea.vmem %s2, %s191
        %p193 = scmp.lt.s32.totalorder %s16, 1
        %s194 = scalar_select %p193, %s16, 1
        %s195 = smul.addr %s194, 6
        %s196 = smul.addr %s195, 8
        %s197 = scalar_lea.vmem %s3, %s196
        %v198 = vld [vmem:[%s192] sm:$0xff]
        %v199 = vld [vmem:[%s192 + $0x8] sm:$0xff]
        %v200 = vld [vmem:[%s192 + $0x10] sm:$0x3]
        %s201 = scalar_lea.vmem %s192, 24
        %v202 = vld [vmem:[%s201] sm:$0xff]
        %v203 = vld [vmem:[%s201 + $0x8] sm:$0xff]
        %v204 = vld [vmem:[%s201 + $0x10] sm:$0x3]
        %s205 = scalar_lea.vmem %s192, 48
        %v206 = vld [vmem:[%s205] sm:$0xff]
        %v207 = vld [vmem:[%s205 + $0x8] sm:$0xff]
        %v208 = vld [vmem:[%s205 + $0x10] sm:$0x3]
        %s209 = scalar_lea.vmem %s192, 72
        %v210 = vld [vmem:[%s209] sm:$0xff]
        %v211 = vld [vmem:[%s209 + $0x8] sm:$0xff]
        %v212 = vld [vmem:[%s209 + $0x10] sm:$0x3]
        %s213 = sld [smem:[#allocation4]]
        %v214 = vstv %s213
        %s215 = sld [smem:[#allocation2]]
        %v216 = vstv %s215
        %v217 = vmul.f32 %v216, %v198
        %v218 = vmul.f32 %v216, %v199
        %v219 = vadd.f32 %v214, %v217
        %v220 = vadd.f32 %v214, %v218
        %s221 = sld [smem:[#allocation2 + $0x1]]
        %v222 = vstv %s221
        %v223 = vmul.f32 %v222, %v198
        %v224 = vmul.f32 %v222, %v199
        %227 = vrot.lane.b32.xlu0 %v223, 127
        %v228 = vpop.permute.xlu0 %227
        %229 = vrot.lane.b32.xlu0 %v224, 127
        %v230 = vpop.permute.xlu0 %229
        %v233 = vadd.f32 %v219, %v228
        %v234 = vadd.f32 %v220, %v230
        %s235 = sld [smem:[#allocation2 + $0x2]]
        %v236 = vstv %s235
        %v237 = vmul.f32 %v236, %v198
        %v238 = vmul.f32 %v236, %v199
        %241 = vrot.lane.b32.xlu0 %v237, 126
        %v242 = vpop.permute.xlu0 %241
        %243 = vrot.lane.b32.xlu0 %v238, 126
        %v244 = vpop.permute.xlu0 %243
        %v247 = vadd.f32 %v233, %v242
        %v248 = vadd.f32 %v234, %v244
        %s249 = sld [smem:[#allocation2 + $0x3]]
        %v250 = vstv %s249
        %v251 = vmul.f32 %v250, %v198
        %v252 = vmul.f32 %v250, %v199
        %v253 = vmul.f32 %v250, %v200
        %vm257 = vcmask 1046528
        %v258 = vrot.slane %v251, 1
        %v259 = vrot.slane %v252, 1
        %v260 = vsel %vm257, %v258, %v259
        %v261 = vrot.slane %v253, 1
        %v262 = vsel %vm257, %v259, %v261
        %v265 = vadd.f32 %v247, %v260
        %v266 = vadd.f32 %v248, %v262
        %s267 = sld [smem:[#allocation2 + $0x4]]
        %v268 = vstv %s267
        %v269 = vmul.f32 %v268, %v198
        %v270 = vmul.f32 %v268, %v199
        %v271 = vmul.f32 %v268, %v200
        %v275 = vrot.slane %v269, 1
        %v276 = vrot.slane %v270, 1
        %v277 = vsel %vm257, %v275, %v276
        %v278 = vrot.slane %v271, 1
        %v279 = vsel %vm257, %v276, %v278
        %280 = vrot.lane.b32.xlu0 %v277, 127
        %v281 = vpop.permute.xlu0 %280
        %282 = vrot.lane.b32.xlu0 %v279, 127
        %v283 = vpop.permute.xlu0 %282
        %v286 = vadd.f32 %v265, %v281
        %v287 = vadd.f32 %v266, %v283
        %s288 = sld [smem:[#allocation2 + $0x5]]
        %v289 = vstv %s288
        %v290 = vmul.f32 %v289, %v198
        %v291 = vmul.f32 %v289, %v199
        %v292 = vmul.f32 %v289, %v200
        %v296 = vrot.slane %v290, 1
        %v297 = vrot.slane %v291, 1
        %v298 = vsel %vm257, %v296, %v297
        %v299 = vrot.slane %v292, 1
        %v300 = vsel %vm257, %v297, %v299
        %301 = vrot.lane.b32.xlu0 %v298, 126
        %v302 = vpop.permute.xlu0 %301
        %303 = vrot.lane.b32.xlu0 %v300, 126
        %v304 = vpop.permute.xlu0 %303
        %v307 = vadd.f32 %v286, %v302
        %v308 = vadd.f32 %v287, %v304
        %s309 = sld [smem:[#allocation2 + $0x6]]
        %v310 = vstv %s309
        %v311 = vmul.f32 %v310, %v198
        %v312 = vmul.f32 %v310, %v199
        %v313 = vmul.f32 %v310, %v200
        %vm317 = vcmask 1045504
        %v318 = vrot.slane %v311, 2
        %v319 = vrot.slane %v312, 2
        %v320 = vsel %vm317, %v318, %v319
        %v321 = vrot.slane %v313, 2
        %v322 = vsel %vm317, %v319, %v321
        %v325 = vadd.f32 %v307, %v320
        %v326 = vadd.f32 %v308, %v322
        %s327 = sld [smem:[#allocation2 + $0x7]]
        %v328 = vstv %s327
        %v329 = vmul.f32 %v328, %v198
        %v330 = vmul.f32 %v328, %v199
        %v331 = vmul.f32 %v328, %v200
        %v335 = vrot.slane %v329, 2
        %v336 = vrot.slane %v330, 2
        %v337 = vsel %vm317, %v335, %v336
        %v338 = vrot.slane %v331, 2
        %v339 = vsel %vm317, %v336, %v338
        %340 = vrot.lane.b32.xlu0 %v337, 127
        %v341 = vpop.permute.xlu0 %340
        %342 = vrot.lane.b32.xlu0 %v339, 127
        %v343 = vpop.permute.xlu0 %342
        %v346 = vadd.f32 %v325, %v341
        %v347 = vadd.f32 %v326, %v343
        %s348 = sld [smem:[#allocation2 + $0x8]]
        %v349 = vstv %s348
        %v350 = vmul.f32 %v349, %v198
        %v351 = vmul.f32 %v349, %v199
        %v352 = vmul.f32 %v349, %v200
        %v356 = vrot.slane %v350, 2
        %v357 = vrot.slane %v351, 2
        %v358 = vsel %vm317, %v356, %v357
        %v359 = vrot.slane %v352, 2
        %v360 = vsel %vm317, %v357, %v359
        %361 = vrot.lane.b32.xlu0 %v358, 126
        %v362 = vpop.permute.xlu0 %361
        %363 = vrot.lane.b32.xlu0 %v360, 126
        %v364 = vpop.permute.xlu0 %363
        %v367 = vadd.f32 %v346, %v362
        %v368 = vadd.f32 %v347, %v364
        %s369 = sld [smem:[#allocation2 + $0x9]]
        %v370 = vstv %s369
        %v371 = vmul.f32 %v370, %v202
        %v372 = vmul.f32 %v370, %v203
        %v373 = vadd.f32 %v367, %v371
        %v374 = vadd.f32 %v368, %v372
        %s375 = sld [smem:[#allocation2 + $0xa]]
        %v376 = vstv %s375
        %v377 = vmul.f32 %v376, %v202
        %v378 = vmul.f32 %v376, %v203
        %381 = vrot.lane.b32.xlu0 %v377, 127
        %v382 = vpop.permute.xlu0 %381
        %383 = vrot.lane.b32.xlu0 %v378, 127
        %v384 = vpop.permute.xlu0 %383
        %v387 = vadd.f32 %v373, %v382
        %v388 = vadd.f32 %v374, %v384
        %s389 = sld [smem:[#allocation2 + $0xb]]
        %v390 = vstv %s389
        %v391 = vmul.f32 %v390, %v202
        %v392 = vmul.f32 %v390, %v203
        %395 = vrot.lane.b32.xlu0 %v391, 126
        %v396 = vpop.permute.xlu0 %395
        %397 = vrot.lane.b32.xlu0 %v392, 126
        %v398 = vpop.permute.xlu0 %397
        %v401 = vadd.f32 %v387, %v396
        %v402 = vadd.f32 %v388, %v398
        %s403 = sld [smem:[#allocation2 + $0xc]]
        %v404 = vstv %s403
        %v405 = vmul.f32 %v404, %v202
        %v406 = vmul.f32 %v404, %v203
        %v407 = vmul.f32 %v404, %v204
        %v411 = vrot.slane %v405, 1
        %v412 = vrot.slane %v406, 1
        %v413 = vsel %vm257, %v411, %v412
        %v414 = vrot.slane %v407, 1
        %v415 = vsel %vm257, %v412, %v414
        %v418 = vadd.f32 %v401, %v413
        %v419 = vadd.f32 %v402, %v415
        %s420 = sld [smem:[#allocation2 + $0xd]]
        %v421 = vstv %s420
        %v422 = vmul.f32 %v421, %v202
        %v423 = vmul.f32 %v421, %v203
        %v424 = vmul.f32 %v421, %v204
        %v428 = vrot.slane %v422, 1
        %v429 = vrot.slane %v423, 1
        %v430 = vsel %vm257, %v428, %v429
        %v431 = vrot.slane %v424, 1
        %v432 = vsel %vm257, %v429, %v431
        %433 = vrot.lane.b32.xlu0 %v430, 127
        %v434 = vpop.permute.xlu0 %433
        %435 = vrot.lane.b32.xlu0 %v432, 127
        %v436 = vpop.permute.xlu0 %435
        %v439 = vadd.f32 %v418, %v434
        %v440 = vadd.f32 %v419, %v436
        %s441 = sld [smem:[#allocation2 + $0xe]]
        %v442 = vstv %s441
        %v443 = vmul.f32 %v442, %v202
        %v444 = vmul.f32 %v442, %v203
        %v445 = vmul.f32 %v442, %v204
        %v449 = vrot.slane %v443, 1
        %v450 = vrot.slane %v444, 1
        %v451 = vsel %vm257, %v449, %v450
        %v452 = vrot.slane %v445, 1
        %v453 = vsel %vm257, %v450, %v452
        %454 = vrot.lane.b32.xlu0 %v451, 126
        %v455 = vpop.permute.xlu0 %454
        %456 = vrot.lane.b32.xlu0 %v453, 126
        %v457 = vpop.permute.xlu0 %456
        %v460 = vadd.f32 %v439, %v455
        %v461 = vadd.f32 %v440, %v457
        %s462 = sld [smem:[#allocation2 + $0xf]]
        %v463 = vstv %s462
        %v464 = vmul.f32 %v463, %v202
        %v465 = vmul.f32 %v463, %v203
        %v466 = vmul.f32 %v463, %v204
        %v470 = vrot.slane %v464, 2
        %v471 = vrot.slane %v465, 2
        %v472 = vsel %vm317, %v470, %v471
        %v473 = vrot.slane %v466, 2
        %v474 = vsel %vm317, %v471, %v473
        %v477 = vadd.f32 %v460, %v472
        %v478 = vadd.f32 %v461, %v474
        %s479 = sld [smem:[#allocation2 + $0x10]]
        %v480 = vstv %s479
        %v481 = vmul.f32 %v480, %v202
        %v482 = vmul.f32 %v480, %v203
        %v483 = vmul.f32 %v480, %v204
        %v487 = vrot.slane %v481, 2
        %v488 = vrot.slane %v482, 2
        %v489 = vsel %vm317, %v487, %v488
        %v490 = vrot.slane %v483, 2
        %v491 = vsel %vm317, %v488, %v490
        %492 = vrot.lane.b32.xlu0 %v489, 127
        %v493 = vpop.permute.xlu0 %492
        %494 = vrot.lane.b32.xlu0 %v491, 127
        %v495 = vpop.permute.xlu0 %494
        %v498 = vadd.f32 %v477, %v493
        %v499 = vadd.f32 %v478, %v495
        %s500 = sld [smem:[#allocation2 + $0x11]]
        %v501 = vstv %s500
        %v502 = vmul.f32 %v501, %v202
        %v503 = vmul.f32 %v501, %v203
        %v504 = vmul.f32 %v501, %v204
        %v508 = vrot.slane %v502, 2
        %v509 = vrot.slane %v503, 2
        %v510 = vsel %vm317, %v508, %v509
        %v511 = vrot.slane %v504, 2
        %v512 = vsel %vm317, %v509, %v511
        %513 = vrot.lane.b32.xlu0 %v510, 126
        %v514 = vpop.permute.xlu0 %513
        %515 = vrot.lane.b32.xlu0 %v512, 126
        %v516 = vpop.permute.xlu0 %515
        %v519 = vadd.f32 %v498, %v514
        %v520 = vadd.f32 %v499, %v516
        %s521 = sld [smem:[#allocation2 + $0x12]]
        %v522 = vstv %s521
        %v523 = vmul.f32 %v522, %v206
        %v524 = vmul.f32 %v522, %v207
        %v525 = vadd.f32 %v519, %v523
        %v526 = vadd.f32 %v520, %v524
        %s527 = sld [smem:[#allocation2 + $0x13]]
        %v528 = vstv %s527
        %v529 = vmul.f32 %v528, %v206
        %v530 = vmul.f32 %v528, %v207
        %533 = vrot.lane.b32.xlu0 %v529, 127
        %v534 = vpop.permute.xlu0 %533
        %535 = vrot.lane.b32.xlu0 %v530, 127
        %v536 = vpop.permute.xlu0 %535
        %v539 = vadd.f32 %v525, %v534
        %v540 = vadd.f32 %v526, %v536
        %s541 = sld [smem:[#allocation2 + $0x14]]
        %v542 = vstv %s541
        %v543 = vmul.f32 %v542, %v206
        %v544 = vmul.f32 %v542, %v207
        %547 = vrot.lane.b32.xlu0 %v543, 126
        %v548 = vpop.permute.xlu0 %547
        %549 = vrot.lane.b32.xlu0 %v544, 126
        %v550 = vpop.permute.xlu0 %549
        %v553 = vadd.f32 %v539, %v548
        %v554 = vadd.f32 %v540, %v550
        %s555 = sld [smem:[#allocation2 + $0x15]]
        %v556 = vstv %s555
        %v557 = vmul.f32 %v556, %v206
        %v558 = vmul.f32 %v556, %v207
        %v559 = vmul.f32 %v556, %v208
        %v563 = vrot.slane %v557, 1
        %v564 = vrot.slane %v558, 1
        %v565 = vsel %vm257, %v563, %v564
        %v566 = vrot.slane %v559, 1
        %v567 = vsel %vm257, %v564, %v566
        %v570 = vadd.f32 %v553, %v565
        %v571 = vadd.f32 %v554, %v567
        %s572 = sld [smem:[#allocation2 + $0x16]]
        %v573 = vstv %s572
        %v574 = vmul.f32 %v573, %v206
        %v575 = vmul.f32 %v573, %v207
        %v576 = vmul.f32 %v573, %v208
        %v580 = vrot.slane %v574, 1
        %v581 = vrot.slane %v575, 1
        %v582 = vsel %vm257, %v580, %v581
        %v583 = vrot.slane %v576, 1
        %v584 = vsel %vm257, %v581, %v583
        %585 = vrot.lane.b32.xlu0 %v582, 127
        %v586 = vpop.permute.xlu0 %585
        %587 = vrot.lane.b32.xlu0 %v584, 127
        %v588 = vpop.permute.xlu0 %587
        %v591 = vadd.f32 %v570, %v586
        %v592 = vadd.f32 %v571, %v588
        %s593 = sld [smem:[#allocation2 + $0x17]]
        %v594 = vstv %s593
        %v595 = vmul.f32 %v594, %v206
        %v596 = vmul.f32 %v594, %v207
        %v597 = vmul.f32 %v594, %v208
        %v601 = vrot.slane %v595, 1
        %v602 = vrot.slane %v596, 1
        %v603 = vsel %vm257, %v601, %v602
        %v604 = vrot.slane %v597, 1
        %v605 = vsel %vm257, %v602, %v604
        %606 = vrot.lane.b32.xlu0 %v603, 126
        %v607 = vpop.permute.xlu0 %606
        %608 = vrot.lane.b32.xlu0 %v605, 126
        %v609 = vpop.permute.xlu0 %608
        %v612 = vadd.f32 %v591, %v607
        %v613 = vadd.f32 %v592, %v609
        %s614 = sld [smem:[#allocation2 + $0x18]]
        %v615 = vstv %s614
        %v616 = vmul.f32 %v615, %v206
        %v617 = vmul.f32 %v615, %v207
        %v618 = vmul.f32 %v615, %v208
        %v622 = vrot.slane %v616, 2
        %v623 = vrot.slane %v617, 2
        %v624 = vsel %vm317, %v622, %v623
        %v625 = vrot.slane %v618, 2
        %v626 = vsel %vm317, %v623, %v625
        %v629 = vadd.f32 %v612, %v624
        %v630 = vadd.f32 %v613, %v626
        %s631 = sld [smem:[#allocation2 + $0x19]]
        %v632 = vstv %s631
        %v633 = vmul.f32 %v632, %v206
        %v634 = vmul.f32 %v632, %v207
        %v635 = vmul.f32 %v632, %v208
        %v639 = vrot.slane %v633, 2
        %v640 = vrot.slane %v634, 2
        %v641 = vsel %vm317, %v639, %v640
        %v642 = vrot.slane %v635, 2
        %v643 = vsel %vm317, %v640, %v642
        %644 = vrot.lane.b32.xlu0 %v641, 127
        %v645 = vpop.permute.xlu0 %644
        %646 = vrot.lane.b32.xlu0 %v643, 127
        %v647 = vpop.permute.xlu0 %646
        %v650 = vadd.f32 %v629, %v645
        %v651 = vadd.f32 %v630, %v647
        %s652 = sld [smem:[#allocation2 + $0x1a]]
        %v653 = vstv %s652
        %v654 = vmul.f32 %v653, %v206
        %v655 = vmul.f32 %v653, %v207
        %v656 = vmul.f32 %v653, %v208
        %v660 = vrot.slane %v654, 2
        %v661 = vrot.slane %v655, 2
        %v662 = vsel %vm317, %v660, %v661
        %v663 = vrot.slane %v656, 2
        %v664 = vsel %vm317, %v661, %v663
        %665 = vrot.lane.b32.xlu0 %v662, 126
        %v666 = vpop.permute.xlu0 %665
        %667 = vrot.lane.b32.xlu0 %v664, 126
        %v668 = vpop.permute.xlu0 %667
        %v671 = vadd.f32 %v650, %v666
        %v672 = vadd.f32 %v651, %v668
        %s673 = sld [smem:[#allocation2 + $0x1b]]
        %v674 = vstv %s673
        %v675 = vmul.f32 %v674, %v210
        %v676 = vmul.f32 %v674, %v211
        %v677 = vadd.f32 %v671, %v675
        %v678 = vadd.f32 %v672, %v676
        %s679 = sld [smem:[#allocation2 + $0x1c]]
        %v680 = vstv %s679
        %v681 = vmul.f32 %v680, %v210
        %v682 = vmul.f32 %v680, %v211
        %685 = vrot.lane.b32.xlu0 %v681, 127
        %v686 = vpop.permute.xlu0 %685
        %687 = vrot.lane.b32.xlu0 %v682, 127
        %v688 = vpop.permute.xlu0 %687
        %v691 = vadd.f32 %v677, %v686
        %v692 = vadd.f32 %v678, %v688
        %s693 = sld [smem:[#allocation2 + $0x1d]]
        %v694 = vstv %s693
        %v695 = vmul.f32 %v694, %v210
        %v696 = vmul.f32 %v694, %v211
        %699 = vrot.lane.b32.xlu0 %v695, 126
        %v700 = vpop.permute.xlu0 %699
        %701 = vrot.lane.b32.xlu0 %v696, 126
        %v702 = vpop.permute.xlu0 %701
        %v705 = vadd.f32 %v691, %v700
        %v706 = vadd.f32 %v692, %v702
        %s707 = sld [smem:[#allocation2 + $0x1e]]
        %v708 = vstv %s707
        %v709 = vmul.f32 %v708, %v210
        %v710 = vmul.f32 %v708, %v211
        %v711 = vmul.f32 %v708, %v212
        %v715 = vrot.slane %v709, 1
        %v716 = vrot.slane %v710, 1
        %v717 = vsel %vm257, %v715, %v716
        %v718 = vrot.slane %v711, 1
        %v719 = vsel %vm257, %v716, %v718
        %v722 = vadd.f32 %v705, %v717
        %v723 = vadd.f32 %v706, %v719
        %s724 = sld [smem:[#allocation2 + $0x1f]]
        %v725 = vstv %s724
        %v726 = vmul.f32 %v725, %v210
        %v727 = vmul.f32 %v725, %v211
        %v728 = vmul.f32 %v725, %v212
        %v732 = vrot.slane %v726, 1
        %v733 = vrot.slane %v727, 1
        %v734 = vsel %vm257, %v732, %v733
        %v735 = vrot.slane %v728, 1
        %v736 = vsel %vm257, %v733, %v735
        %737 = vrot.lane.b32.xlu0 %v734, 127
        %v738 = vpop.permute.xlu0 %737
        %739 = vrot.lane.b32.xlu0 %v736, 127
        %v740 = vpop.permute.xlu0 %739
        %v743 = vadd.f32 %v722, %v738
        %v744 = vadd.f32 %v723, %v740
        %s745 = sld [smem:[#allocation2 + $0x20]]
        %v746 = vstv %s745
        %v747 = vmul.f32 %v746, %v210
        %v748 = vmul.f32 %v746, %v211
        %v749 = vmul.f32 %v746, %v212
        %v753 = vrot.slane %v747, 1
        %v754 = vrot.slane %v748, 1
        %v755 = vsel %vm257, %v753, %v754
        %v756 = vrot.slane %v749, 1
        %v757 = vsel %vm257, %v754, %v756
        %758 = vrot.lane.b32.xlu0 %v755, 126
        %v759 = vpop.permute.xlu0 %758
        %760 = vrot.lane.b32.xlu0 %v757, 126
        %v761 = vpop.permute.xlu0 %760
        %v764 = vadd.f32 %v743, %v759
        %v765 = vadd.f32 %v744, %v761
        %s766 = sld [smem:[#allocation2 + $0x21]]
        %v767 = vstv %s766
        %v768 = vmul.f32 %v767, %v210
        %v769 = vmul.f32 %v767, %v211
        %v770 = vmul.f32 %v767, %v212
        %v774 = vrot.slane %v768, 2
        %v775 = vrot.slane %v769, 2
        %v776 = vsel %vm317, %v774, %v775
        %v777 = vrot.slane %v770, 2
        %v778 = vsel %vm317, %v775, %v777
        %v781 = vadd.f32 %v764, %v776
        %v782 = vadd.f32 %v765, %v778
        %s783 = sld [smem:[#allocation2 + $0x22]]
        %v784 = vstv %s783
        %v785 = vmul.f32 %v784, %v210
        %v786 = vmul.f32 %v784, %v211
        %v787 = vmul.f32 %v784, %v212
        %v791 = vrot.slane %v785, 2
        %v792 = vrot.slane %v786, 2
        %v793 = vsel %vm317, %v791, %v792
        %v794 = vrot.slane %v787, 2
        %v795 = vsel %vm317, %v792, %v794
        %796 = vrot.lane.b32.xlu0 %v793, 127
        %v797 = vpop.permute.xlu0 %796
        %798 = vrot.lane.b32.xlu0 %v795, 127
        %v799 = vpop.permute.xlu0 %798
        %v802 = vadd.f32 %v781, %v797
        %v803 = vadd.f32 %v782, %v799
        %s804 = sld [smem:[#allocation2 + $0x23]]
        %v805 = vstv %s804
        %v806 = vmul.f32 %v805, %v210
        %v807 = vmul.f32 %v805, %v211
        %v808 = vmul.f32 %v805, %v212
        %v812 = vrot.slane %v806, 2
        %v813 = vrot.slane %v807, 2
        %v814 = vsel %vm317, %v812, %v813
        %v815 = vrot.slane %v808, 2
        %v816 = vsel %vm317, %v813, %v815
        %817 = vrot.lane.b32.xlu0 %v814, 126
        %v818 = vpop.permute.xlu0 %817
        %819 = vrot.lane.b32.xlu0 %v816, 126
        %v820 = vpop.permute.xlu0 %819
        %v823 = vadd.f32 %v802, %v818
        %v824 = vadd.f32 %v803, %v820
        %v825 = vmax.f32 %v823, 0.0
        %v826 = vmax.f32 %v824, 0.0
        %vm827 = vcmask 130048
        %828 = vst.msk [vmem:[%s197] sm:$0xff] %vm827, %v825
        %829 = vst.msk [vmem:[%s197 + $0x8] sm:$0xff] %vm827, %v826
        %s830 = sld [smem:[#allocation4 + $0x1]]
        %v831 = vstv %s830
        %s832 = sld [smem:[#allocation2 + $0x24]]
        %v833 = vstv %s832
        %v834 = vmul.f32 %v833, %v198
        %v835 = vmul.f32 %v833, %v199
        %v836 = vadd.f32 %v831, %v834
        %v837 = vadd.f32 %v831, %v835
        %s838 = sld [smem:[#allocation2 + $0x25]]
        %v839 = vstv %s838
        %v840 = vmul.f32 %v839, %v198
        %v841 = vmul.f32 %v839, %v199
        %844 = vrot.lane.b32.xlu0 %v840, 127
        %v845 = vpop.permute.xlu0 %844
        %846 = vrot.lane.b32.xlu0 %v841, 127
        %v847 = vpop.permute.xlu0 %846
        %v850 = vadd.f32 %v836, %v845
        %v851 = vadd.f32 %v837, %v847
        %s852 = sld [smem:[#allocation2 + $0x26]]
        %v853 = vstv %s852
        %v854 = vmul.f32 %v853, %v198
        %v855 = vmul.f32 %v853, %v199
        %858 = vrot.lane.b32.xlu0 %v854, 126
        %v859 = vpop.permute.xlu0 %858
        %860 = vrot.lane.b32.xlu0 %v855, 126
        %v861 = vpop.permute.xlu0 %860
        %v864 = vadd.f32 %v850, %v859
        %v865 = vadd.f32 %v851, %v861
        %s866 = sld [smem:[#allocation2 + $0x27]]
        %v867 = vstv %s866
        %v868 = vmul.f32 %v867, %v198
        %v869 = vmul.f32 %v867, %v199
        %v870 = vmul.f32 %v867, %v200
        %v874 = vrot.slane %v868, 1
        %v875 = vrot.slane %v869, 1
        %v876 = vsel %vm257, %v874, %v875
        %v877 = vrot.slane %v870, 1
        %v878 = vsel %vm257, %v875, %v877
        %v881 = vadd.f32 %v864, %v876
        %v882 = vadd.f32 %v865, %v878
        %s883 = sld [smem:[#allocation2 + $0x28]]
        %v884 = vstv %s883
        %v885 = vmul.f32 %v884, %v198
        %v886 = vmul.f32 %v884, %v199
        %v887 = vmul.f32 %v884, %v200
        %v891 = vrot.slane %v885, 1
        %v892 = vrot.slane %v886, 1
        %v893 = vsel %vm257, %v891, %v892
        %v894 = vrot.slane %v887, 1
        %v895 = vsel %vm257, %v892, %v894
        %896 = vrot.lane.b32.xlu0 %v893, 127
        %v897 = vpop.permute.xlu0 %896
        %898 = vrot.lane.b32.xlu0 %v895, 127
        %v899 = vpop.permute.xlu0 %898
        %v902 = vadd.f32 %v881, %v897
        %v903 = vadd.f32 %v882, %v899
        %s904 = sld [smem:[#allocation2 + $0x29]]
        %v905 = vstv %s904
        %v906 = vmul.f32 %v905, %v198
        %v907 = vmul.f32 %v905, %v199
        %v908 = vmul.f32 %v905, %v200
        %v912 = vrot.slane %v906, 1
        %v913 = vrot.slane %v907, 1
        %v914 = vsel %vm257, %v912, %v913
        %v915 = vrot.slane %v908, 1
        %v916 = vsel %vm257, %v913, %v915
        %917 = vrot.lane.b32.xlu0 %v914, 126
        %v918 = vpop.permute.xlu0 %917
        %919 = vrot.lane.b32.xlu0 %v916, 126
        %v920 = vpop.permute.xlu0 %919
        %v923 = vadd.f32 %v902, %v918
        %v924 = vadd.f32 %v903, %v920
        %s925 = sld [smem:[#allocation2 + $0x2a]]
        %v926 = vstv %s925
        %v927 = vmul.f32 %v926, %v198
        %v928 = vmul.f32 %v926, %v199
        %v929 = vmul.f32 %v926, %v200
        %v933 = vrot.slane %v927, 2
        %v934 = vrot.slane %v928, 2
        %v935 = vsel %vm317, %v933, %v934
        %v936 = vrot.slane %v929, 2
        %v937 = vsel %vm317, %v934, %v936
        %v940 = vadd.f32 %v923, %v935
        %v941 = vadd.f32 %v924, %v937
        %s942 = sld [smem:[#allocation2 + $0x2b]]
        %v943 = vstv %s942
        %v944 = vmul.f32 %v943, %v198
        %v945 = vmul.f32 %v943, %v199
        %v946 = vmul.f32 %v943, %v200
        %v950 = vrot.slane %v944, 2
        %v951 = vrot.slane %v945, 2
        %v952 = vsel %vm317, %v950, %v951
        %v953 = vrot.slane %v946, 2
        %v954 = vsel %vm317, %v951, %v953
        %955 = vrot.lane.b32.xlu0 %v952, 127
        %v956 = vpop.permute.xlu0 %955
        %957 = vrot.lane.b32.xlu0 %v954, 127
        %v958 = vpop.permute.xlu0 %957
        %v961 = vadd.f32 %v940, %v956
        %v962 = vadd.f32 %v941, %v958
        %s963 = sld [smem:[#allocation2 + $0x2c]]
        %v964 = vstv %s963
        %v965 = vmul.f32 %v964, %v198
        %v966 = vmul.f32 %v964, %v199
        %v967 = vmul.f32 %v964, %v200
        %v971 = vrot.slane %v965, 2
        %v972 = vrot.slane %v966, 2
        %v973 = vsel %vm317, %v971, %v972
        %v974 = vrot.slane %v967, 2
        %v975 = vsel %vm317, %v972, %v974
        %976 = vrot.lane.b32.xlu0 %v973, 126
        %v977 = vpop.permute.xlu0 %976
        %978 = vrot.lane.b32.xlu0 %v975, 126
        %v979 = vpop.permute.xlu0 %978
        %v982 = vadd.f32 %v961, %v977
        %v983 = vadd.f32 %v962, %v979
        %s984 = sld [smem:[#allocation2 + $0x2d]]
        %v985 = vstv %s984
        %v986 = vmul.f32 %v985, %v202
        %v987 = vmul.f32 %v985, %v203
        %v988 = vadd.f32 %v982, %v986
        %v989 = vadd.f32 %v983, %v987
        %s990 = sld [smem:[#allocation2 + $0x2e]]
        %v991 = vstv %s990
        %v992 = vmul.f32 %v991, %v202
        %v993 = vmul.f32 %v991, %v203
        %996 = vrot.lane.b32.xlu0 %v992, 127
        %v997 = vpop.permute.xlu0 %996
        %998 = vrot.lane.b32.xlu0 %v993, 127
        %v999 = vpop.permute.xlu0 %998
        %v1002 = vadd.f32 %v988, %v997
        %v1003 = vadd.f32 %v989, %v999
        %s1004 = sld [smem:[#allocation2 + $0x2f]]
        %v1005 = vstv %s1004
        %v1006 = vmul.f32 %v1005, %v202
        %v1007 = vmul.f32 %v1005, %v203
        %1010 = vrot.lane.b32.xlu0 %v1006, 126
        %v1011 = vpop.permute.xlu0 %1010
        %1012 = vrot.lane.b32.xlu0 %v1007, 126
        %v1013 = vpop.permute.xlu0 %1012
        %v1016 = vadd.f32 %v1002, %v1011
        %v1017 = vadd.f32 %v1003, %v1013
        %s1018 = sld [smem:[#allocation2 + $0x30]]
        %v1019 = vstv %s1018
        %v1020 = vmul.f32 %v1019, %v202
        %v1021 = vmul.f32 %v1019, %v203
        %v1022 = vmul.f32 %v1019, %v204
        %v1026 = vrot.slane %v1020, 1
        %v1027 = vrot.slane %v1021, 1
        %v1028 = vsel %vm257, %v1026, %v1027
        %v1029 = vrot.slane %v1022, 1
        %v1030 = vsel %vm257, %v1027, %v1029
        %v1033 = vadd.f32 %v1016, %v1028
        %v1034 = vadd.f32 %v1017, %v1030
        %s1035 = sld [smem:[#allocation2 + $0x31]]
        %v1036 = vstv %s1035
        %v1037 = vmul.f32 %v1036, %v202
        %v1038 = vmul.f32 %v1036, %v203
        %v1039 = vmul.f32 %v1036, %v204
        %v1043 = vrot.slane %v1037, 1
        %v1044 = vrot.slane %v1038, 1
        %v1045 = vsel %vm257, %v1043, %v1044
        %v1046 = vrot.slane %v1039, 1
        %v1047 = vsel %vm257, %v1044, %v1046
        %1048 = vrot.lane.b32.xlu0 %v1045, 127
        %v1049 = vpop.permute.xlu0 %1048
        %1050 = vrot.lane.b32.xlu0 %v1047, 127
        %v1051 = vpop.permute.xlu0 %1050
        %v1054 = vadd.f32 %v1033, %v1049
        %v1055 = vadd.f32 %v1034, %v1051
        %s1056 = sld [smem:[#allocation2 + $0x32]]
        %v1057 = vstv %s1056
        %v1058 = vmul.f32 %v1057, %v202
        %v1059 = vmul.f32 %v1057, %v203
        %v1060 = vmul.f32 %v1057, %v204
        %v1064 = vrot.slane %v1058, 1
        %v1065 = vrot.slane %v1059, 1
        %v1066 = vsel %vm257, %v1064, %v1065
        %v1067 = vrot.slane %v1060, 1
        %v1068 = vsel %vm257, %v1065, %v1067
        %1069 = vrot.lane.b32.xlu0 %v1066, 126
        %v1070 = vpop.permute.xlu0 %1069
        %1071 = vrot.lane.b32.xlu0 %v1068, 126
        %v1072 = vpop.permute.xlu0 %1071
        %v1075 = vadd.f32 %v1054, %v1070
        %v1076 = vadd.f32 %v1055, %v1072
        %s1077 = sld [smem:[#allocation2 + $0x33]]
        %v1078 = vstv %s1077
        %v1079 = vmul.f32 %v1078, %v202
        %v1080 = vmul.f32 %v1078, %v203
        %v1081 = vmul.f32 %v1078, %v204
        %v1085 = vrot.slane %v1079, 2
        %v1086 = vrot.slane %v1080, 2
        %v1087 = vsel %vm317, %v1085, %v1086
        %v1088 = vrot.slane %v1081, 2
        %v1089 = vsel %vm317, %v1086, %v1088
        %v1092 = vadd.f32 %v1075, %v1087
        %v1093 = vadd.f32 %v1076, %v1089
        %s1094 = sld [smem:[#allocation2 + $0x34]]
        %v1095 = vstv %s1094
        %v1096 = vmul.f32 %v1095, %v202
        %v1097 = vmul.f32 %v1095, %v203
        %v1098 = vmul.f32 %v1095, %v204
        %v1102 = vrot.slane %v1096, 2
        %v1103 = vrot.slane %v1097, 2
        %v1104 = vsel %vm317, %v1102, %v1103
        %v1105 = vrot.slane %v1098, 2
        %v1106 = vsel %vm317, %v1103, %v1105
        %1107 = vrot.lane.b32.xlu0 %v1104, 127
        %v1108 = vpop.permute.xlu0 %1107
        %1109 = vrot.lane.b32.xlu0 %v1106, 127
        %v1110 = vpop.permute.xlu0 %1109
        %v1113 = vadd.f32 %v1092, %v1108
        %v1114 = vadd.f32 %v1093, %v1110
        %s1115 = sld [smem:[#allocation2 + $0x35]]
        %v1116 = vstv %s1115
        %v1117 = vmul.f32 %v1116, %v202
        %v1118 = vmul.f32 %v1116, %v203
        %v1119 = vmul.f32 %v1116, %v204
        %v1123 = vrot.slane %v1117, 2
        %v1124 = vrot.slane %v1118, 2
        %v1125 = vsel %vm317, %v1123, %v1124
        %v1126 = vrot.slane %v1119, 2
        %v1127 = vsel %vm317, %v1124, %v1126
        %1128 = vrot.lane.b32.xlu0 %v1125, 126
        %v1129 = vpop.permute.xlu0 %1128
        %1130 = vrot.lane.b32.xlu0 %v1127, 126
        %v1131 = vpop.permute.xlu0 %1130
        %v1134 = vadd.f32 %v1113, %v1129
        %v1135 = vadd.f32 %v1114, %v1131
        %s1136 = sld [smem:[#allocation2 + $0x36]]
        %v1137 = vstv %s1136
        %v1138 = vmul.f32 %v1137, %v206
        %v1139 = vmul.f32 %v1137, %v207
        %v1140 = vadd.f32 %v1134, %v1138
        %v1141 = vadd.f32 %v1135, %v1139
        %s1142 = sld [smem:[#allocation2 + $0x37]]
        %v1143 = vstv %s1142
        %v1144 = vmul.f32 %v1143, %v206
        %v1145 = vmul.f32 %v1143, %v207
        %1148 = vrot.lane.b32.xlu0 %v1144, 127
        %v1149 = vpop.permute.xlu0 %1148
        %1150 = vrot.lane.b32.xlu0 %v1145, 127
        %v1151 = vpop.permute.xlu0 %1150
        %v1154 = vadd.f32 %v1140, %v1149
        %v1155 = vadd.f32 %v1141, %v1151
        %s1156 = sld [smem:[#allocation2 + $0x38]]
        %v1157 = vstv %s1156
        %v1158 = vmul.f32 %v1157, %v206
        %v1159 = vmul.f32 %v1157, %v207
        %1162 = vrot.lane.b32.xlu0 %v1158, 126
        %v1163 = vpop.permute.xlu0 %1162
        %1164 = vrot.lane.b32.xlu0 %v1159, 126
        %v1165 = vpop.permute.xlu0 %1164
        %v1168 = vadd.f32 %v1154, %v1163
        %v1169 = vadd.f32 %v1155, %v1165
        %s1170 = sld [smem:[#allocation2 + $0x39]]
        %v1171 = vstv %s1170
        %v1172 = vmul.f32 %v1171, %v206
        %v1173 = vmul.f32 %v1171, %v207
        %v1174 = vmul.f32 %v1171, %v208
        %v1178 = vrot.slane %v1172, 1
        %v1179 = vrot.slane %v1173, 1
        %v1180 = vsel %vm257, %v1178, %v1179
        %v1181 = vrot.slane %v1174, 1
        %v1182 = vsel %vm257, %v1179, %v1181
        %v1185 = vadd.f32 %v1168, %v1180
        %v1186 = vadd.f32 %v1169, %v1182
        %s1187 = sld [smem:[#allocation2 + $0x3a]]
        %v1188 = vstv %s1187
        %v1189 = vmul.f32 %v1188, %v206
        %v1190 = vmul.f32 %v1188, %v207
        %v1191 = vmul.f32 %v1188, %v208
        %v1195 = vrot.slane %v1189, 1
        %v1196 = vrot.slane %v1190, 1
        %v1197 = vsel %vm257, %v1195, %v1196
        %v1198 = vrot.slane %v1191, 1
        %v1199 = vsel %vm257, %v1196, %v1198
        %1200 = vrot.lane.b32.xlu0 %v1197, 127
        %v1201 = vpop.permute.xlu0 %1200
        %1202 = vrot.lane.b32.xlu0 %v1199, 127
        %v1203 = vpop.permute.xlu0 %1202
        %v1206 = vadd.f32 %v1185, %v1201
        %v1207 = vadd.f32 %v1186, %v1203
        %s1208 = sld [smem:[#allocation2 + $0x3b]]
        %v1209 = vstv %s1208
        %v1210 = vmul.f32 %v1209, %v206
        %v1211 = vmul.f32 %v1209, %v207
        %v1212 = vmul.f32 %v1209, %v208
        %v1216 = vrot.slane %v1210, 1
        %v1217 = vrot.slane %v1211, 1
        %v1218 = vsel %vm257, %v1216, %v1217
        %v1219 = vrot.slane %v1212, 1
        %v1220 = vsel %vm257, %v1217, %v1219
        %1221 = vrot.lane.b32.xlu0 %v1218, 126
        %v1222 = vpop.permute.xlu0 %1221
        %1223 = vrot.lane.b32.xlu0 %v1220, 126
        %v1224 = vpop.permute.xlu0 %1223
        %v1227 = vadd.f32 %v1206, %v1222
        %v1228 = vadd.f32 %v1207, %v1224
        %s1229 = sld [smem:[#allocation2 + $0x3c]]
        %v1230 = vstv %s1229
        %v1231 = vmul.f32 %v1230, %v206
        %v1232 = vmul.f32 %v1230, %v207
        %v1233 = vmul.f32 %v1230, %v208
        %v1237 = vrot.slane %v1231, 2
        %v1238 = vrot.slane %v1232, 2
        %v1239 = vsel %vm317, %v1237, %v1238
        %v1240 = vrot.slane %v1233, 2
        %v1241 = vsel %vm317, %v1238, %v1240
        %v1244 = vadd.f32 %v1227, %v1239
        %v1245 = vadd.f32 %v1228, %v1241
        %s1246 = sld [smem:[#allocation2 + $0x3d]]
        %v1247 = vstv %s1246
        %v1248 = vmul.f32 %v1247, %v206
        %v1249 = vmul.f32 %v1247, %v207
        %v1250 = vmul.f32 %v1247, %v208
        %v1254 = vrot.slane %v1248, 2
        %v1255 = vrot.slane %v1249, 2
        %v1256 = vsel %vm317, %v1254, %v1255
        %v1257 = vrot.slane %v1250, 2
        %v1258 = vsel %vm317, %v1255, %v1257
        %1259 = vrot.lane.b32.xlu0 %v1256, 127
        %v1260 = vpop.permute.xlu0 %1259
        %1261 = vrot.lane.b32.xlu0 %v1258, 127
        %v1262 = vpop.permute.xlu0 %1261
        %v1265 = vadd.f32 %v1244, %v1260
        %v1266 = vadd.f32 %v1245, %v1262
        %s1267 = sld [smem:[#allocation2 + $0x3e]]
        %v1268 = vstv %s1267
        %v1269 = vmul.f32 %v1268, %v206
        %v1270 = vmul.f32 %v1268, %v207
        %v1271 = vmul.f32 %v1268, %v208
        %v1275 = vrot.slane %v1269, 2
        %v1276 = vrot.slane %v1270, 2
        %v1277 = vsel %vm317, %v1275, %v1276
        %v1278 = vrot.slane %v1271, 2
        %v1279 = vsel %vm317, %v1276, %v1278
        %1280 = vrot.lane.b32.xlu0 %v1277, 126
        %v1281 = vpop.permute.xlu0 %1280
        %1282 = vrot.lane.b32.xlu0 %v1279, 126
        %v1283 = vpop.permute.xlu0 %1282
        %v1286 = vadd.f32 %v1265, %v1281
        %v1287 = vadd.f32 %v1266, %v1283
        %s1288 = sld [smem:[#allocation2 + $0x3f]]
        %v1289 = vstv %s1288
        %v1290 = vmul.f32 %v1289, %v210
        %v1291 = vmul.f32 %v1289, %v211
        %v1292 = vadd.f32 %v1286, %v1290
        %v1293 = vadd.f32 %v1287, %v1291
        %s1294 = sld [smem:[#allocation2 + $0x40]]
        %v1295 = vstv %s1294
        %v1296 = vmul.f32 %v1295, %v210
        %v1297 = vmul.f32 %v1295, %v211
        %1300 = vrot.lane.b32.xlu0 %v1296, 127
        %v1301 = vpop.permute.xlu0 %1300
        %1302 = vrot.lane.b32.xlu0 %v1297, 127
        %v1303 = vpop.permute.xlu0 %1302
        %v1306 = vadd.f32 %v1292, %v1301
        %v1307 = vadd.f32 %v1293, %v1303
        %s1308 = sld [smem:[#allocation2 + $0x41]]
        %v1309 = vstv %s1308
        %v1310 = vmul.f32 %v1309, %v210
        %v1311 = vmul.f32 %v1309, %v211
        %1314 = vrot.lane.b32.xlu0 %v1310, 126
        %v1315 = vpop.permute.xlu0 %1314
        %1316 = vrot.lane.b32.xlu0 %v1311, 126
        %v1317 = vpop.permute.xlu0 %1316
        %v1320 = vadd.f32 %v1306, %v1315
        %v1321 = vadd.f32 %v1307, %v1317
        %s1322 = sld [smem:[#allocation2 + $0x42]]
        %v1323 = vstv %s1322
        %v1324 = vmul.f32 %v1323, %v210
        %v1325 = vmul.f32 %v1323, %v211
        %v1326 = vmul.f32 %v1323, %v212
        %v1330 = vrot.slane %v1324, 1
        %v1331 = vrot.slane %v1325, 1
        %v1332 = vsel %vm257, %v1330, %v1331
        %v1333 = vrot.slane %v1326, 1
        %v1334 = vsel %vm257, %v1331, %v1333
        %v1337 = vadd.f32 %v1320, %v1332
        %v1338 = vadd.f32 %v1321, %v1334
        %s1339 = sld [smem:[#allocation2 + $0x43]]
        %v1340 = vstv %s1339
        %v1341 = vmul.f32 %v1340, %v210
        %v1342 = vmul.f32 %v1340, %v211
        %v1343 = vmul.f32 %v1340, %v212
        %v1347 = vrot.slane %v1341, 1
        %v1348 = vrot.slane %v1342, 1
        %v1349 = vsel %vm257, %v1347, %v1348
        %v1350 = vrot.slane %v1343, 1
        %v1351 = vsel %vm257, %v1348, %v1350
        %1352 = vrot.lane.b32.xlu0 %v1349, 127
        %v1353 = vpop.permute.xlu0 %1352
        %1354 = vrot.lane.b32.xlu0 %v1351, 127
        %v1355 = vpop.permute.xlu0 %1354
        %v1358 = vadd.f32 %v1337, %v1353
        %v1359 = vadd.f32 %v1338, %v1355
        %s1360 = sld [smem:[#allocation2 + $0x44]]
        %v1361 = vstv %s1360
        %v1362 = vmul.f32 %v1361, %v210
        %v1363 = vmul.f32 %v1361, %v211
        %v1364 = vmul.f32 %v1361, %v212
        %v1368 = vrot.slane %v1362, 1
        %v1369 = vrot.slane %v1363, 1
        %v1370 = vsel %vm257, %v1368, %v1369
        %v1371 = vrot.slane %v1364, 1
        %v1372 = vsel %vm257, %v1369, %v1371
        %1373 = vrot.lane.b32.xlu0 %v1370, 126
        %v1374 = vpop.permute.xlu0 %1373
        %1375 = vrot.lane.b32.xlu0 %v1372, 126
        %v1376 = vpop.permute.xlu0 %1375
        %v1379 = vadd.f32 %v1358, %v1374
        %v1380 = vadd.f32 %v1359, %v1376
        %s1381 = sld [smem:[#allocation2 + $0x45]]
        %v1382 = vstv %s1381
        %v1383 = vmul.f32 %v1382, %v210
        %v1384 = vmul.f32 %v1382, %v211
        %v1385 = vmul.f32 %v1382, %v212
        %v1389 = vrot.slane %v1383, 2
        %v1390 = vrot.slane %v1384, 2
        %v1391 = vsel %vm317, %v1389, %v1390
        %v1392 = vrot.slane %v1385, 2
        %v1393 = vsel %vm317, %v1390, %v1392
        %v1396 = vadd.f32 %v1379, %v1391
        %v1397 = vadd.f32 %v1380, %v1393
        %s1398 = sld [smem:[#allocation2 + $0x46]]
        %v1399 = vstv %s1398
        %v1400 = vmul.f32 %v1399, %v210
        %v1401 = vmul.f32 %v1399, %v211
        %v1402 = vmul.f32 %v1399, %v212
        %v1406 = vrot.slane %v1400, 2
        %v1407 = vrot.slane %v1401, 2
        %v1408 = vsel %vm317, %v1406, %v1407
        %v1409 = vrot.slane %v1402, 2
        %v1410 = vsel %vm317, %v1407, %v1409
        %1411 = vrot.lane.b32.xlu0 %v1408, 127
        %v1412 = vpop.permute.xlu0 %1411
        %1413 = vrot.lane.b32.xlu0 %v1410, 127
        %v1414 = vpop.permute.xlu0 %1413
        %v1417 = vadd.f32 %v1396, %v1412
        %v1418 = vadd.f32 %v1397, %v1414
        %s1419 = sld [smem:[#allocation2 + $0x47]]
        %v1420 = vstv %s1419
        %v1421 = vmul.f32 %v1420, %v210
        %v1422 = vmul.f32 %v1420, %v211
        %v1423 = vmul.f32 %v1420, %v212
        %v1427 = vrot.slane %v1421, 2
        %v1428 = vrot.slane %v1422, 2
        %v1429 = vsel %vm317, %v1427, %v1428
        %v1430 = vrot.slane %v1423, 2
        %v1431 = vsel %vm317, %v1428, %v1430
        %1432 = vrot.lane.b32.xlu0 %v1429, 126
        %v1433 = vpop.permute.xlu0 %1432
        %1434 = vrot.lane.b32.xlu0 %v1431, 126
        %v1435 = vpop.permute.xlu0 %1434
        %v1438 = vadd.f32 %v1417, %v1433
        %v1439 = vadd.f32 %v1418, %v1435
        %v1440 = vmax.f32 %v1438, 0.0
        %v1441 = vmax.f32 %v1439, 0.0
        %s1442 = scalar_lea.vmem %s197, 16
        %1443 = vst.msk [vmem:[%s1442] sm:$0xff] %vm827, %v1440
        %1444 = vst.msk [vmem:[%s1442 + $0x8] sm:$0xff] %vm827, %v1441
        %s1445 = sld [smem:[#allocation4 + $0x2]]
        %v1446 = vstv %s1445
        %s1447 = sld [smem:[#allocation2 + $0x48]]
        %v1448 = vstv %s1447
        %v1449 = vmul.f32 %v1448, %v198
        %v1450 = vmul.f32 %v1448, %v199
        %v1451 = vadd.f32 %v1446, %v1449
        %v1452 = vadd.f32 %v1446, %v1450
        %s1453 = sld [smem:[#allocation2 + $0x49]]
        %v1454 = vstv %s1453
        %v1455 = vmul.f32 %v1454, %v198
        %v1456 = vmul.f32 %v1454, %v199
        %1459 = vrot.lane.b32.xlu0 %v1455, 127
        %v1460 = vpop.permute.xlu0 %1459
        %1461 = vrot.lane.b32.xlu0 %v1456, 127
        %v1462 = vpop.permute.xlu0 %1461
        %v1465 = vadd.f32 %v1451, %v1460
        %v1466 = vadd.f32 %v1452, %v1462
        %s1467 = sld [smem:[#allocation2 + $0x4a]]
        %v1468 = vstv %s1467
        %v1469 = vmul.f32 %v1468, %v198
        %v1470 = vmul.f32 %v1468, %v199
        %1473 = vrot.lane.b32.xlu0 %v1469, 126
        %v1474 = vpop.permute.xlu0 %1473
        %1475 = vrot.lane.b32.xlu0 %v1470, 126
        %v1476 = vpop.permute.xlu0 %1475
        %v1479 = vadd.f32 %v1465, %v1474
        %v1480 = vadd.f32 %v1466, %v1476
        %s1481 = sld [smem:[#allocation2 + $0x4b]]
        %v1482 = vstv %s1481
        %v1483 = vmul.f32 %v1482, %v198
        %v1484 = vmul.f32 %v1482, %v199
        %v1485 = vmul.f32 %v1482, %v200
        %v1489 = vrot.slane %v1483, 1
        %v1490 = vrot.slane %v1484, 1
        %v1491 = vsel %vm257, %v1489, %v1490
        %v1492 = vrot.slane %v1485, 1
        %v1493 = vsel %vm257, %v1490, %v1492
        %v1496 = vadd.f32 %v1479, %v1491
        %v1497 = vadd.f32 %v1480, %v1493
        %s1498 = sld [smem:[#allocation2 + $0x4c]]
        %v1499 = vstv %s1498
        %v1500 = vmul.f32 %v1499, %v198
        %v1501 = vmul.f32 %v1499, %v199
        %v1502 = vmul.f32 %v1499, %v200
        %v1506 = vrot.slane %v1500, 1
        %v1507 = vrot.slane %v1501, 1
        %v1508 = vsel %vm257, %v1506, %v1507
        %v1509 = vrot.slane %v1502, 1
        %v1510 = vsel %vm257, %v1507, %v1509
        %1511 = vrot.lane.b32.xlu0 %v1508, 127
        %v1512 = vpop.permute.xlu0 %1511
        %1513 = vrot.lane.b32.xlu0 %v1510, 127
        %v1514 = vpop.permute.xlu0 %1513
        %v1517 = vadd.f32 %v1496, %v1512
        %v1518 = vadd.f32 %v1497, %v1514
        %s1519 = sld [smem:[#allocation2 + $0x4d]]
        %v1520 = vstv %s1519
        %v1521 = vmul.f32 %v1520, %v198
        %v1522 = vmul.f32 %v1520, %v199
        %v1523 = vmul.f32 %v1520, %v200
        %v1527 = vrot.slane %v1521, 1
        %v1528 = vrot.slane %v1522, 1
        %v1529 = vsel %vm257, %v1527, %v1528
        %v1530 = vrot.slane %v1523, 1
        %v1531 = vsel %vm257, %v1528, %v1530
        %1532 = vrot.lane.b32.xlu0 %v1529, 126
        %v1533 = vpop.permute.xlu0 %1532
        %1534 = vrot.lane.b32.xlu0 %v1531, 126
        %v1535 = vpop.permute.xlu0 %1534
        %v1538 = vadd.f32 %v1517, %v1533
        %v1539 = vadd.f32 %v1518, %v1535
        %s1540 = sld [smem:[#allocation2 + $0x4e]]
        %v1541 = vstv %s1540
        %v1542 = vmul.f32 %v1541, %v198
        %v1543 = vmul.f32 %v1541, %v199
        %v1544 = vmul.f32 %v1541, %v200
        %v1548 = vrot.slane %v1542, 2
        %v1549 = vrot.slane %v1543, 2
        %v1550 = vsel %vm317, %v1548, %v1549
        %v1551 = vrot.slane %v1544, 2
        %v1552 = vsel %vm317, %v1549, %v1551
        %v1555 = vadd.f32 %v1538, %v1550
        %v1556 = vadd.f32 %v1539, %v1552
        %s1557 = sld [smem:[#allocation2 + $0x4f]]
        %v1558 = vstv %s1557
        %v1559 = vmul.f32 %v1558, %v198
        %v1560 = vmul.f32 %v1558, %v199
        %v1561 = vmul.f32 %v1558, %v200
        %v1565 = vrot.slane %v1559, 2
        %v1566 = vrot.slane %v1560, 2
        %v1567 = vsel %vm317, %v1565, %v1566
        %v1568 = vrot.slane %v1561, 2
        %v1569 = vsel %vm317, %v1566, %v1568
        %1570 = vrot.lane.b32.xlu0 %v1567, 127
        %v1571 = vpop.permute.xlu0 %1570
        %1572 = vrot.lane.b32.xlu0 %v1569, 127
        %v1573 = vpop.permute.xlu0 %1572
        %v1576 = vadd.f32 %v1555, %v1571
        %v1577 = vadd.f32 %v1556, %v1573
        %s1578 = sld [smem:[#allocation2 + $0x50]]
        %v1579 = vstv %s1578
        %v1580 = vmul.f32 %v1579, %v198
        %v1581 = vmul.f32 %v1579, %v199
        %v1582 = vmul.f32 %v1579, %v200
        %v1586 = vrot.slane %v1580, 2
        %v1587 = vrot.slane %v1581, 2
        %v1588 = vsel %vm317, %v1586, %v1587
        %v1589 = vrot.slane %v1582, 2
        %v1590 = vsel %vm317, %v1587, %v1589
        %1591 = vrot.lane.b32.xlu0 %v1588, 126
        %v1592 = vpop.permute.xlu0 %1591
        %1593 = vrot.lane.b32.xlu0 %v1590, 126
        %v1594 = vpop.permute.xlu0 %1593
        %v1597 = vadd.f32 %v1576, %v1592
        %v1598 = vadd.f32 %v1577, %v1594
        %s1599 = sld [smem:[#allocation2 + $0x51]]
        %v1600 = vstv %s1599
        %v1601 = vmul.f32 %v1600, %v202
        %v1602 = vmul.f32 %v1600, %v203
        %v1603 = vadd.f32 %v1597, %v1601
        %v1604 = vadd.f32 %v1598, %v1602
        %s1605 = sld [smem:[#allocation2 + $0x52]]
        %v1606 = vstv %s1605
        %v1607 = vmul.f32 %v1606, %v202
        %v1608 = vmul.f32 %v1606, %v203
        %1611 = vrot.lane.b32.xlu0 %v1607, 127
        %v1612 = vpop.permute.xlu0 %1611
        %1613 = vrot.lane.b32.xlu0 %v1608, 127
        %v1614 = vpop.permute.xlu0 %1613
        %v1617 = vadd.f32 %v1603, %v1612
        %v1618 = vadd.f32 %v1604, %v1614
        %s1619 = sld [smem:[#allocation2 + $0x53]]
        %v1620 = vstv %s1619
        %v1621 = vmul.f32 %v1620, %v202
        %v1622 = vmul.f32 %v1620, %v203
        %1625 = vrot.lane.b32.xlu0 %v1621, 126
        %v1626 = vpop.permute.xlu0 %1625
        %1627 = vrot.lane.b32.xlu0 %v1622, 126
        %v1628 = vpop.permute.xlu0 %1627
        %v1631 = vadd.f32 %v1617, %v1626
        %v1632 = vadd.f32 %v1618, %v1628
        %s1633 = sld [smem:[#allocation2 + $0x54]]
        %v1634 = vstv %s1633
        %v1635 = vmul.f32 %v1634, %v202
        %v1636 = vmul.f32 %v1634, %v203
        %v1637 = vmul.f32 %v1634, %v204
        %v1641 = vrot.slane %v1635, 1
        %v1642 = vrot.slane %v1636, 1
        %v1643 = vsel %vm257, %v1641, %v1642
        %v1644 = vrot.slane %v1637, 1
        %v1645 = vsel %vm257, %v1642, %v1644
        %v1648 = vadd.f32 %v1631, %v1643
        %v1649 = vadd.f32 %v1632, %v1645
        %s1650 = sld [smem:[#allocation2 + $0x55]]
        %v1651 = vstv %s1650
        %v1652 = vmul.f32 %v1651, %v202
        %v1653 = vmul.f32 %v1651, %v203
        %v1654 = vmul.f32 %v1651, %v204
        %v1658 = vrot.slane %v1652, 1
        %v1659 = vrot.slane %v1653, 1
        %v1660 = vsel %vm257, %v1658, %v1659
        %v1661 = vrot.slane %v1654, 1
        %v1662 = vsel %vm257, %v1659, %v1661
        %1663 = vrot.lane.b32.xlu0 %v1660, 127
        %v1664 = vpop.permute.xlu0 %1663
        %1665 = vrot.lane.b32.xlu0 %v1662, 127
        %v1666 = vpop.permute.xlu0 %1665
        %v1669 = vadd.f32 %v1648, %v1664
        %v1670 = vadd.f32 %v1649, %v1666
        %s1671 = sld [smem:[#allocation2 + $0x56]]
        %v1672 = vstv %s1671
        %v1673 = vmul.f32 %v1672, %v202
        %v1674 = vmul.f32 %v1672, %v203
        %v1675 = vmul.f32 %v1672, %v204
        %v1679 = vrot.slane %v1673, 1
        %v1680 = vrot.slane %v1674, 1
        %v1681 = vsel %vm257, %v1679, %v1680
        %v1682 = vrot.slane %v1675, 1
        %v1683 = vsel %vm257, %v1680, %v1682
        %1684 = vrot.lane.b32.xlu0 %v1681, 126
        %v1685 = vpop.permute.xlu0 %1684
        %1686 = vrot.lane.b32.xlu0 %v1683, 126
        %v1687 = vpop.permute.xlu0 %1686
        %v1690 = vadd.f32 %v1669, %v1685
        %v1691 = vadd.f32 %v1670, %v1687
        %s1692 = sld [smem:[#allocation2 + $0x57]]
        %v1693 = vstv %s1692
        %v1694 = vmul.f32 %v1693, %v202
        %v1695 = vmul.f32 %v1693, %v203
        %v1696 = vmul.f32 %v1693, %v204
        %v1700 = vrot.slane %v1694, 2
        %v1701 = vrot.slane %v1695, 2
        %v1702 = vsel %vm317, %v1700, %v1701
        %v1703 = vrot.slane %v1696, 2
        %v1704 = vsel %vm317, %v1701, %v1703
        %v1707 = vadd.f32 %v1690, %v1702
        %v1708 = vadd.f32 %v1691, %v1704
        %s1709 = sld [smem:[#allocation2 + $0x58]]
        %v1710 = vstv %s1709
        %v1711 = vmul.f32 %v1710, %v202
        %v1712 = vmul.f32 %v1710, %v203
        %v1713 = vmul.f32 %v1710, %v204
        %v1717 = vrot.slane %v1711, 2
        %v1718 = vrot.slane %v1712, 2
        %v1719 = vsel %vm317, %v1717, %v1718
        %v1720 = vrot.slane %v1713, 2
        %v1721 = vsel %vm317, %v1718, %v1720
        %1722 = vrot.lane.b32.xlu0 %v1719, 127
        %v1723 = vpop.permute.xlu0 %1722
        %1724 = vrot.lane.b32.xlu0 %v1721, 127
        %v1725 = vpop.permute.xlu0 %1724
        %v1728 = vadd.f32 %v1707, %v1723
        %v1729 = vadd.f32 %v1708, %v1725
        %s1730 = sld [smem:[#allocation2 + $0x59]]
        %v1731 = vstv %s1730
        %v1732 = vmul.f32 %v1731, %v202
        %v1733 = vmul.f32 %v1731, %v203
        %v1734 = vmul.f32 %v1731, %v204
        %v1738 = vrot.slane %v1732, 2
        %v1739 = vrot.slane %v1733, 2
        %v1740 = vsel %vm317, %v1738, %v1739
        %v1741 = vrot.slane %v1734, 2
        %v1742 = vsel %vm317, %v1739, %v1741
        %1743 = vrot.lane.b32.xlu0 %v1740, 126
        %v1744 = vpop.permute.xlu0 %1743
        %1745 = vrot.lane.b32.xlu0 %v1742, 126
        %v1746 = vpop.permute.xlu0 %1745
        %v1749 = vadd.f32 %v1728, %v1744
        %v1750 = vadd.f32 %v1729, %v1746
        %s1751 = sld [smem:[#allocation2 + $0x5a]]
        %v1752 = vstv %s1751
        %v1753 = vmul.f32 %v1752, %v206
        %v1754 = vmul.f32 %v1752, %v207
        %v1755 = vadd.f32 %v1749, %v1753
        %v1756 = vadd.f32 %v1750, %v1754
        %s1757 = sld [smem:[#allocation2 + $0x5b]]
        %v1758 = vstv %s1757
        %v1759 = vmul.f32 %v1758, %v206
        %v1760 = vmul.f32 %v1758, %v207
        %1763 = vrot.lane.b32.xlu0 %v1759, 127
        %v1764 = vpop.permute.xlu0 %1763
        %1765 = vrot.lane.b32.xlu0 %v1760, 127
        %v1766 = vpop.permute.xlu0 %1765
        %v1769 = vadd.f32 %v1755, %v1764
        %v1770 = vadd.f32 %v1756, %v1766
        %s1771 = sld [smem:[#allocation2 + $0x5c]]
        %v1772 = vstv %s1771
        %v1773 = vmul.f32 %v1772, %v206
        %v1774 = vmul.f32 %v1772, %v207
        %1777 = vrot.lane.b32.xlu0 %v1773, 126
        %v1778 = vpop.permute.xlu0 %1777
        %1779 = vrot.lane.b32.xlu0 %v1774, 126
        %v1780 = vpop.permute.xlu0 %1779
        %v1783 = vadd.f32 %v1769, %v1778
        %v1784 = vadd.f32 %v1770, %v1780
        %s1785 = sld [smem:[#allocation2 + $0x5d]]
        %v1786 = vstv %s1785
        %v1787 = vmul.f32 %v1786, %v206
        %v1788 = vmul.f32 %v1786, %v207
        %v1789 = vmul.f32 %v1786, %v208
        %v1793 = vrot.slane %v1787, 1
        %v1794 = vrot.slane %v1788, 1
        %v1795 = vsel %vm257, %v1793, %v1794
        %v1796 = vrot.slane %v1789, 1
        %v1797 = vsel %vm257, %v1794, %v1796
        %v1800 = vadd.f32 %v1783, %v1795
        %v1801 = vadd.f32 %v1784, %v1797
        %s1802 = sld [smem:[#allocation2 + $0x5e]]
        %v1803 = vstv %s1802
        %v1804 = vmul.f32 %v1803, %v206
        %v1805 = vmul.f32 %v1803, %v207
        %v1806 = vmul.f32 %v1803, %v208
        %v1810 = vrot.slane %v1804, 1
        %v1811 = vrot.slane %v1805, 1
        %v1812 = vsel %vm257, %v1810, %v1811
        %v1813 = vrot.slane %v1806, 1
        %v1814 = vsel %vm257, %v1811, %v1813
        %1815 = vrot.lane.b32.xlu0 %v1812, 127
        %v1816 = vpop.permute.xlu0 %1815
        %1817 = vrot.lane.b32.xlu0 %v1814, 127
        %v1818 = vpop.permute.xlu0 %1817
        %v1821 = vadd.f32 %v1800, %v1816
        %v1822 = vadd.f32 %v1801, %v1818
        %s1823 = sld [smem:[#allocation2 + $0x5f]]
        %v1824 = vstv %s1823
        %v1825 = vmul.f32 %v1824, %v206
        %v1826 = vmul.f32 %v1824, %v207
        %v1827 = vmul.f32 %v1824, %v208
        %v1831 = vrot.slane %v1825, 1
        %v1832 = vrot.slane %v1826, 1
        %v1833 = vsel %vm257, %v1831, %v1832
        %v1834 = vrot.slane %v1827, 1
        %v1835 = vsel %vm257, %v1832, %v1834
        %1836 = vrot.lane.b32.xlu0 %v1833, 126
        %v1837 = vpop.permute.xlu0 %1836
        %1838 = vrot.lane.b32.xlu0 %v1835, 126
        %v1839 = vpop.permute.xlu0 %1838
        %v1842 = vadd.f32 %v1821, %v1837
        %v1843 = vadd.f32 %v1822, %v1839
        %s1844 = sld [smem:[#allocation2 + $0x60]]
        %v1845 = vstv %s1844
        %v1846 = vmul.f32 %v1845, %v206
        %v1847 = vmul.f32 %v1845, %v207
        %v1848 = vmul.f32 %v1845, %v208
        %v1852 = vrot.slane %v1846, 2
        %v1853 = vrot.slane %v1847, 2
        %v1854 = vsel %vm317, %v1852, %v1853
        %v1855 = vrot.slane %v1848, 2
        %v1856 = vsel %vm317, %v1853, %v1855
        %v1859 = vadd.f32 %v1842, %v1854
        %v1860 = vadd.f32 %v1843, %v1856
        %s1861 = sld [smem:[#allocation2 + $0x61]]
        %v1862 = vstv %s1861
        %v1863 = vmul.f32 %v1862, %v206
        %v1864 = vmul.f32 %v1862, %v207
        %v1865 = vmul.f32 %v1862, %v208
        %v1869 = vrot.slane %v1863, 2
        %v1870 = vrot.slane %v1864, 2
        %v1871 = vsel %vm317, %v1869, %v1870
        %v1872 = vrot.slane %v1865, 2
        %v1873 = vsel %vm317, %v1870, %v1872
        %1874 = vrot.lane.b32.xlu0 %v1871, 127
        %v1875 = vpop.permute.xlu0 %1874
        %1876 = vrot.lane.b32.xlu0 %v1873, 127
        %v1877 = vpop.permute.xlu0 %1876
        %v1880 = vadd.f32 %v1859, %v1875
        %v1881 = vadd.f32 %v1860, %v1877
        %s1882 = sld [smem:[#allocation2 + $0x62]]
        %v1883 = vstv %s1882
        %v1884 = vmul.f32 %v1883, %v206
        %v1885 = vmul.f32 %v1883, %v207
        %v1886 = vmul.f32 %v1883, %v208
        %v1890 = vrot.slane %v1884, 2
        %v1891 = vrot.slane %v1885, 2
        %v1892 = vsel %vm317, %v1890, %v1891
        %v1893 = vrot.slane %v1886, 2
        %v1894 = vsel %vm317, %v1891, %v1893
        %1895 = vrot.lane.b32.xlu0 %v1892, 126
        %v1896 = vpop.permute.xlu0 %1895
        %1897 = vrot.lane.b32.xlu0 %v1894, 126
        %v1898 = vpop.permute.xlu0 %1897
        %v1901 = vadd.f32 %v1880, %v1896
        %v1902 = vadd.f32 %v1881, %v1898
        %s1903 = sld [smem:[#allocation2 + $0x63]]
        %v1904 = vstv %s1903
        %v1905 = vmul.f32 %v1904, %v210
        %v1906 = vmul.f32 %v1904, %v211
        %v1907 = vadd.f32 %v1901, %v1905
        %v1908 = vadd.f32 %v1902, %v1906
        %s1909 = sld [smem:[#allocation2 + $0x64]]
        %v1910 = vstv %s1909
        %v1911 = vmul.f32 %v1910, %v210
        %v1912 = vmul.f32 %v1910, %v211
        %1915 = vrot.lane.b32.xlu0 %v1911, 127
        %v1916 = vpop.permute.xlu0 %1915
        %1917 = vrot.lane.b32.xlu0 %v1912, 127
        %v1918 = vpop.permute.xlu0 %1917
        %v1921 = vadd.f32 %v1907, %v1916
        %v1922 = vadd.f32 %v1908, %v1918
        %s1923 = sld [smem:[#allocation2 + $0x65]]
        %v1924 = vstv %s1923
        %v1925 = vmul.f32 %v1924, %v210
        %v1926 = vmul.f32 %v1924, %v211
        %1929 = vrot.lane.b32.xlu0 %v1925, 126
        %v1930 = vpop.permute.xlu0 %1929
        %1931 = vrot.lane.b32.xlu0 %v1926, 126
        %v1932 = vpop.permute.xlu0 %1931
        %v1935 = vadd.f32 %v1921, %v1930
        %v1936 = vadd.f32 %v1922, %v1932
        %s1937 = sld [smem:[#allocation2 + $0x66]]
        %v1938 = vstv %s1937
        %v1939 = vmul.f32 %v1938, %v210
        %v1940 = vmul.f32 %v1938, %v211
        %v1941 = vmul.f32 %v1938, %v212
        %v1945 = vrot.slane %v1939, 1
        %v1946 = vrot.slane %v1940, 1
        %v1947 = vsel %vm257, %v1945, %v1946
        %v1948 = vrot.slane %v1941, 1
        %v1949 = vsel %vm257, %v1946, %v1948
        %v1952 = vadd.f32 %v1935, %v1947
        %v1953 = vadd.f32 %v1936, %v1949
        %s1954 = sld [smem:[#allocation2 + $0x67]]
        %v1955 = vstv %s1954
        %v1956 = vmul.f32 %v1955, %v210
        %v1957 = vmul.f32 %v1955, %v211
        %v1958 = vmul.f32 %v1955, %v212
        %v1962 = vrot.slane %v1956, 1
        %v1963 = vrot.slane %v1957, 1
        %v1964 = vsel %vm257, %v1962, %v1963
        %v1965 = vrot.slane %v1958, 1
        %v1966 = vsel %vm257, %v1963, %v1965
        %1967 = vrot.lane.b32.xlu0 %v1964, 127
        %v1968 = vpop.permute.xlu0 %1967
        %1969 = vrot.lane.b32.xlu0 %v1966, 127
        %v1970 = vpop.permute.xlu0 %1969
        %v1973 = vadd.f32 %v1952, %v1968
        %v1974 = vadd.f32 %v1953, %v1970
        %s1975 = sld [smem:[#allocation2 + $0x68]]
        %v1976 = vstv %s1975
        %v1977 = vmul.f32 %v1976, %v210
        %v1978 = vmul.f32 %v1976, %v211
        %v1979 = vmul.f32 %v1976, %v212
        %v1983 = vrot.slane %v1977, 1
        %v1984 = vrot.slane %v1978, 1
        %v1985 = vsel %vm257, %v1983, %v1984
        %v1986 = vrot.slane %v1979, 1
        %v1987 = vsel %vm257, %v1984, %v1986
        %1988 = vrot.lane.b32.xlu0 %v1985, 126
        %v1989 = vpop.permute.xlu0 %1988
        %1990 = vrot.lane.b32.xlu0 %v1987, 126
        %v1991 = vpop.permute.xlu0 %1990
        %v1994 = vadd.f32 %v1973, %v1989
        %v1995 = vadd.f32 %v1974, %v1991
        %s1996 = sld [smem:[#allocation2 + $0x69]]
        %v1997 = vstv %s1996
        %v1998 = vmul.f32 %v1997, %v210
        %v1999 = vmul.f32 %v1997, %v211
        %v2000 = vmul.f32 %v1997, %v212
        %v2004 = vrot.slane %v1998, 2
        %v2005 = vrot.slane %v1999, 2
        %v2006 = vsel %vm317, %v2004, %v2005
        %v2007 = vrot.slane %v2000, 2
        %v2008 = vsel %vm317, %v2005, %v2007
        %v2011 = vadd.f32 %v1994, %v2006
        %v2012 = vadd.f32 %v1995, %v2008
        %s2013 = sld [smem:[#allocation2 + $0x6a]]
        %v2014 = vstv %s2013
        %v2015 = vmul.f32 %v2014, %v210
        %v2016 = vmul.f32 %v2014, %v211
        %v2017 = vmul.f32 %v2014, %v212
        %v2021 = vrot.slane %v2015, 2
        %v2022 = vrot.slane %v2016, 2
        %v2023 = vsel %vm317, %v2021, %v2022
        %v2024 = vrot.slane %v2017, 2
        %v2025 = vsel %vm317, %v2022, %v2024
        %2026 = vrot.lane.b32.xlu0 %v2023, 127
        %v2027 = vpop.permute.xlu0 %2026
        %2028 = vrot.lane.b32.xlu0 %v2025, 127
        %v2029 = vpop.permute.xlu0 %2028
        %v2032 = vadd.f32 %v2011, %v2027
        %v2033 = vadd.f32 %v2012, %v2029
        %s2034 = sld [smem:[#allocation2 + $0x6b]]
        %v2035 = vstv %s2034
        %v2036 = vmul.f32 %v2035, %v210
        %v2037 = vmul.f32 %v2035, %v211
        %v2038 = vmul.f32 %v2035, %v212
        %v2042 = vrot.slane %v2036, 2
        %v2043 = vrot.slane %v2037, 2
        %v2044 = vsel %vm317, %v2042, %v2043
        %v2045 = vrot.slane %v2038, 2
        %v2046 = vsel %vm317, %v2043, %v2045
        %2047 = vrot.lane.b32.xlu0 %v2044, 126
        %v2048 = vpop.permute.xlu0 %2047
        %2049 = vrot.lane.b32.xlu0 %v2046, 126
        %v2050 = vpop.permute.xlu0 %2049
        %v2053 = vadd.f32 %v2032, %v2048
        %v2054 = vadd.f32 %v2033, %v2050
        %v2055 = vmax.f32 %v2053, 0.0
        %v2056 = vmax.f32 %v2054, 0.0
        %s2057 = scalar_lea.vmem %s197, 32
        %2058 = vst.msk [vmem:[%s2057] sm:$0xff] %vm827, %v2055
        %2059 = vst.msk [vmem:[%s2057 + $0x8] sm:$0xff] %vm827, %v2056
        %p2060 = scmp.lt.s32.totalorder %s16, 1
        %s2061 = scalar_select %p2060, %s16, 1
        %s2062 = smul.addr %s2061, 6
        %s2063 = smul.addr %s2062, 8
        %s2064 = scalar_lea.vmem %s3, %s2063
        // Predicated region
        $region41: #{up_forward.4} parent=31 // pred_check
          %p2065 = pneg %p102
        $region42: #{up_forward.4} parent=31 // pred_check_branch
          %2067 = sbr.rel (%p2065) target = $region44
        $region43: #{up_forward.4} parent=31 // pred_region
          _
        $region44: #{up_forward.4} parent=31 // pred_fallthru
          _
      $region32: #{up_forward.4} parent=5 // pred_fallthru
        _
      %p2068 = scmp.le.s32.totalorder 2, %s11
      // Predicated region
      $region45: #{up_forward.4} parent=5 // pred_check
        %p2069 = pneg %p2068
      $region46: #{up_forward.4} parent=5 // pred_check_branch
        %2071 = sbr.rel (%p2069) target = $region48
      $region47: #{up_forward.4} parent=5 // pred_region
        %s2072 = ssub.s32 %s11, 2
        // Predicated region
        $region49: #{up_forward.4} parent=47 // pred_check
          %p2073 = pneg %p108
        $region50: #{up_forward.4} parent=47 // pred_check_branch
          %2075 = sbr.rel (%p2073) target = $region52
        $region51: #{up_forward.4} parent=47 // pred_region
          %p2076 = scmp.lt.s32.totalorder %s17, 1
          %s2077 = scalar_select %p2076, %s17, 1
          %s2078 = smul.addr %s2077, 6
          %s2079 = smul.addr %s2078, 8
          %s2080 = scalar_lea.vmem %s3, %s2079
        $region52: #{up_forward.4} parent=47 // pred_fallthru
          _
      $region48: #{up_forward.4} parent=5 // pred_fallthru
        _
    $region6: #{up_forward.4} parent=1 // loop_footer
      %s15 = sadd.s32 1, %s11
    $region7: #{up_forward.4} parent=1 // loop_footer_branch
      %10 = sbr.rel target = $region3
    $region8: #{up_forward.4} parent=1 // loop_exit
      _
    %2081 = vsyncpa [#allocation3], 1
    %s2082 = scalar_lea.sflag [#allocation3], 1
    %2083 = vsyncpa %s2082, 1
    %2084 = vsyncpa [#allocation5], 1

// kernel: up_forward.5
$region0: #{up_forward.5}
  #allocation0 [shape = 'u32[]', space=smem, size = 0x4, offset = 0x4, fixed_abs, tag = 'smem constant byte address 0x4 - core index']
  #allocation1 [shape = 'u32[144,128]{1,0:T(1,128)}', space=vmem, size = 0x12000, scoped, tag = 'internal scratch']
  %s0 = inlined_call_operand.vmem [shape: f32[81], index: 0, kind: input, shape index: {}]
  %s1 = inlined_call_operand.vmem [shape: f32[3], index: 1, kind: input, shape index: {}]
  %s2 = inlined_call_operand.vmem [shape: f32[2,3,18,18], index: 2, kind: input, shape index: {}]
  %s3 = inlined_call_operand.hbm [shape: f32[2,3,16,16], index: 3, kind: output, shape index: {}]
  %s4 = sld [smem:[#allocation0]]
  $region53: #{up_forward.5} parent=0
    _
  %s6 = ssub.s32 1, %s4
  %s7 = scalar_select 0, %s6, %s4
  $region1: #{up_forward.5} parent=0
    #allocation2 [shape = 'u8[512]{0}', space=smem, size = 0x200, scoped, tag = 'input window, operand 0, single buffered']
    #allocation3 [shape = 's32[2]{0}', space=sflag, size = 0x8, scoped, tag = 'scoped memory for up_forward.5']
    #allocation4 [shape = 's32[2]{0}', space=sflag, size = 0x8, scoped, tag = 'scoped memory for up_forward.5']
    #allocation5 [shape = 'u8[512]{0}', space=smem, size = 0x200, scoped, tag = 'input window, operand 1, single buffered']
    #allocation6 [shape = 's32[1]{0}', space=sflag, size = 0x4, scoped, tag = 'scoped memory for up_forward.5']
    #allocation7 [shape = 'u8[49152]{0}', space=vmem, size = 0xc000, scoped, tag = 'output window, operand 0']
    %8 = vsyncpa [#allocation4], 0
    %9 = vsyncpa [#allocation6], 0
    %10 = vsyncpa [#allocation3], 0
    %s11 = scalar_lea.sflag [#allocation3], 1
    %12 = vsyncpa %s11, 0
    loop: start=0, step=1, limit=4
    $region2: #{up_forward.5} parent=1 // loop_pre_header
      _
    $region3: #{up_forward.5} parent=1 // loop_header
      %s14 = sphi 0, %s18
      %p15 = scmp.ge.s32.totalorder %s14, 4
      %s22 = sphi 0, %s22
      %s24 = sphi 0, %s22
      %s25 = sphi 0, %s24
      %s39 = sphi 0, %s25
      %s43 = sphi 0, %s43
      %s45 = sphi 0, %s43
      %s46 = sphi 0, %s45
      %s60 = sphi 0, %s46
      %s66 = sphi 0, %s68
      %s69 = sphi 0, %s66
      %s70 = sphi 0, %s69
      %s86 = sphi 0, %s70
      %s92 = sphi 0, %s94
      %s95 = sphi 0, %s92
      %s96 = sphi 0, %s95
      %s112 = sphi 0, %s96
    $region4: #{up_forward.5} parent=1 // loop_header_branch
      %17 = sbr.rel (%p15) target = $region8
    $region5: #{up_forward.5} parent=1 // loop_body
      %s19 = ssub.s32 %s14, 1
      %s20 = ssub.s32 %s14, 2
      %s21 = sadd.s32 %s14, 1
      %s23 = sadd.s32 %s22, 1
      %p26 = scmp.eq.s32.totalorder %s14, 1
      %p27 = scmp.ne.s32.totalorder %s22, %s24
      %p28 = scmp.eq.s32.totalorder %s14, 0
      %p29 = por %p27, %p28
      %p30 = scmp.ne.s32.totalorder %s22, %s24
      %p31 = scmp.eq.s32.totalorder %s19, 1
      %p32 = por %p30, %p31
      %p33 = scmp.ne.s32.totalorder %s24, %s25
      %p34 = scmp.eq.s32.totalorder %s19, 0
      %p35 = por %p33, %p34
      %p36 = scmp.ne.s32.totalorder %s24, %s25
      %p37 = scmp.eq.s32.totalorder %s20, 1
      %p38 = por %p36, %p37
      %p40 = scmp.ne.s32.totalorder %s25, %s39
      %p41 = scmp.eq.s32.totalorder %s20, 0
      %p42 = por %p40, %p41
      %s44 = sadd.s32 %s43, 1
      %p47 = scmp.eq.s32.totalorder %s14, 1
      %p48 = scmp.ne.s32.totalorder %s43, %s45
      %p49 = scmp.eq.s32.totalorder %s14, 0
      %p50 = por %p48, %p49
      %p51 = scmp.ne.s32.totalorder %s43, %s45
      %p52 = scmp.eq.s32.totalorder %s19, 1
      %p53 = por %p51, %p52
      %p54 = scmp.ne.s32.totalorder %s45, %s46
      %p55 = scmp.eq.s32.totalorder %s19, 0
      %p56 = por %p54, %p55
      %p57 = scmp.ne.s32.totalorder %s45, %s46
      %p58 = scmp.eq.s32.totalorder %s20, 1
      %p59 = por %p57, %p58
      %p61 = scmp.ne.s32.totalorder %s46, %s60
      %p62 = scmp.eq.s32.totalorder %s20, 0
      %p63 = por %p61, %p62
      %s64 = ssub.s32 %s14, %s21
      %p65 = scmp.eq.s32.totalorder %s64, 0
      %s67 = sadd.s32 %s66, 1
      %s68 = scalar_select %p65, %s66, %s67
      %p71 = pneg %p65
      %p72 = scmp.eq.s32.totalorder %s14, 1
      %p73 = por %p71, %p72
      %p74 = scmp.ne.s32.totalorder %s66, %s69
      %p75 = scmp.eq.s32.totalorder %s14, 0
      %p76 = por %p74, %p75
      %p77 = scmp.ne.s32.totalorder %s66, %s69
      %p78 = scmp.eq.s32.totalorder %s19, 1
      %p79 = por %p77, %p78
      %p80 = scmp.ne.s32.totalorder %s69, %s70
      %p81 = scmp.eq.s32.totalorder %s19, 0
      %p82 = por %p80, %p81
      %p83 = scmp.ne.s32.totalorder %s69, %s70
      %p84 = scmp.eq.s32.totalorder %s20, 1
      %p85 = por %p83, %p84
      %p87 = scmp.ne.s32.totalorder %s70, %s86
      %p88 = scmp.eq.s32.totalorder %s20, 0
      %p89 = por %p87, %p88
      %s90 = ssub.s32 %s14, %s21
      %p91 = scmp.eq.s32.totalorder %s90, 0
      %s93 = sadd.s32 %s92, 1
      %s94 = scalar_select %p91, %s92, %s93
      %p97 = pneg %p91
      %p98 = scmp.eq.s32.totalorder %s14, 1
      %p99 = por %p97, %p98
      %p100 = scmp.ne.s32.totalorder %s92, %s95
      %p101 = scmp.eq.s32.totalorder %s14, 0
      %p102 = por %p100, %p101
      %p103 = scmp.ne.s32.totalorder %s92, %s95
      %p104 = scmp.eq.s32.totalorder %s19, 1
      %p105 = por %p103, %p104
      %p106 = scmp.ne.s32.totalorder %s95, %s96
      %p107 = scmp.eq.s32.totalorder %s19, 0
      %p108 = por %p106, %p107
      %p109 = scmp.ne.s32.totalorder %s95, %s96
      %p110 = scmp.eq.s32.totalorder %s20, 1
      %p111 = por %p109, %p110
      %p113 = scmp.ne.s32.totalorder %s96, %s112
      %p114 = scmp.eq.s32.totalorder %s20, 0
      %p115 = por %p113, %p114
      %p116 = scmp.le.s32.totalorder 1, %s14
      %p117 = scmp.lt.s32.totalorder %s14, 3
      %p118 = pnand %p116, %p117
      %p119 = pneg %p118
      // Predicated region
      $region9: #{up_forward.5} parent=5 // pred_check
        _
      $region10: #{up_forward.5} parent=5 // pred_check_branch
        %121 = sbr.rel (%p118) target = $region12
      $region11: #{up_forward.5} parent=5 // pred_region
        %s122 = ssub.s32 %s14, 1
        // Predicated region
        $region13: #{up_forward.5} parent=11 // pred_check
          %p123 = pneg %p35
        $region14: #{up_forward.5} parent=11 // pred_check_branch
          %125 = sbr.rel (%p123) target = $region16
        $region15: #{up_forward.5} parent=11 // pred_region
          %s127 = ssub.s32 16, 16
          %128 = vsyncadd [#allocation4], %s127
          %s130 = sshll.u32 %s0, 4
          %s131 = int_to_ptr.vmem [resolvable:$true] %s130
          %133 = dma.vmem_to_smem %s131, 16, [#allocation2], [#allocation4]
        $region16: #{up_forward.5} parent=11 // pred_fallthru
          _
        // Predicated region
        $region17: #{up_forward.5} parent=11 // pred_check
          %p134 = pneg %p56
        $region18: #{up_forward.5} parent=11 // pred_check_branch
          %136 = sbr.rel (%p134) target = $region20
        $region19: #{up_forward.5} parent=11 // pred_region
          %s138 = ssub.s32 16, 16
          %139 = vsyncadd [#allocation6], %s138
          %s141 = sshll.u32 %s1, 4
          %s142 = int_to_ptr.vmem [resolvable:$true] %s141
          %144 = dma.vmem_to_smem %s142, 16, [#allocation5], [#allocation6]
        $region20: #{up_forward.5} parent=11 // pred_fallthru
          _
      $region12: #{up_forward.5} parent=5 // pred_fallthru
        _
      %p145 = scmp.lt.s32.totalorder %s14, 2
      // Predicated region
      $region21: #{up_forward.5} parent=5 // pred_check
        %p146 = pneg %p145
      $region22: #{up_forward.5} parent=5 // pred_check_branch
        %148 = sbr.rel (%p146) target = $region24
      $region23: #{up_forward.5} parent=5 // pred_region
        // Predicated region
        $region25: #{up_forward.5} parent=23 // pred_check
          %p149 = pneg %p76
        $region26: #{up_forward.5} parent=23 // pred_check_branch
          %151 = sbr.rel (%p149) target = $region28
        $region27: #{up_forward.5} parent=23 // pred_region
          %p152 = scmp.lt.s32.totalorder %s14, 1
          %s153 = scalar_select %p152, %s14, 1
          %s154 = smul.addr %s153, 9
          %s155 = smul.addr %s154, 8
          %s156 = scalar_lea.vmem %s2, %s155
        $region28: #{up_forward.5} parent=23 // pred_fallthru
          _
      $region24: #{up_forward.5} parent=5 // pred_fallthru
        _
      %p157 = scmp.le.s32.totalorder 1, %s14
      %p158 = scmp.lt.s32.totalorder %s14, 3
      %p159 = pnand %p157, %p158
      %p160 = pneg %p159
      // Predicated region
      $region29: #{up_forward.5} parent=5 // pred_check
        _
      $region30: #{up_forward.5} parent=5 // pred_check_branch
        %162 = sbr.rel (%p159) target = $region32
      $region31: #{up_forward.5} parent=5 // pred_region
        %s163 = ssub.s32 %s14, 1
        // Predicated region
        $region33: #{up_forward.5} parent=31 // pred_check
          %p164 = pneg %p35
        $region34: #{up_forward.5} parent=31 // pred_check_branch
          %166 = sbr.rel (%p164) target = $region36
        $region35: #{up_forward.5} parent=31 // pred_region
          %167 = dma.done [#allocation4], 16
        $region36: #{up_forward.5} parent=31 // pred_fallthru
          _
        // Predicated region
        $region37: #{up_forward.5} parent=31 // pred_check
          %p168 = pneg %p56
        $region38: #{up_forward.5} parent=31 // pred_check_branch
          %170 = sbr.rel (%p168) target = $region40
        $region39: #{up_forward.5} parent=31 // pred_region
          %171 = dma.done [#allocation6], 16
        $region40: #{up_forward.5} parent=31 // pred_fallthru
          _
        %172 = sfence
        %p173 = pneg %p35
        %p174 = pneg %p32
        %p175 = pneg %p56
        %p176 = pneg %p53
        %p177 = scmp.lt.s32.totalorder %s19, 1
        %s178 = scalar_select %p177, %s19, 1
        %s179 = smul.addr %s178, 9
        %s180 = smul.addr %s179, 8
        %s181 = scalar_lea.vmem %s2, %s180
        %p182 = pneg %p82
        %p183 = pneg %p79
        %p184 = pneg %p108
        %p185 = pneg %p105
        %s186 = sand.u32 %s95, 1
        %s187 = scalar_lea.sflag [#allocation3], %s186
        %s188 = sand.u32 %s95, 1
        %s189 = smul.addr %s188, 48
        %s190 = scalar_lea.vmem [#allocation7], %s189
        %p191 = scmp.lt.s32.totalorder %s19, 1
        %s192 = scalar_select %p191, %s19, 1
        %s193 = smul.addr %s192, 9
        %s194 = smul.addr %s193, 8
        %s195 = scalar_lea.vmem %s2, %s194
        %v196 = vld [vmem:[%s195] sm:$0xff]
        %v197 = vld [vmem:[%s195 + $0x8] sm:$0xff]
        %v198 = vld [vmem:[%s195 + $0x10] sm:$0x3]
        %s199 = scalar_lea.vmem %s195, 24
        %v200 = vld [vmem:[%s199] sm:$0xff]
        %v201 = vld [vmem:[%s199 + $0x8] sm:$0xff]
        %v202 = vld [vmem:[%s199 + $0x10] sm:$0x3]
        %s203 = scalar_lea.vmem %s195, 48
        %v204 = vld [vmem:[%s203] sm:$0xff]
        %v205 = vld [vmem:[%s203 + $0x8] sm:$0xff]
        %v206 = vld [vmem:[%s203 + $0x10] sm:$0x3]
        %s207 = sld [smem:[#allocation5]]
        %v208 = vstv %s207
        %s209 = sld [smem:[#allocation2]]
        %v210 = vstv %s209
        %v211 = vmul.f32 %v210, %v196
        %v212 = vmul.f32 %v210, %v197
        %v213 = vadd.f32 %v208, %v211
        %v214 = vadd.f32 %v208, %v212
        %s215 = sld [smem:[#allocation2 + $0x1]]
        %v216 = vstv %s215
        %v217 = vmul.f32 %v216, %v196
        %v218 = vmul.f32 %v216, %v197
        %221 = vrot.lane.b32.xlu0 %v217, 127
        %v222 = vpop.permute.xlu0 %221
        %223 = vrot.lane.b32.xlu0 %v218, 127
        %v224 = vpop.permute.xlu0 %223
        %v227 = vadd.f32 %v213, %v222
        %v228 = vadd.f32 %v214, %v224
        %s229 = sld [smem:[#allocation2 + $0x2]]
        %v230 = vstv %s229
        %v231 = vmul.f32 %v230, %v196
        %v232 = vmul.f32 %v230, %v197
        %235 = vrot.lane.b32.xlu0 %v231, 126
        %v236 = vpop.permute.xlu0 %235
        %237 = vrot.lane.b32.xlu0 %v232, 126
        %v238 = vpop.permute.xlu0 %237
        %v241 = vadd.f32 %v227, %v236
        %v242 = vadd.f32 %v228, %v238
        %s243 = sld [smem:[#allocation2 + $0x3]]
        %v244 = vstv %s243
        %v245 = vmul.f32 %v244, %v196
        %v246 = vmul.f32 %v244, %v197
        %v247 = vmul.f32 %v244, %v198
        %vm251 = vcmask 1046528
        %v252 = vrot.slane %v245, 1
        %v253 = vrot.slane %v246, 1
        %v254 = vsel %vm251, %v252, %v253
        %v255 = vrot.slane %v247, 1
        %v256 = vsel %vm251, %v253, %v255
        %v259 = vadd.f32 %v241, %v254
        %v260 = vadd.f32 %v242, %v256
        %s261 = sld [smem:[#allocation2 + $0x4]]
        %v262 = vstv %s261
        %v263 = vmul.f32 %v262, %v196
        %v264 = vmul.f32 %v262, %v197
        %v265 = vmul.f32 %v262, %v198
        %v269 = vrot.slane %v263, 1
        %v270 = vrot.slane %v264, 1
        %v271 = vsel %vm251, %v269, %v270
        %v272 = vrot.slane %v265, 1
        %v273 = vsel %vm251, %v270, %v272
        %274 = vrot.lane.b32.xlu0 %v271, 127
        %v275 = vpop.permute.xlu0 %274
        %276 = vrot.lane.b32.xlu0 %v273, 127
        %v277 = vpop.permute.xlu0 %276
        %v280 = vadd.f32 %v259, %v275
        %v281 = vadd.f32 %v260, %v277
        %s282 = sld [smem:[#allocation2 + $0x5]]
        %v283 = vstv %s282
        %v284 = vmul.f32 %v283, %v196
        %v285 = vmul.f32 %v283, %v197
        %v286 = vmul.f32 %v283, %v198
        %v290 = vrot.slane %v284, 1
        %v291 = vrot.slane %v285, 1
        %v292 = vsel %vm251, %v290, %v291
        %v293 = vrot.slane %v286, 1
        %v294 = vsel %vm251, %v291, %v293
        %295 = vrot.lane.b32.xlu0 %v292, 126
        %v296 = vpop.permute.xlu0 %295
        %297 = vrot.lane.b32.xlu0 %v294, 126
        %v298 = vpop.permute.xlu0 %297
        %v301 = vadd.f32 %v280, %v296
        %v302 = vadd.f32 %v281, %v298
        %s303 = sld [smem:[#allocation2 + $0x6]]
        %v304 = vstv %s303
        %v305 = vmul.f32 %v304, %v196
        %v306 = vmul.f32 %v304, %v197
        %v307 = vmul.f32 %v304, %v198
        %vm311 = vcmask 1045504
        %v312 = vrot.slane %v305, 2
        %v313 = vrot.slane %v306, 2
        %v314 = vsel %vm311, %v312, %v313
        %v315 = vrot.slane %v307, 2
        %v316 = vsel %vm311, %v313, %v315
        %v319 = vadd.f32 %v301, %v314
        %v320 = vadd.f32 %v302, %v316
        %s321 = sld [smem:[#allocation2 + $0x7]]
        %v322 = vstv %s321
        %v323 = vmul.f32 %v322, %v196
        %v324 = vmul.f32 %v322, %v197
        %v325 = vmul.f32 %v322, %v198
        %v329 = vrot.slane %v323, 2
        %v330 = vrot.slane %v324, 2
        %v331 = vsel %vm311, %v329, %v330
        %v332 = vrot.slane %v325, 2
        %v333 = vsel %vm311, %v330, %v332
        %334 = vrot.lane.b32.xlu0 %v331, 127
        %v335 = vpop.permute.xlu0 %334
        %336 = vrot.lane.b32.xlu0 %v333, 127
        %v337 = vpop.permute.xlu0 %336
        %v340 = vadd.f32 %v319, %v335
        %v341 = vadd.f32 %v320, %v337
        %s342 = sld [smem:[#allocation2 + $0x8]]
        %v343 = vstv %s342
        %v344 = vmul.f32 %v343, %v196
        %v345 = vmul.f32 %v343, %v197
        %v346 = vmul.f32 %v343, %v198
        %v350 = vrot.slane %v344, 2
        %v351 = vrot.slane %v345, 2
        %v352 = vsel %vm311, %v350, %v351
        %v353 = vrot.slane %v346, 2
        %v354 = vsel %vm311, %v351, %v353
        %355 = vrot.lane.b32.xlu0 %v352, 126
        %v356 = vpop.permute.xlu0 %355
        %357 = vrot.lane.b32.xlu0 %v354, 126
        %v358 = vpop.permute.xlu0 %357
        %v361 = vadd.f32 %v340, %v356
        %v362 = vadd.f32 %v341, %v358
        %s363 = sld [smem:[#allocation2 + $0x9]]
        %v364 = vstv %s363
        %v365 = vmul.f32 %v364, %v200
        %v366 = vmul.f32 %v364, %v201
        %v367 = vadd.f32 %v361, %v365
        %v368 = vadd.f32 %v362, %v366
        %s369 = sld [smem:[#allocation2 + $0xa]]
        %v370 = vstv %s369
        %v371 = vmul.f32 %v370, %v200
        %v372 = vmul.f32 %v370, %v201
        %375 = vrot.lane.b32.xlu0 %v371, 127
        %v376 = vpop.permute.xlu0 %375
        %377 = vrot.lane.b32.xlu0 %v372, 127
        %v378 = vpop.permute.xlu0 %377
        %v381 = vadd.f32 %v367, %v376
        %v382 = vadd.f32 %v368, %v378
        %s383 = sld [smem:[#allocation2 + $0xb]]
        %v384 = vstv %s383
        %v385 = vmul.f32 %v384, %v200
        %v386 = vmul.f32 %v384, %v201
        %389 = vrot.lane.b32.xlu0 %v385, 126
        %v390 = vpop.permute.xlu0 %389
        %391 = vrot.lane.b32.xlu0 %v386, 126
        %v392 = vpop.permute.xlu0 %391
        %v395 = vadd.f32 %v381, %v390
        %v396 = vadd.f32 %v382, %v392
        %s397 = sld [smem:[#allocation2 + $0xc]]
        %v398 = vstv %s397
        %v399 = vmul.f32 %v398, %v200
        %v400 = vmul.f32 %v398, %v201
        %v401 = vmul.f32 %v398, %v202
        %v405 = vrot.slane %v399, 1
        %v406 = vrot.slane %v400, 1
        %v407 = vsel %vm251, %v405, %v406
        %v408 = vrot.slane %v401, 1
        %v409 = vsel %vm251, %v406, %v408
        %v412 = vadd.f32 %v395, %v407
        %v413 = vadd.f32 %v396, %v409
        %s414 = sld [smem:[#allocation2 + $0xd]]
        %v415 = vstv %s414
        %v416 = vmul.f32 %v415, %v200
        %v417 = vmul.f32 %v415, %v201
        %v418 = vmul.f32 %v415, %v202
        %v422 = vrot.slane %v416, 1
        %v423 = vrot.slane %v417, 1
        %v424 = vsel %vm251, %v422, %v423
        %v425 = vrot.slane %v418, 1
        %v426 = vsel %vm251, %v423, %v425
        %427 = vrot.lane.b32.xlu0 %v424, 127
        %v428 = vpop.permute.xlu0 %427
        %429 = vrot.lane.b32.xlu0 %v426, 127
        %v430 = vpop.permute.xlu0 %429
        %v433 = vadd.f32 %v412, %v428
        %v434 = vadd.f32 %v413, %v430
        %s435 = sld [smem:[#allocation2 + $0xe]]
        %v436 = vstv %s435
        %v437 = vmul.f32 %v436, %v200
        %v438 = vmul.f32 %v436, %v201
        %v439 = vmul.f32 %v436, %v202
        %v443 = vrot.slane %v437, 1
        %v444 = vrot.slane %v438, 1
        %v445 = vsel %vm251, %v443, %v444
        %v446 = vrot.slane %v439, 1
        %v447 = vsel %vm251, %v444, %v446
        %448 = vrot.lane.b32.xlu0 %v445, 126
        %v449 = vpop.permute.xlu0 %448
        %450 = vrot.lane.b32.xlu0 %v447, 126
        %v451 = vpop.permute.xlu0 %450
        %v454 = vadd.f32 %v433, %v449
        %v455 = vadd.f32 %v434, %v451
        %s456 = sld [smem:[#allocation2 + $0xf]]
        %v457 = vstv %s456
        %v458 = vmul.f32 %v457, %v200
        %v459 = vmul.f32 %v457, %v201
        %v460 = vmul.f32 %v457, %v202
        %v464 = vrot.slane %v458, 2
        %v465 = vrot.slane %v459, 2
        %v466 = vsel %vm311, %v464, %v465
        %v467 = vrot.slane %v460, 2
        %v468 = vsel %vm311, %v465, %v467
        %v471 = vadd.f32 %v454, %v466
        %v472 = vadd.f32 %v455, %v468
        %s473 = sld [smem:[#allocation2 + $0x10]]
        %v474 = vstv %s473
        %v475 = vmul.f32 %v474, %v200
        %v476 = vmul.f32 %v474, %v201
        %v477 = vmul.f32 %v474, %v202
        %v481 = vrot.slane %v475, 2
        %v482 = vrot.slane %v476, 2
        %v483 = vsel %vm311, %v481, %v482
        %v484 = vrot.slane %v477, 2
        %v485 = vsel %vm311, %v482, %v484
        %486 = vrot.lane.b32.xlu0 %v483, 127
        %v487 = vpop.permute.xlu0 %486
        %488 = vrot.lane.b32.xlu0 %v485, 127
        %v489 = vpop.permute.xlu0 %488
        %v492 = vadd.f32 %v471, %v487
        %v493 = vadd.f32 %v472, %v489
        %s494 = sld [smem:[#allocation2 + $0x11]]
        %v495 = vstv %s494
        %v496 = vmul.f32 %v495, %v200
        %v497 = vmul.f32 %v495, %v201
        %v498 = vmul.f32 %v495, %v202
        %v502 = vrot.slane %v496, 2
        %v503 = vrot.slane %v497, 2
        %v504 = vsel %vm311, %v502, %v503
        %v505 = vrot.slane %v498, 2
        %v506 = vsel %vm311, %v503, %v505
        %507 = vrot.lane.b32.xlu0 %v504, 126
        %v508 = vpop.permute.xlu0 %507
        %509 = vrot.lane.b32.xlu0 %v506, 126
        %v510 = vpop.permute.xlu0 %509
        %v513 = vadd.f32 %v492, %v508
        %v514 = vadd.f32 %v493, %v510
        %s515 = sld [smem:[#allocation2 + $0x12]]
        %v516 = vstv %s515
        %v517 = vmul.f32 %v516, %v204
        %v518 = vmul.f32 %v516, %v205
        %v519 = vadd.f32 %v513, %v517
        %v520 = vadd.f32 %v514, %v518
        %s521 = sld [smem:[#allocation2 + $0x13]]
        %v522 = vstv %s521
        %v523 = vmul.f32 %v522, %v204
        %v524 = vmul.f32 %v522, %v205
        %527 = vrot.lane.b32.xlu0 %v523, 127
        %v528 = vpop.permute.xlu0 %527
        %529 = vrot.lane.b32.xlu0 %v524, 127
        %v530 = vpop.permute.xlu0 %529
        %v533 = vadd.f32 %v519, %v528
        %v534 = vadd.f32 %v520, %v530
        %s535 = sld [smem:[#allocation2 + $0x14]]
        %v536 = vstv %s535
        %v537 = vmul.f32 %v536, %v204
        %v538 = vmul.f32 %v536, %v205
        %541 = vrot.lane.b32.xlu0 %v537, 126
        %v542 = vpop.permute.xlu0 %541
        %543 = vrot.lane.b32.xlu0 %v538, 126
        %v544 = vpop.permute.xlu0 %543
        %v547 = vadd.f32 %v533, %v542
        %v548 = vadd.f32 %v534, %v544
        %s549 = sld [smem:[#allocation2 + $0x15]]
        %v550 = vstv %s549
        %v551 = vmul.f32 %v550, %v204
        %v552 = vmul.f32 %v550, %v205
        %v553 = vmul.f32 %v550, %v206
        %v557 = vrot.slane %v551, 1
        %v558 = vrot.slane %v552, 1
        %v559 = vsel %vm251, %v557, %v558
        %v560 = vrot.slane %v553, 1
        %v561 = vsel %vm251, %v558, %v560
        %v564 = vadd.f32 %v547, %v559
        %v565 = vadd.f32 %v548, %v561
        %s566 = sld [smem:[#allocation2 + $0x16]]
        %v567 = vstv %s566
        %v568 = vmul.f32 %v567, %v204
        %v569 = vmul.f32 %v567, %v205
        %v570 = vmul.f32 %v567, %v206
        %v574 = vrot.slane %v568, 1
        %v575 = vrot.slane %v569, 1
        %v576 = vsel %vm251, %v574, %v575
        %v577 = vrot.slane %v570, 1
        %v578 = vsel %vm251, %v575, %v577
        %579 = vrot.lane.b32.xlu0 %v576, 127
        %v580 = vpop.permute.xlu0 %579
        %581 = vrot.lane.b32.xlu0 %v578, 127
        %v582 = vpop.permute.xlu0 %581
        %v585 = vadd.f32 %v564, %v580
        %v586 = vadd.f32 %v565, %v582
        %s587 = sld [smem:[#allocation2 + $0x17]]
        %v588 = vstv %s587
        %v589 = vmul.f32 %v588, %v204
        %v590 = vmul.f32 %v588, %v205
        %v591 = vmul.f32 %v588, %v206
        %v595 = vrot.slane %v589, 1
        %v596 = vrot.slane %v590, 1
        %v597 = vsel %vm251, %v595, %v596
        %v598 = vrot.slane %v591, 1
        %v599 = vsel %vm251, %v596, %v598
        %600 = vrot.lane.b32.xlu0 %v597, 126
        %v601 = vpop.permute.xlu0 %600
        %602 = vrot.lane.b32.xlu0 %v599, 126
        %v603 = vpop.permute.xlu0 %602
        %v606 = vadd.f32 %v585, %v601
        %v607 = vadd.f32 %v586, %v603
        %s608 = sld [smem:[#allocation2 + $0x18]]
        %v609 = vstv %s608
        %v610 = vmul.f32 %v609, %v204
        %v611 = vmul.f32 %v609, %v205
        %v612 = vmul.f32 %v609, %v206
        %v616 = vrot.slane %v610, 2
        %v617 = vrot.slane %v611, 2
        %v618 = vsel %vm311, %v616, %v617
        %v619 = vrot.slane %v612, 2
        %v620 = vsel %vm311, %v617, %v619
        %v623 = vadd.f32 %v606, %v618
        %v624 = vadd.f32 %v607, %v620
        %s625 = sld [smem:[#allocation2 + $0x19]]
        %v626 = vstv %s625
        %v627 = vmul.f32 %v626, %v204
        %v628 = vmul.f32 %v626, %v205
        %v629 = vmul.f32 %v626, %v206
        %v633 = vrot.slane %v627, 2
        %v634 = vrot.slane %v628, 2
        %v635 = vsel %vm311, %v633, %v634
        %v636 = vrot.slane %v629, 2
        %v637 = vsel %vm311, %v634, %v636
        %638 = vrot.lane.b32.xlu0 %v635, 127
        %v639 = vpop.permute.xlu0 %638
        %640 = vrot.lane.b32.xlu0 %v637, 127
        %v641 = vpop.permute.xlu0 %640
        %v644 = vadd.f32 %v623, %v639
        %v645 = vadd.f32 %v624, %v641
        %s646 = sld [smem:[#allocation2 + $0x1a]]
        %v647 = vstv %s646
        %v648 = vmul.f32 %v647, %v204
        %v649 = vmul.f32 %v647, %v205
        %v650 = vmul.f32 %v647, %v206
        %v654 = vrot.slane %v648, 2
        %v655 = vrot.slane %v649, 2
        %v656 = vsel %vm311, %v654, %v655
        %v657 = vrot.slane %v650, 2
        %v658 = vsel %vm311, %v655, %v657
        %659 = vrot.lane.b32.xlu0 %v656, 126
        %v660 = vpop.permute.xlu0 %659
        %661 = vrot.lane.b32.xlu0 %v658, 126
        %v662 = vpop.permute.xlu0 %661
        %v665 = vadd.f32 %v644, %v660
        %v666 = vadd.f32 %v645, %v662
        %v667 = vmax.f32 %v665, 0.0
        %v668 = vmax.f32 %v666, 0.0
        %vm669 = vcmask 130048
        %670 = vst.msk [vmem:[%s190] sm:$0xff] %vm669, %v667
        %671 = vst.msk [vmem:[%s190 + $0x8] sm:$0xff] %vm669, %v668
        %s672 = sld [smem:[#allocation5 + $0x1]]
        %v673 = vstv %s672
        %s674 = sld [smem:[#allocation2 + $0x1b]]
        %v675 = vstv %s674
        %v676 = vmul.f32 %v675, %v196
        %v677 = vmul.f32 %v675, %v197
        %v678 = vadd.f32 %v673, %v676
        %v679 = vadd.f32 %v673, %v677
        %s680 = sld [smem:[#allocation2 + $0x1c]]
        %v681 = vstv %s680
        %v682 = vmul.f32 %v681, %v196
        %v683 = vmul.f32 %v681, %v197
        %686 = vrot.lane.b32.xlu0 %v682, 127
        %v687 = vpop.permute.xlu0 %686
        %688 = vrot.lane.b32.xlu0 %v683, 127
        %v689 = vpop.permute.xlu0 %688
        %v692 = vadd.f32 %v678, %v687
        %v693 = vadd.f32 %v679, %v689
        %s694 = sld [smem:[#allocation2 + $0x1d]]
        %v695 = vstv %s694
        %v696 = vmul.f32 %v695, %v196
        %v697 = vmul.f32 %v695, %v197
        %700 = vrot.lane.b32.xlu0 %v696, 126
        %v701 = vpop.permute.xlu0 %700
        %702 = vrot.lane.b32.xlu0 %v697, 126
        %v703 = vpop.permute.xlu0 %702
        %v706 = vadd.f32 %v692, %v701
        %v707 = vadd.f32 %v693, %v703
        %s708 = sld [smem:[#allocation2 + $0x1e]]
        %v709 = vstv %s708
        %v710 = vmul.f32 %v709, %v196
        %v711 = vmul.f32 %v709, %v197
        %v712 = vmul.f32 %v709, %v198
        %v716 = vrot.slane %v710, 1
        %v717 = vrot.slane %v711, 1
        %v718 = vsel %vm251, %v716, %v717
        %v719 = vrot.slane %v712, 1
        %v720 = vsel %vm251, %v717, %v719
        %v723 = vadd.f32 %v706, %v718
        %v724 = vadd.f32 %v707, %v720
        %s725 = sld [smem:[#allocation2 + $0x1f]]
        %v726 = vstv %s725
        %v727 = vmul.f32 %v726, %v196
        %v728 = vmul.f32 %v726, %v197
        %v729 = vmul.f32 %v726, %v198
        %v733 = vrot.slane %v727, 1
        %v734 = vrot.slane %v728, 1
        %v735 = vsel %vm251, %v733, %v734
        %v736 = vrot.slane %v729, 1
        %v737 = vsel %vm251, %v734, %v736
        %738 = vrot.lane.b32.xlu0 %v735, 127
        %v739 = vpop.permute.xlu0 %738
        %740 = vrot.lane.b32.xlu0 %v737, 127
        %v741 = vpop.permute.xlu0 %740
        %v744 = vadd.f32 %v723, %v739
        %v745 = vadd.f32 %v724, %v741
        %s746 = sld [smem:[#allocation2 + $0x20]]
        %v747 = vstv %s746
        %v748 = vmul.f32 %v747, %v196
        %v749 = vmul.f32 %v747, %v197
        %v750 = vmul.f32 %v747, %v198
        %v754 = vrot.slane %v748, 1
        %v755 = vrot.slane %v749, 1
        %v756 = vsel %vm251, %v754, %v755
        %v757 = vrot.slane %v750, 1
        %v758 = vsel %vm251, %v755, %v757
        %759 = vrot.lane.b32.xlu0 %v756, 126
        %v760 = vpop.permute.xlu0 %759
        %761 = vrot.lane.b32.xlu0 %v758, 126
        %v762 = vpop.permute.xlu0 %761
        %v765 = vadd.f32 %v744, %v760
        %v766 = vadd.f32 %v745, %v762
        %s767 = sld [smem:[#allocation2 + $0x21]]
        %v768 = vstv %s767
        %v769 = vmul.f32 %v768, %v196
        %v770 = vmul.f32 %v768, %v197
        %v771 = vmul.f32 %v768, %v198
        %v775 = vrot.slane %v769, 2
        %v776 = vrot.slane %v770, 2
        %v777 = vsel %vm311, %v775, %v776
        %v778 = vrot.slane %v771, 2
        %v779 = vsel %vm311, %v776, %v778
        %v782 = vadd.f32 %v765, %v777
        %v783 = vadd.f32 %v766, %v779
        %s784 = sld [smem:[#allocation2 + $0x22]]
        %v785 = vstv %s784
        %v786 = vmul.f32 %v785, %v196
        %v787 = vmul.f32 %v785, %v197
        %v788 = vmul.f32 %v785, %v198
        %v792 = vrot.slane %v786, 2
        %v793 = vrot.slane %v787, 2
        %v794 = vsel %vm311, %v792, %v793
        %v795 = vrot.slane %v788, 2
        %v796 = vsel %vm311, %v793, %v795
        %797 = vrot.lane.b32.xlu0 %v794, 127
        %v798 = vpop.permute.xlu0 %797
        %799 = vrot.lane.b32.xlu0 %v796, 127
        %v800 = vpop.permute.xlu0 %799
        %v803 = vadd.f32 %v782, %v798
        %v804 = vadd.f32 %v783, %v800
        %s805 = sld [smem:[#allocation2 + $0x23]]
        %v806 = vstv %s805
        %v807 = vmul.f32 %v806, %v196
        %v808 = vmul.f32 %v806, %v197
        %v809 = vmul.f32 %v806, %v198
        %v813 = vrot.slane %v807, 2
        %v814 = vrot.slane %v808, 2
        %v815 = vsel %vm311, %v813, %v814
        %v816 = vrot.slane %v809, 2
        %v817 = vsel %vm311, %v814, %v816
        %818 = vrot.lane.b32.xlu0 %v815, 126
        %v819 = vpop.permute.xlu0 %818
        %820 = vrot.lane.b32.xlu0 %v817, 126
        %v821 = vpop.permute.xlu0 %820
        %v824 = vadd.f32 %v803, %v819
        %v825 = vadd.f32 %v804, %v821
        %s826 = sld [smem:[#allocation2 + $0x24]]
        %v827 = vstv %s826
        %v828 = vmul.f32 %v827, %v200
        %v829 = vmul.f32 %v827, %v201
        %v830 = vadd.f32 %v824, %v828
        %v831 = vadd.f32 %v825, %v829
        %s832 = sld [smem:[#allocation2 + $0x25]]
        %v833 = vstv %s832
        %v834 = vmul.f32 %v833, %v200
        %v835 = vmul.f32 %v833, %v201
        %838 = vrot.lane.b32.xlu0 %v834, 127
        %v839 = vpop.permute.xlu0 %838
        %840 = vrot.lane.b32.xlu0 %v835, 127
        %v841 = vpop.permute.xlu0 %840
        %v844 = vadd.f32 %v830, %v839
        %v845 = vadd.f32 %v831, %v841
        %s846 = sld [smem:[#allocation2 + $0x26]]
        %v847 = vstv %s846
        %v848 = vmul.f32 %v847, %v200
        %v849 = vmul.f32 %v847, %v201
        %852 = vrot.lane.b32.xlu0 %v848, 126
        %v853 = vpop.permute.xlu0 %852
        %854 = vrot.lane.b32.xlu0 %v849, 126
        %v855 = vpop.permute.xlu0 %854
        %v858 = vadd.f32 %v844, %v853
        %v859 = vadd.f32 %v845, %v855
        %s860 = sld [smem:[#allocation2 + $0x27]]
        %v861 = vstv %s860
        %v862 = vmul.f32 %v861, %v200
        %v863 = vmul.f32 %v861, %v201
        %v864 = vmul.f32 %v861, %v202
        %v868 = vrot.slane %v862, 1
        %v869 = vrot.slane %v863, 1
        %v870 = vsel %vm251, %v868, %v869
        %v871 = vrot.slane %v864, 1
        %v872 = vsel %vm251, %v869, %v871
        %v875 = vadd.f32 %v858, %v870
        %v876 = vadd.f32 %v859, %v872
        %s877 = sld [smem:[#allocation2 + $0x28]]
        %v878 = vstv %s877
        %v879 = vmul.f32 %v878, %v200
        %v880 = vmul.f32 %v878, %v201
        %v881 = vmul.f32 %v878, %v202
        %v885 = vrot.slane %v879, 1
        %v886 = vrot.slane %v880, 1
        %v887 = vsel %vm251, %v885, %v886
        %v888 = vrot.slane %v881, 1
        %v889 = vsel %vm251, %v886, %v888
        %890 = vrot.lane.b32.xlu0 %v887, 127
        %v891 = vpop.permute.xlu0 %890
        %892 = vrot.lane.b32.xlu0 %v889, 127
        %v893 = vpop.permute.xlu0 %892
        %v896 = vadd.f32 %v875, %v891
        %v897 = vadd.f32 %v876, %v893
        %s898 = sld [smem:[#allocation2 + $0x29]]
        %v899 = vstv %s898
        %v900 = vmul.f32 %v899, %v200
        %v901 = vmul.f32 %v899, %v201
        %v902 = vmul.f32 %v899, %v202
        %v906 = vrot.slane %v900, 1
        %v907 = vrot.slane %v901, 1
        %v908 = vsel %vm251, %v906, %v907
        %v909 = vrot.slane %v902, 1
        %v910 = vsel %vm251, %v907, %v909
        %911 = vrot.lane.b32.xlu0 %v908, 126
        %v912 = vpop.permute.xlu0 %911
        %913 = vrot.lane.b32.xlu0 %v910, 126
        %v914 = vpop.permute.xlu0 %913
        %v917 = vadd.f32 %v896, %v912
        %v918 = vadd.f32 %v897, %v914
        %s919 = sld [smem:[#allocation2 + $0x2a]]
        %v920 = vstv %s919
        %v921 = vmul.f32 %v920, %v200
        %v922 = vmul.f32 %v920, %v201
        %v923 = vmul.f32 %v920, %v202
        %v927 = vrot.slane %v921, 2
        %v928 = vrot.slane %v922, 2
        %v929 = vsel %vm311, %v927, %v928
        %v930 = vrot.slane %v923, 2
        %v931 = vsel %vm311, %v928, %v930
        %v934 = vadd.f32 %v917, %v929
        %v935 = vadd.f32 %v918, %v931
        %s936 = sld [smem:[#allocation2 + $0x2b]]
        %v937 = vstv %s936
        %v938 = vmul.f32 %v937, %v200
        %v939 = vmul.f32 %v937, %v201
        %v940 = vmul.f32 %v937, %v202
        %v944 = vrot.slane %v938, 2
        %v945 = vrot.slane %v939, 2
        %v946 = vsel %vm311, %v944, %v945
        %v947 = vrot.slane %v940, 2
        %v948 = vsel %vm311, %v945, %v947
        %949 = vrot.lane.b32.xlu0 %v946, 127
        %v950 = vpop.permute.xlu0 %949
        %951 = vrot.lane.b32.xlu0 %v948, 127
        %v952 = vpop.permute.xlu0 %951
        %v955 = vadd.f32 %v934, %v950
        %v956 = vadd.f32 %v935, %v952
        %s957 = sld [smem:[#allocation2 + $0x2c]]
        %v958 = vstv %s957
        %v959 = vmul.f32 %v958, %v200
        %v960 = vmul.f32 %v958, %v201
        %v961 = vmul.f32 %v958, %v202
        %v965 = vrot.slane %v959, 2
        %v966 = vrot.slane %v960, 2
        %v967 = vsel %vm311, %v965, %v966
        %v968 = vrot.slane %v961, 2
        %v969 = vsel %vm311, %v966, %v968
        %970 = vrot.lane.b32.xlu0 %v967, 126
        %v971 = vpop.permute.xlu0 %970
        %972 = vrot.lane.b32.xlu0 %v969, 126
        %v973 = vpop.permute.xlu0 %972
        %v976 = vadd.f32 %v955, %v971
        %v977 = vadd.f32 %v956, %v973
        %s978 = sld [smem:[#allocation2 + $0x2d]]
        %v979 = vstv %s978
        %v980 = vmul.f32 %v979, %v204
        %v981 = vmul.f32 %v979, %v205
        %v982 = vadd.f32 %v976, %v980
        %v983 = vadd.f32 %v977, %v981
        %s984 = sld [smem:[#allocation2 + $0x2e]]
        %v985 = vstv %s984
        %v986 = vmul.f32 %v985, %v204
        %v987 = vmul.f32 %v985, %v205
        %990 = vrot.lane.b32.xlu0 %v986, 127
        %v991 = vpop.permute.xlu0 %990
        %992 = vrot.lane.b32.xlu0 %v987, 127
        %v993 = vpop.permute.xlu0 %992
        %v996 = vadd.f32 %v982, %v991
        %v997 = vadd.f32 %v983, %v993
        %s998 = sld [smem:[#allocation2 + $0x2f]]
        %v999 = vstv %s998
        %v1000 = vmul.f32 %v999, %v204
        %v1001 = vmul.f32 %v999, %v205
        %1004 = vrot.lane.b32.xlu0 %v1000, 126
        %v1005 = vpop.permute.xlu0 %1004
        %1006 = vrot.lane.b32.xlu0 %v1001, 126
        %v1007 = vpop.permute.xlu0 %1006
        %v1010 = vadd.f32 %v996, %v1005
        %v1011 = vadd.f32 %v997, %v1007
        %s1012 = sld [smem:[#allocation2 + $0x30]]
        %v1013 = vstv %s1012
        %v1014 = vmul.f32 %v1013, %v204
        %v1015 = vmul.f32 %v1013, %v205
        %v1016 = vmul.f32 %v1013, %v206
        %v1020 = vrot.slane %v1014, 1
        %v1021 = vrot.slane %v1015, 1
        %v1022 = vsel %vm251, %v1020, %v1021
        %v1023 = vrot.slane %v1016, 1
        %v1024 = vsel %vm251, %v1021, %v1023
        %v1027 = vadd.f32 %v1010, %v1022
        %v1028 = vadd.f32 %v1011, %v1024
        %s1029 = sld [smem:[#allocation2 + $0x31]]
        %v1030 = vstv %s1029
        %v1031 = vmul.f32 %v1030, %v204
        %v1032 = vmul.f32 %v1030, %v205
        %v1033 = vmul.f32 %v1030, %v206
        %v1037 = vrot.slane %v1031, 1
        %v1038 = vrot.slane %v1032, 1
        %v1039 = vsel %vm251, %v1037, %v1038
        %v1040 = vrot.slane %v1033, 1
        %v1041 = vsel %vm251, %v1038, %v1040
        %1042 = vrot.lane.b32.xlu0 %v1039, 127
        %v1043 = vpop.permute.xlu0 %1042
        %1044 = vrot.lane.b32.xlu0 %v1041, 127
        %v1045 = vpop.permute.xlu0 %1044
        %v1048 = vadd.f32 %v1027, %v1043
        %v1049 = vadd.f32 %v1028, %v1045
        %s1050 = sld [smem:[#allocation2 + $0x32]]
        %v1051 = vstv %s1050
        %v1052 = vmul.f32 %v1051, %v204
        %v1053 = vmul.f32 %v1051, %v205
        %v1054 = vmul.f32 %v1051, %v206
        %v1058 = vrot.slane %v1052, 1
        %v1059 = vrot.slane %v1053, 1
        %v1060 = vsel %vm251, %v1058, %v1059
        %v1061 = vrot.slane %v1054, 1
        %v1062 = vsel %vm251, %v1059, %v1061
        %1063 = vrot.lane.b32.xlu0 %v1060, 126
        %v1064 = vpop.permute.xlu0 %1063
        %1065 = vrot.lane.b32.xlu0 %v1062, 126
        %v1066 = vpop.permute.xlu0 %1065
        %v1069 = vadd.f32 %v1048, %v1064
        %v1070 = vadd.f32 %v1049, %v1066
        %s1071 = sld [smem:[#allocation2 + $0x33]]
        %v1072 = vstv %s1071
        %v1073 = vmul.f32 %v1072, %v204
        %v1074 = vmul.f32 %v1072, %v205
        %v1075 = vmul.f32 %v1072, %v206
        %v1079 = vrot.slane %v1073, 2
        %v1080 = vrot.slane %v1074, 2
        %v1081 = vsel %vm311, %v1079, %v1080
        %v1082 = vrot.slane %v1075, 2
        %v1083 = vsel %vm311, %v1080, %v1082
        %v1086 = vadd.f32 %v1069, %v1081
        %v1087 = vadd.f32 %v1070, %v1083
        %s1088 = sld [smem:[#allocation2 + $0x34]]
        %v1089 = vstv %s1088
        %v1090 = vmul.f32 %v1089, %v204
        %v1091 = vmul.f32 %v1089, %v205
        %v1092 = vmul.f32 %v1089, %v206
        %v1096 = vrot.slane %v1090, 2
        %v1097 = vrot.slane %v1091, 2
        %v1098 = vsel %vm311, %v1096, %v1097
        %v1099 = vrot.slane %v1092, 2
        %v1100 = vsel %vm311, %v1097, %v1099
        %1101 = vrot.lane.b32.xlu0 %v1098, 127
        %v1102 = vpop.permute.xlu0 %1101
        %1103 = vrot.lane.b32.xlu0 %v1100, 127
        %v1104 = vpop.permute.xlu0 %1103
        %v1107 = vadd.f32 %v1086, %v1102
        %v1108 = vadd.f32 %v1087, %v1104
        %s1109 = sld [smem:[#allocation2 + $0x35]]
        %v1110 = vstv %s1109
        %v1111 = vmul.f32 %v1110, %v204
        %v1112 = vmul.f32 %v1110, %v205
        %v1113 = vmul.f32 %v1110, %v206
        %v1117 = vrot.slane %v1111, 2
        %v1118 = vrot.slane %v1112, 2
        %v1119 = vsel %vm311, %v1117, %v1118
        %v1120 = vrot.slane %v1113, 2
        %v1121 = vsel %vm311, %v1118, %v1120
        %1122 = vrot.lane.b32.xlu0 %v1119, 126
        %v1123 = vpop.permute.xlu0 %1122
        %1124 = vrot.lane.b32.xlu0 %v1121, 126
        %v1125 = vpop.permute.xlu0 %1124
        %v1128 = vadd.f32 %v1107, %v1123
        %v1129 = vadd.f32 %v1108, %v1125
        %v1130 = vmax.f32 %v1128, 0.0
        %v1131 = vmax.f32 %v1129, 0.0
        %s1132 = scalar_lea.vmem %s190, 16 [#allocation7]
        %1133 = vst.msk [vmem:[%s1132] sm:$0xff] %vm669, %v1130
        %1134 = vst.msk [vmem:[%s1132 + $0x8] sm:$0xff] %vm669, %v1131
        %s1135 = sld [smem:[#allocation5 + $0x2]]
        %v1136 = vstv %s1135
        %s1137 = sld [smem:[#allocation2 + $0x36]]
        %v1138 = vstv %s1137
        %v1139 = vmul.f32 %v1138, %v196
        %v1140 = vmul.f32 %v1138, %v197
        %v1141 = vadd.f32 %v1136, %v1139
        %v1142 = vadd.f32 %v1136, %v1140
        %s1143 = sld [smem:[#allocation2 + $0x37]]
        %v1144 = vstv %s1143
        %v1145 = vmul.f32 %v1144, %v196
        %v1146 = vmul.f32 %v1144, %v197
        %1149 = vrot.lane.b32.xlu0 %v1145, 127
        %v1150 = vpop.permute.xlu0 %1149
        %1151 = vrot.lane.b32.xlu0 %v1146, 127
        %v1152 = vpop.permute.xlu0 %1151
        %v1155 = vadd.f32 %v1141, %v1150
        %v1156 = vadd.f32 %v1142, %v1152
        %s1157 = sld [smem:[#allocation2 + $0x38]]
        %v1158 = vstv %s1157
        %v1159 = vmul.f32 %v1158, %v196
        %v1160 = vmul.f32 %v1158, %v197
        %1163 = vrot.lane.b32.xlu0 %v1159, 126
        %v1164 = vpop.permute.xlu0 %1163
        %1165 = vrot.lane.b32.xlu0 %v1160, 126
        %v1166 = vpop.permute.xlu0 %1165
        %v1169 = vadd.f32 %v1155, %v1164
        %v1170 = vadd.f32 %v1156, %v1166
        %s1171 = sld [smem:[#allocation2 + $0x39]]
        %v1172 = vstv %s1171
        %v1173 = vmul.f32 %v1172, %v196
        %v1174 = vmul.f32 %v1172, %v197
        %v1175 = vmul.f32 %v1172, %v198
        %v1179 = vrot.slane %v1173, 1
        %v1180 = vrot.slane %v1174, 1
        %v1181 = vsel %vm251, %v1179, %v1180
        %v1182 = vrot.slane %v1175, 1
        %v1183 = vsel %vm251, %v1180, %v1182
        %v1186 = vadd.f32 %v1169, %v1181
        %v1187 = vadd.f32 %v1170, %v1183
        %s1188 = sld [smem:[#allocation2 + $0x3a]]
        %v1189 = vstv %s1188
        %v1190 = vmul.f32 %v1189, %v196
        %v1191 = vmul.f32 %v1189, %v197
        %v1192 = vmul.f32 %v1189, %v198
        %v1196 = vrot.slane %v1190, 1
        %v1197 = vrot.slane %v1191, 1
        %v1198 = vsel %vm251, %v1196, %v1197
        %v1199 = vrot.slane %v1192, 1
        %v1200 = vsel %vm251, %v1197, %v1199
        %1201 = vrot.lane.b32.xlu0 %v1198, 127
        %v1202 = vpop.permute.xlu0 %1201
        %1203 = vrot.lane.b32.xlu0 %v1200, 127
        %v1204 = vpop.permute.xlu0 %1203
        %v1207 = vadd.f32 %v1186, %v1202
        %v1208 = vadd.f32 %v1187, %v1204
        %s1209 = sld [smem:[#allocation2 + $0x3b]]
        %v1210 = vstv %s1209
        %v1211 = vmul.f32 %v1210, %v196
        %v1212 = vmul.f32 %v1210, %v197
        %v1213 = vmul.f32 %v1210, %v198
        %v1217 = vrot.slane %v1211, 1
        %v1218 = vrot.slane %v1212, 1
        %v1219 = vsel %vm251, %v1217, %v1218
        %v1220 = vrot.slane %v1213, 1
        %v1221 = vsel %vm251, %v1218, %v1220
        %1222 = vrot.lane.b32.xlu0 %v1219, 126
        %v1223 = vpop.permute.xlu0 %1222
        %1224 = vrot.lane.b32.xlu0 %v1221, 126
        %v1225 = vpop.permute.xlu0 %1224
        %v1228 = vadd.f32 %v1207, %v1223
        %v1229 = vadd.f32 %v1208, %v1225
        %s1230 = sld [smem:[#allocation2 + $0x3c]]
        %v1231 = vstv %s1230
        %v1232 = vmul.f32 %v1231, %v196
        %v1233 = vmul.f32 %v1231, %v197
        %v1234 = vmul.f32 %v1231, %v198
        %v1238 = vrot.slane %v1232, 2
        %v1239 = vrot.slane %v1233, 2
        %v1240 = vsel %vm311, %v1238, %v1239
        %v1241 = vrot.slane %v1234, 2
        %v1242 = vsel %vm311, %v1239, %v1241
        %v1245 = vadd.f32 %v1228, %v1240
        %v1246 = vadd.f32 %v1229, %v1242
        %s1247 = sld [smem:[#allocation2 + $0x3d]]
        %v1248 = vstv %s1247
        %v1249 = vmul.f32 %v1248, %v196
        %v1250 = vmul.f32 %v1248, %v197
        %v1251 = vmul.f32 %v1248, %v198
        %v1255 = vrot.slane %v1249, 2
        %v1256 = vrot.slane %v1250, 2
        %v1257 = vsel %vm311, %v1255, %v1256
        %v1258 = vrot.slane %v1251, 2
        %v1259 = vsel %vm311, %v1256, %v1258
        %1260 = vrot.lane.b32.xlu0 %v1257, 127
        %v1261 = vpop.permute.xlu0 %1260
        %1262 = vrot.lane.b32.xlu0 %v1259, 127
        %v1263 = vpop.permute.xlu0 %1262
        %v1266 = vadd.f32 %v1245, %v1261
        %v1267 = vadd.f32 %v1246, %v1263
        %s1268 = sld [smem:[#allocation2 + $0x3e]]
        %v1269 = vstv %s1268
        %v1270 = vmul.f32 %v1269, %v196
        %v1271 = vmul.f32 %v1269, %v197
        %v1272 = vmul.f32 %v1269, %v198
        %v1276 = vrot.slane %v1270, 2
        %v1277 = vrot.slane %v1271, 2
        %v1278 = vsel %vm311, %v1276, %v1277
        %v1279 = vrot.slane %v1272, 2
        %v1280 = vsel %vm311, %v1277, %v1279
        %1281 = vrot.lane.b32.xlu0 %v1278, 126
        %v1282 = vpop.permute.xlu0 %1281
        %1283 = vrot.lane.b32.xlu0 %v1280, 126
        %v1284 = vpop.permute.xlu0 %1283
        %v1287 = vadd.f32 %v1266, %v1282
        %v1288 = vadd.f32 %v1267, %v1284
        %s1289 = sld [smem:[#allocation2 + $0x3f]]
        %v1290 = vstv %s1289
        %v1291 = vmul.f32 %v1290, %v200
        %v1292 = vmul.f32 %v1290, %v201
        %v1293 = vadd.f32 %v1287, %v1291
        %v1294 = vadd.f32 %v1288, %v1292
        %s1295 = sld [smem:[#allocation2 + $0x40]]
        %v1296 = vstv %s1295
        %v1297 = vmul.f32 %v1296, %v200
        %v1298 = vmul.f32 %v1296, %v201
        %1301 = vrot.lane.b32.xlu0 %v1297, 127
        %v1302 = vpop.permute.xlu0 %1301
        %1303 = vrot.lane.b32.xlu0 %v1298, 127
        %v1304 = vpop.permute.xlu0 %1303
        %v1307 = vadd.f32 %v1293, %v1302
        %v1308 = vadd.f32 %v1294, %v1304
        %s1309 = sld [smem:[#allocation2 + $0x41]]
        %v1310 = vstv %s1309
        %v1311 = vmul.f32 %v1310, %v200
        %v1312 = vmul.f32 %v1310, %v201
        %1315 = vrot.lane.b32.xlu0 %v1311, 126
        %v1316 = vpop.permute.xlu0 %1315
        %1317 = vrot.lane.b32.xlu0 %v1312, 126
        %v1318 = vpop.permute.xlu0 %1317
        %v1321 = vadd.f32 %v1307, %v1316
        %v1322 = vadd.f32 %v1308, %v1318
        %s1323 = sld [smem:[#allocation2 + $0x42]]
        %v1324 = vstv %s1323
        %v1325 = vmul.f32 %v1324, %v200
        %v1326 = vmul.f32 %v1324, %v201
        %v1327 = vmul.f32 %v1324, %v202
        %v1331 = vrot.slane %v1325, 1
        %v1332 = vrot.slane %v1326, 1
        %v1333 = vsel %vm251, %v1331, %v1332
        %v1334 = vrot.slane %v1327, 1
        %v1335 = vsel %vm251, %v1332, %v1334
        %v1338 = vadd.f32 %v1321, %v1333
        %v1339 = vadd.f32 %v1322, %v1335
        %s1340 = sld [smem:[#allocation2 + $0x43]]
        %v1341 = vstv %s1340
        %v1342 = vmul.f32 %v1341, %v200
        %v1343 = vmul.f32 %v1341, %v201
        %v1344 = vmul.f32 %v1341, %v202
        %v1348 = vrot.slane %v1342, 1
        %v1349 = vrot.slane %v1343, 1
        %v1350 = vsel %vm251, %v1348, %v1349
        %v1351 = vrot.slane %v1344, 1
        %v1352 = vsel %vm251, %v1349, %v1351
        %1353 = vrot.lane.b32.xlu0 %v1350, 127
        %v1354 = vpop.permute.xlu0 %1353
        %1355 = vrot.lane.b32.xlu0 %v1352, 127
        %v1356 = vpop.permute.xlu0 %1355
        %v1359 = vadd.f32 %v1338, %v1354
        %v1360 = vadd.f32 %v1339, %v1356
        %s1361 = sld [smem:[#allocation2 + $0x44]]
        %v1362 = vstv %s1361
        %v1363 = vmul.f32 %v1362, %v200
        %v1364 = vmul.f32 %v1362, %v201
        %v1365 = vmul.f32 %v1362, %v202
        %v1369 = vrot.slane %v1363, 1
        %v1370 = vrot.slane %v1364, 1
        %v1371 = vsel %vm251, %v1369, %v1370
        %v1372 = vrot.slane %v1365, 1
        %v1373 = vsel %vm251, %v1370, %v1372
        %1374 = vrot.lane.b32.xlu0 %v1371, 126
        %v1375 = vpop.permute.xlu0 %1374
        %1376 = vrot.lane.b32.xlu0 %v1373, 126
        %v1377 = vpop.permute.xlu0 %1376
        %v1380 = vadd.f32 %v1359, %v1375
        %v1381 = vadd.f32 %v1360, %v1377
        %s1382 = sld [smem:[#allocation2 + $0x45]]
        %v1383 = vstv %s1382
        %v1384 = vmul.f32 %v1383, %v200
        %v1385 = vmul.f32 %v1383, %v201
        %v1386 = vmul.f32 %v1383, %v202
        %v1390 = vrot.slane %v1384, 2
        %v1391 = vrot.slane %v1385, 2
        %v1392 = vsel %vm311, %v1390, %v1391
        %v1393 = vrot.slane %v1386, 2
        %v1394 = vsel %vm311, %v1391, %v1393
        %v1397 = vadd.f32 %v1380, %v1392
        %v1398 = vadd.f32 %v1381, %v1394
        %s1399 = sld [smem:[#allocation2 + $0x46]]
        %v1400 = vstv %s1399
        %v1401 = vmul.f32 %v1400, %v200
        %v1402 = vmul.f32 %v1400, %v201
        %v1403 = vmul.f32 %v1400, %v202
        %v1407 = vrot.slane %v1401, 2
        %v1408 = vrot.slane %v1402, 2
        %v1409 = vsel %vm311, %v1407, %v1408
        %v1410 = vrot.slane %v1403, 2
        %v1411 = vsel %vm311, %v1408, %v1410
        %1412 = vrot.lane.b32.xlu0 %v1409, 127
        %v1413 = vpop.permute.xlu0 %1412
        %1414 = vrot.lane.b32.xlu0 %v1411, 127
        %v1415 = vpop.permute.xlu0 %1414
        %v1418 = vadd.f32 %v1397, %v1413
        %v1419 = vadd.f32 %v1398, %v1415
        %s1420 = sld [smem:[#allocation2 + $0x47]]
        %v1421 = vstv %s1420
        %v1422 = vmul.f32 %v1421, %v200
        %v1423 = vmul.f32 %v1421, %v201
        %v1424 = vmul.f32 %v1421, %v202
        %v1428 = vrot.slane %v1422, 2
        %v1429 = vrot.slane %v1423, 2
        %v1430 = vsel %vm311, %v1428, %v1429
        %v1431 = vrot.slane %v1424, 2
        %v1432 = vsel %vm311, %v1429, %v1431
        %1433 = vrot.lane.b32.xlu0 %v1430, 126
        %v1434 = vpop.permute.xlu0 %1433
        %1435 = vrot.lane.b32.xlu0 %v1432, 126
        %v1436 = vpop.permute.xlu0 %1435
        %v1439 = vadd.f32 %v1418, %v1434
        %v1440 = vadd.f32 %v1419, %v1436
        %s1441 = sld [smem:[#allocation2 + $0x48]]
        %v1442 = vstv %s1441
        %v1443 = vmul.f32 %v1442, %v204
        %v1444 = vmul.f32 %v1442, %v205
        %v1445 = vadd.f32 %v1439, %v1443
        %v1446 = vadd.f32 %v1440, %v1444
        %s1447 = sld [smem:[#allocation2 + $0x49]]
        %v1448 = vstv %s1447
        %v1449 = vmul.f32 %v1448, %v204
        %v1450 = vmul.f32 %v1448, %v205
        %1453 = vrot.lane.b32.xlu0 %v1449, 127
        %v1454 = vpop.permute.xlu0 %1453
        %1455 = vrot.lane.b32.xlu0 %v1450, 127
        %v1456 = vpop.permute.xlu0 %1455
        %v1459 = vadd.f32 %v1445, %v1454
        %v1460 = vadd.f32 %v1446, %v1456
        %s1461 = sld [smem:[#allocation2 + $0x4a]]
        %v1462 = vstv %s1461
        %v1463 = vmul.f32 %v1462, %v204
        %v1464 = vmul.f32 %v1462, %v205
        %1467 = vrot.lane.b32.xlu0 %v1463, 126
        %v1468 = vpop.permute.xlu0 %1467
        %1469 = vrot.lane.b32.xlu0 %v1464, 126
        %v1470 = vpop.permute.xlu0 %1469
        %v1473 = vadd.f32 %v1459, %v1468
        %v1474 = vadd.f32 %v1460, %v1470
        %s1475 = sld [smem:[#allocation2 + $0x4b]]
        %v1476 = vstv %s1475
        %v1477 = vmul.f32 %v1476, %v204
        %v1478 = vmul.f32 %v1476, %v205
        %v1479 = vmul.f32 %v1476, %v206
        %v1483 = vrot.slane %v1477, 1
        %v1484 = vrot.slane %v1478, 1
        %v1485 = vsel %vm251, %v1483, %v1484
        %v1486 = vrot.slane %v1479, 1
        %v1487 = vsel %vm251, %v1484, %v1486
        %v1490 = vadd.f32 %v1473, %v1485
        %v1491 = vadd.f32 %v1474, %v1487
        %s1492 = sld [smem:[#allocation2 + $0x4c]]
        %v1493 = vstv %s1492
        %v1494 = vmul.f32 %v1493, %v204
        %v1495 = vmul.f32 %v1493, %v205
        %v1496 = vmul.f32 %v1493, %v206
        %v1500 = vrot.slane %v1494, 1
        %v1501 = vrot.slane %v1495, 1
        %v1502 = vsel %vm251, %v1500, %v1501
        %v1503 = vrot.slane %v1496, 1
        %v1504 = vsel %vm251, %v1501, %v1503
        %1505 = vrot.lane.b32.xlu0 %v1502, 127
        %v1506 = vpop.permute.xlu0 %1505
        %1507 = vrot.lane.b32.xlu0 %v1504, 127
        %v1508 = vpop.permute.xlu0 %1507
        %v1511 = vadd.f32 %v1490, %v1506
        %v1512 = vadd.f32 %v1491, %v1508
        %s1513 = sld [smem:[#allocation2 + $0x4d]]
        %v1514 = vstv %s1513
        %v1515 = vmul.f32 %v1514, %v204
        %v1516 = vmul.f32 %v1514, %v205
        %v1517 = vmul.f32 %v1514, %v206
        %v1521 = vrot.slane %v1515, 1
        %v1522 = vrot.slane %v1516, 1
        %v1523 = vsel %vm251, %v1521, %v1522
        %v1524 = vrot.slane %v1517, 1
        %v1525 = vsel %vm251, %v1522, %v1524
        %1526 = vrot.lane.b32.xlu0 %v1523, 126
        %v1527 = vpop.permute.xlu0 %1526
        %1528 = vrot.lane.b32.xlu0 %v1525, 126
        %v1529 = vpop.permute.xlu0 %1528
        %v1532 = vadd.f32 %v1511, %v1527
        %v1533 = vadd.f32 %v1512, %v1529
        %s1534 = sld [smem:[#allocation2 + $0x4e]]
        %v1535 = vstv %s1534
        %v1536 = vmul.f32 %v1535, %v204
        %v1537 = vmul.f32 %v1535, %v205
        %v1538 = vmul.f32 %v1535, %v206
        %v1542 = vrot.slane %v1536, 2
        %v1543 = vrot.slane %v1537, 2
        %v1544 = vsel %vm311, %v1542, %v1543
        %v1545 = vrot.slane %v1538, 2
        %v1546 = vsel %vm311, %v1543, %v1545
        %v1549 = vadd.f32 %v1532, %v1544
        %v1550 = vadd.f32 %v1533, %v1546
        %s1551 = sld [smem:[#allocation2 + $0x4f]]
        %v1552 = vstv %s1551
        %v1553 = vmul.f32 %v1552, %v204
        %v1554 = vmul.f32 %v1552, %v205
        %v1555 = vmul.f32 %v1552, %v206
        %v1559 = vrot.slane %v1553, 2
        %v1560 = vrot.slane %v1554, 2
        %v1561 = vsel %vm311, %v1559, %v1560
        %v1562 = vrot.slane %v1555, 2
        %v1563 = vsel %vm311, %v1560, %v1562
        %1564 = vrot.lane.b32.xlu0 %v1561, 127
        %v1565 = vpop.permute.xlu0 %1564
        %1566 = vrot.lane.b32.xlu0 %v1563, 127
        %v1567 = vpop.permute.xlu0 %1566
        %v1570 = vadd.f32 %v1549, %v1565
        %v1571 = vadd.f32 %v1550, %v1567
        %s1572 = sld [smem:[#allocation2 + $0x50]]
        %v1573 = vstv %s1572
        %v1574 = vmul.f32 %v1573, %v204
        %v1575 = vmul.f32 %v1573, %v205
        %v1576 = vmul.f32 %v1573, %v206
        %v1580 = vrot.slane %v1574, 2
        %v1581 = vrot.slane %v1575, 2
        %v1582 = vsel %vm311, %v1580, %v1581
        %v1583 = vrot.slane %v1576, 2
        %v1584 = vsel %vm311, %v1581, %v1583
        %1585 = vrot.lane.b32.xlu0 %v1582, 126
        %v1586 = vpop.permute.xlu0 %1585
        %1587 = vrot.lane.b32.xlu0 %v1584, 126
        %v1588 = vpop.permute.xlu0 %1587
        %v1591 = vadd.f32 %v1570, %v1586
        %v1592 = vadd.f32 %v1571, %v1588
        %v1593 = vmax.f32 %v1591, 0.0
        %v1594 = vmax.f32 %v1592, 0.0
        %s1595 = scalar_lea.vmem %s190, 32 [#allocation7]
        %1596 = vst.msk [vmem:[%s1595] sm:$0xff] %vm669, %v1593
        %1597 = vst.msk [vmem:[%s1595 + $0x8] sm:$0xff] %vm669, %v1594
        %s1598 = sand.u32 %s95, 1
        %s1599 = scalar_lea.sflag [#allocation3], %s1598
        %s1600 = sand.u32 %s95, 1
        %s1601 = smul.addr %s1600, 48
        %s1602 = scalar_lea.vmem [#allocation7], %s1601
        // Predicated region
        $region41: #{up_forward.5} parent=31 // pred_check
          %p1603 = pneg %p105
        $region42: #{up_forward.5} parent=31 // pred_check_branch
          %1605 = sbr.rel (%p1603) target = $region44
        $region43: #{up_forward.5} parent=31 // pred_region
          %s1607 = ssub.s32 768, 768
          %1608 = vsyncadd %s1599, %s1607
          %s1609 = smul.addr %s19, 6
          %s1610 = smul.addr %s1609, 128
          %s1611 = scalar_lea.hbm %s3, %s1610
          %s1612 = sshll.u32 %s1602, 4
          %s1613 = int_to_ptr.vmem [resolvable:$true] %s1612
          %1618 = dma.vmem_to_hbm [thread:$0]  %s1613, 768, %s1611, %s1599, 128, 128, 8
        $region44: #{up_forward.5} parent=31 // pred_fallthru
          _
      $region32: #{up_forward.5} parent=5 // pred_fallthru
        _
      %p1619 = scmp.le.s32.totalorder 2, %s14
      // Predicated region
      $region45: #{up_forward.5} parent=5 // pred_check
        %p1620 = pneg %p1619
      $region46: #{up_forward.5} parent=5 // pred_check_branch
        %1622 = sbr.rel (%p1620) target = $region48
      $region47: #{up_forward.5} parent=5 // pred_region
        %s1623 = ssub.s32 %s14, 2
        // Predicated region
        $region49: #{up_forward.5} parent=47 // pred_check
          %p1624 = pneg %p111
        $region50: #{up_forward.5} parent=47 // pred_check_branch
          %1626 = sbr.rel (%p1624) target = $region52
        $region51: #{up_forward.5} parent=47 // pred_region
          %s1627 = sand.u32 %s96, 1
          %s1628 = scalar_lea.sflag [#allocation3], %s1627
          %s1629 = sand.u32 %s96, 1
          %s1630 = smul.addr %s1629, 48
          %s1631 = scalar_lea.vmem [#allocation7], %s1630
          %1632 = dma.done %s1628, 768
        $region52: #{up_forward.5} parent=47 // pred_fallthru
          _
      $region48: #{up_forward.5} parent=5 // pred_fallthru
        _
    $region6: #{up_forward.5} parent=1 // loop_footer
      %s18 = sadd.s32 1, %s14
    $region7: #{up_forward.5} parent=1 // loop_footer_branch
      %13 = sbr.rel target = $region3
    $region8: #{up_forward.5} parent=1 // loop_exit
      _
    %1633 = vsyncpa [#allocation3], 1
    %s1634 = scalar_lea.sflag [#allocation3], 1
    %1635 = vsyncpa %s1634, 1
    %1636 = vsyncpa [#allocation4], 1
    %s1637 = scalar_lea.sflag [#allocation4], 1
    %1638 = vsyncpa %s1637, 1
    %1639 = vsyncpa [#allocation6], 1

</llo_original>
